<compile_context>
chip_gen: v7x
topology: tpu7x:2x2x1
jax: 0.10.0
libtpu: 0.0.40
codegen_flags: <defaults>
</compile_context>

<pallas_src>
import functools

import jax
import jax.numpy as jnp
from jax.experimental import pallas as pl
from jax.experimental.pallas import tpu as pltpu


def _round_up(x, m):
    return ((x + m - 1) // m) * m


def _neair_block_kernel(
    # per-edge inputs (tiled along the grid axis)
    idx_h_ref, idx_r_ref, idx_t_ref, scale_ref,
    # resident tables / parameters
    table_ref, G_h_ref, r_q_ref,
    proj_w_ref, proj_b_ref, gate_w_ref, ln_g_ref, ln_b_ref,
    # output
    out_ref,
    # VMEM accumulators (persist across the edge grid axis)
    sum_acc, sq_acc, cnt_acc, max_acc, min_acc,
):
    step = pl.program_id(0)
    n_steps = pl.num_programs(0)

    E_t = idx_h_ref.shape[0]
    H, d = G_h_ref.shape
    HR = table_ref.shape[0]
    N = sum_acc.shape[0]

    @pl.when(step == 0)
    def _init():
        sum_acc[...] = jnp.zeros_like(sum_acc)
        sq_acc[...] = jnp.zeros_like(sq_acc)
        cnt_acc[...] = jnp.zeros_like(cnt_acc)
        max_acc[...] = jnp.full(max_acc.shape, -jnp.inf, max_acc.dtype)
        min_acc[...] = jnp.full(min_acc.shape, jnp.inf, min_acc.dtype)

    idx_h = idx_h_ref[...]        # (E_t, 1) int32, -1 for padded edges
    idx_r = idx_r_ref[...]        # (E_t, 1) int32, already offset by +H, -1 for pad
    idx_t = idx_t_ref[...]        # (E_t, 1) int32, -1 for padded edges
    scale = scale_ref[...]        # (E_t, 1) f32, 0 for padded edges

    # ---- fused gather of [scale * G_h[h2rel], rel_emb[r]] via ONE one-hot matmul.
    # table = [[G_h, 0], [0, rel_emb]] : (H+R, 2d); the one-hot rows carry `scale`
    # in the head columns so the PNA 'scaled' multiply rides the MXU for free.
    col = jax.lax.broadcasted_iota(jnp.int32, (E_t, HR), 1)
    oh_gather = (jnp.where(col == idx_h, scale, 0.0)
                 + jnp.where(col == idx_r, 1.0, 0.0))
    gathered = jnp.dot(oh_gather, table_ref[...],
                       preferred_element_type=jnp.float32)              # (E_t, 2d)
    # DistMult KGE op, with the PNA 'scaled' factor already applied.
    v = gathered[:, :d] * gathered[:, d:]                               # (E_t, d)

    # ---- fused scatter-sum / scatter-sum-of-squares / count: one MXU pass,
    # contracting the edge axis directly (no explicit (N, E) transpose).
    colN = jax.lax.broadcasted_iota(jnp.int32, (E_t, N), 1)
    oh_t = (colN == idx_t).astype(jnp.float32)                          # (E_t, N)
    rhs = jnp.concatenate([v, v * v, jnp.ones((E_t, 1), jnp.float32)], axis=-1)
    partial = jax.lax.dot_general(
        oh_t, rhs, (((0,), (0,)), ((), ())),
        preferred_element_type=jnp.float32)                             # (N, 2d+1)
    sum_acc[...] += partial[:, :d]
    sq_acc[...] += partial[:, d:2 * d]
    cnt_acc[...] += partial[:, 2 * d:2 * d + 1]

    # ---- running max/min accumulators: the 3-D masked intermediate is bounded
    # by the edge tile (E_t, N, d), never the full edge count.
    mask3 = oh_t[:, :, None] > 0.0                                      # (E_t, N, 1)
    v3 = v[:, None, :]                                                  # (E_t, 1, d)
    tile_max = jnp.max(jnp.where(mask3, v3, -jnp.inf), axis=0)          # (N, d)
    tile_min = jnp.min(jnp.where(mask3, v3, jnp.inf), axis=0)           # (N, d)
    max_acc[...] = jnp.maximum(max_acc[...], tile_max)
    min_acc[...] = jnp.minimum(min_acc[...], tile_min)

    # ---- finalize on the last edge tile: PNA stats -> proj -> gate -> LayerNorm
    @pl.when(step == n_steps - 1)
    def _finalize():
        cnt = cnt_acc[...]
        has = cnt > 0.0
        s = sum_acc[...]
        mean_agg = jnp.where(has, s / jnp.maximum(cnt, 1.0), 0.0)
        max_agg = jnp.where(has, max_acc[...], 0.0)
        min_agg = jnp.where(has, min_acc[...], 0.0)
        # simple_pna 'std': sqrt(clamp(sum(v^2) - sum(v)^2, 1e-8)), not count-normalized
        std_agg = jnp.sqrt(jnp.maximum(sq_acc[...] - s * s, 1e-8))
        agg = jnp.concatenate([mean_agg, max_agg, min_agg, std_agg], axis=-1)  # (N, 4d)

        # PNA projection (dropout p=0.0 -> identity)
        G_t = jnp.dot(agg, proj_w_ref[...],
                      preferred_element_type=jnp.float32) + proj_b_ref[...]    # (N, d)

        # GatedResidueNorm with integer h_map_t = old_heads_len
        G_h = G_h_ref[...]
        G_t_has_h = G_t[:H]
        gate_in = jnp.concatenate([G_t_has_h, G_h, r_q_ref[...]], axis=-1)     # (H, 3d)
        g = jax.nn.sigmoid(jnp.dot(gate_in, gate_w_ref[...],
                                   preferred_element_type=jnp.float32))        # (H, d)
        G_t_new = jnp.concatenate([G_t_has_h * g + G_h, G_t[H:]], axis=0)      # (N, d)

        # LayerNorm(d), eps = 1e-5
        mu = jnp.mean(G_t_new, axis=-1, keepdims=True)
        xc = G_t_new - mu
        var = jnp.mean(xc * xc, axis=-1, keepdims=True)
        y = xc * jax.lax.rsqrt(var + 1e-5) * ln_g_ref[...] + ln_b_ref[...]

        # lane-dense store (out_ref feature dim padded to a multiple of 128)
        d_pad = out_ref.shape[1]
        if d_pad > d:
            y = jnp.concatenate([y, jnp.zeros((N, d_pad - d), jnp.float32)], axis=-1)
        out_ref[...] = y.astype(out_ref.dtype)


def _pick_edge_tile(E, N, d):
    # Bound the per-tile (E_t, N, d) f32 min/max intermediate to ~4 MiB.
    cap = max(8, (4 * 1024 * 1024) // max(1, N * d * 4))
    tile = max(8, (min(512, cap) // 8) * 8)
    if E <= tile:
        tile = _round_up(max(E, 1), 8)
    return tile


@functools.partial(jax.jit, static_argnames=("old_heads_len",))
def single_pna_neair_block(q_rels, E_nodes, E_r, r, e_o_degree, h2rel, t2rel,
                           params, *, old_heads_len):
    """JAX wrapper reproducing SinglePNANEAIRBlock.forward(q_rels, state)."""
    H = old_heads_len
    N = E_nodes.shape[0]                 # len(state.t)
    d = E_r.shape[1]
    R = params["rel_embeds"].shape[0]
    N_b = q_rels.shape[0]
    E = r.shape[0]

    # --- glue: query embeddings per head (queries.index_select(0, state.h[:,0])) ---
    h_batch_idx = E_nodes[:H, 0]
    queries = params["rel_embeds"][q_rels]              # (N_b, d)
    r_q = queries[h_batch_idx]                          # (H, d)

    # --- glue: PNA per-edge degree scale (tiny scalar work, stays in XLA) ---
    h_o_degree = e_o_degree[:H].astype(jnp.float32)
    h_scale = 1.0 / jnp.log(h_o_degree + 1.0)
    sums = jax.ops.segment_sum(h_scale, h_batch_idx, num_segments=N_b)
    cnts = jax.ops.segment_sum(jnp.ones_like(h_scale), h_batch_idx, num_segments=N_b)
    h_scale = h_scale / (sums / cnts)[h_batch_idx]      # per-batch mean, include_self=False
    edge_scale = h_scale[h2rel]                         # (E,)

    # --- combined gather table [[G_h, 0], [0, rel_emb]] : (H+R, 2d) ---
    table = jnp.concatenate([
        jnp.concatenate([E_r.astype(jnp.float32), jnp.zeros((H, d), jnp.float32)], axis=1),
        jnp.concatenate([jnp.zeros((R, d), jnp.float32),
                         params["rel_embeds"].astype(jnp.float32)], axis=1),
    ], axis=0)

    # --- pad the edge axis to a multiple of the tile; padded edges carry -1
    # indices (all-zero one-hot rows) and scale 0, so they contribute nothing.
    edge_tile = _pick_edge_tile(E, N, d)
    E_pad = _round_up(E, edge_tile)
    n_tiles = E_pad // edge_tile
    d_pad = _round_up(d, 128)

    def pad_edge(x, fill, dtype):
        x = x.astype(dtype)
        if E_pad > E:
            x = jnp.concatenate([x, jnp.full((E_pad - E,), fill, dtype)], axis=0)
        return x[:, None]

    idx_h = pad_edge(h2rel, -1, jnp.int32)
    idx_r = pad_edge(r.astype(jnp.int32) + H, -1, jnp.int32)   # shifted into [H, H+R)
    idx_t = pad_edge(t2rel, -1, jnp.int32)
    scale = pad_edge(edge_scale, 0.0, jnp.float32)

    edge_spec = pl.BlockSpec((edge_tile, 1), lambda i: (i, 0))
    def full_spec(shape):
        return pl.BlockSpec(shape, lambda i: (0, 0))

    flops = int(2 * E_pad * (H + R) * 2 * d          # fused gather matmul
                + 2 * E_pad * N * (2 * d + 1)        # fused sum/sq/cnt scatter matmul
                + 2 * E_pad * N * d                  # masked min/max updates
                + 2 * N * 4 * d * d                  # PNA projection
                + 2 * H * 3 * d * d)                 # gate
    bytes_accessed = int(4 * (4 * E_pad + (H + R) * 2 * d + 2 * H * d
                              + 4 * d * d + 3 * d * d + 4 * d + N * d_pad))
    cost = pl.CostEstimate(flops=flops, transcendentals=int(H * d + N * d),
                           bytes_accessed=bytes_accessed)

    out_pad = pl.pallas_call(
        _neair_block_kernel,
        out_shape=jax.ShapeDtypeStruct((N, d_pad), jnp.float32),
        grid_spec=pltpu.PrefetchScalarGridSpec(
            num_scalar_prefetch=0,
            grid=(n_tiles,),
            in_specs=[
                edge_spec, edge_spec, edge_spec, edge_spec,
                full_spec((H + R, 2 * d)),
                full_spec((H, d)),
                full_spec((H, d)),
                full_spec((4 * d, d)),
                full_spec((1, d)),
                full_spec((3 * d, d)),
                full_spec((1, d)),
                full_spec((1, d)),
            ],
            out_specs=pl.BlockSpec((N, d_pad), lambda i: (0, 0)),
            scratch_shapes=[
                pltpu.VMEM((N, d), jnp.float32),    # scatter sum
                pltpu.VMEM((N, d), jnp.float32),    # scatter sum of squares
                pltpu.VMEM((N, 1), jnp.float32),    # count
                pltpu.VMEM((N, d), jnp.float32),    # running max
                pltpu.VMEM((N, d), jnp.float32),    # running min
            ],
        ),
        compiler_params=pltpu.CompilerParams(
            dimension_semantics=("arbitrary",),
            vmem_limit_bytes=32 * 1024 * 1024,
        ),
        cost_estimate=cost,
    )(
        idx_h, idx_r, idx_t, scale,
        table, E_r.astype(jnp.float32), r_q.astype(jnp.float32),
        params["proj_w"].astype(jnp.float32), params["proj_b"].astype(jnp.float32),
        params["gate_w"].astype(jnp.float32),
        params["ln_gamma"].astype(jnp.float32), params["ln_beta"].astype(jnp.float32),
    )
    return out_pad[:, :d]


def _reference(q_rels, E_nodes, E_r, r, e_o_degree, h2rel, t2rel, params, old_heads_len):
    """Pure-JAX reference mirroring the PyTorch forward (for a correctness check)."""
    H = old_heads_len
    N = E_nodes.shape[0]
    d = E_r.shape[1]
    N_b = q_rels.shape[0]
    h_batch_idx = E_nodes[:H, 0]
    r_q = params["rel_embeds"][q_rels][h_batch_idx]
    h_scale = 1.0 / jnp.log(e_o_degree[:H].astype(jnp.float32) + 1.0)
    sums = jax.ops.segment_sum(h_scale, h_batch_idx, num_segments=N_b)
    cnts = jax.ops.segment_sum(jnp.ones_like(h_scale), h_batch_idx, num_segments=N_b)
    h_scale = h_scale / (sums / cnts)[h_batch_idx]
    scale = h_scale[h2rel]
    v = E_r[h2rel] * params["rel_embeds"][r] * scale[:, None]
    sum_agg = jnp.zeros((N, d)).at[t2rel].add(v)
    sq_agg = jnp.zeros((N, d)).at[t2rel].add(v * v)
    cnt = jnp.zeros((N,)).at[t2rel].add(1.0)
    has = (cnt > 0)[:, None]
    mean_agg = jnp.where(has, sum_agg / jnp.maximum(cnt, 1.0)[:, None], 0.0)
    max_agg = jnp.where(has, jnp.full((N, d), -jnp.inf).at[t2rel].max(v), 0.0)
    min_agg = jnp.where(has, jnp.full((N, d), jnp.inf).at[t2rel].min(v), 0.0)
    std_agg = jnp.sqrt(jnp.maximum(sq_agg - sum_agg ** 2, 1e-8))
    agg = jnp.concatenate([mean_agg, max_agg, min_agg, std_agg], axis=-1)
    G_t = agg @ params["proj_w"] + params["proj_b"]
    G_t_has_h = G_t[:H]
    g = jax.nn.sigmoid(jnp.concatenate([G_t_has_h, E_r, r_q], -1) @ params["gate_w"])
    G_t = jnp.concatenate([G_t_has_h * g + E_r, G_t[H:]], axis=0)
    mu = G_t.mean(-1, keepdims=True)
    xc = G_t - mu
    var = (xc * xc).mean(-1, keepdims=True)
    return xc * jax.lax.rsqrt(var + 1e-5) * params["ln_gamma"] + params["ln_beta"]


if __name__ == "__main__":
    # Small synthetic shapes consistent with the module's forward.
    d = 32            # embed_size
    n_rels = 8
    N_b = 2           # number of queries (q_rels.shape[0])
    H = 8             # old_heads_len
    N = 16            # number of entities (len(state.t))
    E = 64            # number of edges (len(state.r))

    key = jax.random.PRNGKey(0)
    keys = jax.random.split(key, 10)

    params = {
        "rel_embeds": jax.random.normal(keys[0], (n_rels, d), jnp.float32),
        # PNA proj: Linear(4d, d) — stored as (in, out) for agg @ W
        "proj_w": jax.random.normal(keys[1], (4 * d, d), jnp.float32) / jnp.sqrt(4.0 * d),
        "proj_b": jax.random.normal(keys[2], (1, d), jnp.float32) * 0.01,
        # GatedResidueNorm gate: Linear(3d, d, bias=False) — stored as (in, out)
        "gate_w": jax.random.normal(keys[3], (3 * d, d), jnp.float32) / jnp.sqrt(3.0 * d),
        "ln_gamma": jnp.ones((1, d), jnp.float32),
        "ln_beta": jnp.zeros((1, d), jnp.float32),
    }

    # Deterministic synthetic BfsRepresents-like state.
    q_rels = jax.random.randint(keys[4], (N_b,), 0, n_rels, dtype=jnp.int32)
    batch_idx = jnp.arange(N, dtype=jnp.int32) % N_b
    E_nodes = jnp.stack([batch_idx, jnp.arange(N, dtype=jnp.int32)], axis=1)
    E_r = jax.random.normal(keys[5], (H, d), jnp.float32)
    r = jax.random.randint(keys[6], (E,), 0, n_rels, dtype=jnp.int32)
    h2rel = jnp.arange(E, dtype=jnp.int32) % H
    t2rel = jax.random.randint(keys[7], (E,), 0, N, dtype=jnp.int32)
    e_o_degree = jnp.zeros((N,), jnp.float32).at[h2rel].add(1.0)

    out = single_pna_neair_block(
        q_rels, E_nodes, E_r, r, e_o_degree, h2rel, t2rel, params, old_heads_len=H
    )
    jax.block_until_ready(out)

    ref = _reference(q_rels, E_nodes, E_r, r, e_o_degree, h2rel, t2rel, params, H)
    assert out.shape == (N, d) and jnp.all(jnp.isfinite(out))
    assert float(jnp.max(jnp.abs(out - ref))) < 5e-3, "kernel/reference mismatch"
    print("KERNEL_OK")
</pallas_src>

<mosaic_0001>
module attributes {stable_mosaic.version = 11 : i64} {
  func.func @_neair_block_kernel(%arg0: i32, %arg1: memref<64x1xi32, #tpu.memory_space<vmem>>, %arg2: memref<64x1xi32, #tpu.memory_space<vmem>>, %arg3: memref<64x1xi32, #tpu.memory_space<vmem>>, %arg4: memref<64x1xf32, #tpu.memory_space<vmem>>, %arg5: memref<16x64xf32, #tpu.memory_space<vmem>>, %arg6: memref<8x32xf32, #tpu.memory_space<vmem>>, %arg7: memref<8x32xf32, #tpu.memory_space<vmem>>, %arg8: memref<128x32xf32, #tpu.memory_space<vmem>>, %arg9: memref<1x32xf32, #tpu.memory_space<vmem>>, %arg10: memref<96x32xf32, #tpu.memory_space<vmem>>, %arg11: memref<1x32xf32, #tpu.memory_space<vmem>>, %arg12: memref<1x32xf32, #tpu.memory_space<vmem>>, %arg13: memref<16x128xf32, #tpu.memory_space<vmem>>, %arg14: memref<16x32xf32, #tpu.memory_space<vmem>>, %arg15: memref<16x32xf32, #tpu.memory_space<vmem>>, %arg16: memref<16x1xf32, #tpu.memory_space<vmem>>, %arg17: memref<16x32xf32, #tpu.memory_space<vmem>>, %arg18: memref<16x32xf32, #tpu.memory_space<vmem>>) attributes {dimension_semantics = [#tpu.dimension_semantics<arbitrary>], iteration_bounds = array<i64: 1>, scalar_prefetch = 0 : i64, scratch_operands = 5 : i64, tpu.core_type = #tpu.core_type<tc>, window_params = [{transform_indices = @transform_0, window_bounds = array<i64: 64, 1>}, {transform_indices = @transform_1, window_bounds = array<i64: 64, 1>}, {transform_indices = @transform_2, window_bounds = array<i64: 64, 1>}, {transform_indices = @transform_3, window_bounds = array<i64: 64, 1>}, {pipeline_mode = #tpu.pipeline_mode<synchronous>, transform_indices = @transform_4, window_bounds = array<i64: 16, 64>}, {pipeline_mode = #tpu.pipeline_mode<synchronous>, transform_indices = @transform_5, window_bounds = array<i64: 8, 32>}, {pipeline_mode = #tpu.pipeline_mode<synchronous>, transform_indices = @transform_6, window_bounds = array<i64: 8, 32>}, {pipeline_mode = #tpu.pipeline_mode<synchronous>, transform_indices = @transform_7, window_bounds = array<i64: 128, 32>}, {pipeline_mode = #tpu.pipeline_mode<synchronous>, transform_indices = @transform_8, window_bounds = array<i64: 1, 32>}, {pipeline_mode = #tpu.pipeline_mode<synchronous>, transform_indices = @transform_9, window_bounds = array<i64: 96, 32>}, {pipeline_mode = #tpu.pipeline_mode<synchronous>, transform_indices = @transform_10, window_bounds = array<i64: 1, 32>}, {pipeline_mode = #tpu.pipeline_mode<synchronous>, transform_indices = @transform_11, window_bounds = array<i64: 1, 32>}, {pipeline_mode = #tpu.pipeline_mode<synchronous>, transform_indices = @transform_12, window_bounds = array<i64: 16, 128>}]} {
    %c0_i32 = arith.constant 0 : i32
    %0 = arith.cmpi eq, %arg0, %c0_i32 : i32
    %1 = arith.extui %0 : i1 to i32
    %c0_i32_0 = arith.constant 0 : i32
    %2 = arith.cmpi ne, %1, %c0_i32_0 : i32
    scf.if %2 {
      %cst_42 = arith.constant 0.000000e+00 : f32
      %73 = vector.broadcast %cst_42 : f32 to vector<16x32xf32>
      %c0_43 = arith.constant 0 : index
      %c0_44 = arith.constant 0 : index
      %74 = vector.load %arg14[%c0_43, %c0_44] : memref<16x32xf32, #tpu.memory_space<vmem>>, vector<16x32xf32>
      tpu.vector_store %arg14[%c0_43, %c0_44], %73 {strides = array<i32>} : memref<16x32xf32, #tpu.memory_space<vmem>>, vector<16x32xf32>,
      %cst_45 = arith.constant 0.000000e+00 : f32
      %75 = vector.broadcast %cst_45 : f32 to vector<16x32xf32>
      %c0_46 = arith.constant 0 : index
      %c0_47 = arith.constant 0 : index
      %76 = vector.load %arg15[%c0_46, %c0_47] : memref<16x32xf32, #tpu.memory_space<vmem>>, vector<16x32xf32>
      tpu.vector_store %arg15[%c0_46, %c0_47], %75 {strides = array<i32>} : memref<16x32xf32, #tpu.memory_space<vmem>>, vector<16x32xf32>,
      %cst_48 = arith.constant 0.000000e+00 : f32
      %77 = vector.broadcast %cst_48 : f32 to vector<16x1xf32>
      %c0_49 = arith.constant 0 : index
      %c0_50 = arith.constant 0 : index
      %78 = vector.load %arg16[%c0_49, %c0_50] : memref<16x1xf32, #tpu.memory_space<vmem>>, vector<16x1xf32>
      tpu.vector_store %arg16[%c0_49, %c0_50], %77 {strides = array<i32>} : memref<16x1xf32, #tpu.memory_space<vmem>>, vector<16x1xf32>,
      %cst_51 = arith.constant 0xFF800000 : f32
      %79 = vector.broadcast %cst_51 : f32 to vector<16x32xf32>
      %c0_52 = arith.constant 0 : index
      %c0_53 = arith.constant 0 : index
      %80 = vector.load %arg17[%c0_52, %c0_53] : memref<16x32xf32, #tpu.memory_space<vmem>>, vector<16x32xf32>
      tpu.vector_store %arg17[%c0_52, %c0_53], %79 {strides = array<i32>} : memref<16x32xf32, #tpu.memory_space<vmem>>, vector<16x32xf32>,
      %cst_54 = arith.constant 0x7F800000 : f32
      %81 = vector.broadcast %cst_54 : f32 to vector<16x32xf32>
      %c0_55 = arith.constant 0 : index
      %c0_56 = arith.constant 0 : index
      %82 = vector.load %arg18[%c0_55, %c0_56] : memref<16x32xf32, #tpu.memory_space<vmem>>, vector<16x32xf32>
      tpu.vector_store %arg18[%c0_55, %c0_56], %81 {strides = array<i32>} : memref<16x32xf32, #tpu.memory_space<vmem>>, vector<16x32xf32>,
    } else {
    }
    %c0 = arith.constant 0 : index
    %c0_1 = arith.constant 0 : index
    %3 = vector.load %arg1[%c0, %c0_1] : memref<64x1xi32, #tpu.memory_space<vmem>>, vector<64x1xi32>
    %c0_2 = arith.constant 0 : index
    %c0_3 = arith.constant 0 : index
    %4 = vector.load %arg2[%c0_2, %c0_3] : memref<64x1xi32, #tpu.memory_space<vmem>>, vector<64x1xi32>
    %c0_4 = arith.constant 0 : index
    %c0_5 = arith.constant 0 : index
    %5 = vector.load %arg3[%c0_4, %c0_5] : memref<64x1xi32, #tpu.memory_space<vmem>>, vector<64x1xi32>
    %c0_6 = arith.constant 0 : index
    %c0_7 = arith.constant 0 : index
    %6 = vector.load %arg4[%c0_6, %c0_7] : memref<64x1xf32, #tpu.memory_space<vmem>>, vector<64x1xf32>
    %7 = tpu.iota {dimensions = array<i32: 1>} : vector<64x16xi32>
    %8 = vector.broadcast %3 : vector<64x1xi32> to vector<64x16xi32>
    %9 = arith.cmpi eq, %7, %8 : vector<64x16xi32>
    %cst = arith.constant 0.000000e+00 : f32
    %10 = vector.shape_cast %6 : vector<64x1xf32> to vector<64x1xf32>
    %11 = vector.broadcast %10 : vector<64x1xf32> to vector<64x16xf32>
    %12 = vector.broadcast %cst : f32 to vector<64x16xf32>
    %13 = arith.select %9, %11, %12 : vector<64x16xi1>, vector<64x16xf32>
    %14 = vector.broadcast %4 : vector<64x1xi32> to vector<64x16xi32>
    %15 = arith.cmpi eq, %7, %14 : vector<64x16xi32>
    %cst_8 = arith.constant 1.000000e+00 : f32
    %cst_9 = arith.constant 0.000000e+00 : f32
    %16 = vector.broadcast %cst_8 : f32 to vector<64x16xf32>
    %17 = vector.broadcast %cst_9 : f32 to vector<64x16xf32>
    %18 = arith.select %15, %16, %17 : vector<64x16xi1>, vector<64x16xf32>
    %19 = arith.addf %13, %18 : vector<64x16xf32>
    %c0_10 = arith.constant 0 : index
    %c0_11 = arith.constant 0 : index
    %20 = vector.load %arg5[%c0_10, %c0_11] : memref<16x64xf32, #tpu.memory_space<vmem>>, vector<16x64xf32>
    %cst_12 = arith.constant dense<0.000000e+00> : vector<64x64xf32>
    %21 = tpu.matmul %19, %20, %cst_12 {dimension_numbers = #tpu.dot_dimension_numbers<[1], [0], [0], [1], [0, 0, 1, 1], [], []>} : vector<64x16xf32>, vector<16x64xf32>, vector<64x64xf32> -> vector<64x64xf32>
    %22 = vector.extract_strided_slice %21 {offsets = [0, 0], sizes = [64, 32], strides = [1, 1]} : vector<64x64xf32> to vector<64x32xf32>
    %23 = vector.extract_strided_slice %21 {offsets = [0, 32], sizes = [64, 32], strides = [1, 1]} : vector<64x64xf32> to vector<64x32xf32>
    %24 = arith.mulf %22, %23 : vector<64x32xf32>
    %25 = tpu.iota {dimensions = array<i32: 1>} : vector<64x16xi32>
    %26 = vector.broadcast %5 : vector<64x1xi32> to vector<64x16xi32>
    %27 = arith.cmpi eq, %25, %26 : vector<64x16xi32>
    %28 = arith.extui %27 : vector<64x16xi1> to vector<64x16xi32>
    %29 = arith.sitofp %28 : vector<64x16xi32> to vector<64x16xf32>
    %30 = arith.mulf %24, %24 : vector<64x32xf32>
    %cst_13 = arith.constant 1.000000e+00 : f32
    %31 = vector.broadcast %cst_13 : f32 to vector<64x1xf32>
    %32 = tpu.concatenate %24, %30, %31 in 1 : vector<64x32xf32>, vector<64x32xf32>, vector<64x1xf32> -> vector<64x65xf32>
    %cst_14 = arith.constant dense<0.000000e+00> : vector<16x65xf32>
    %33 = tpu.matmul %29, %32, %cst_14 {dimension_numbers = #tpu.dot_dimension_numbers<[0], [0], [1], [1], [0, 1, 1, 1], [], []>} : vector<64x16xf32>, vector<64x65xf32>, vector<16x65xf32> -> vector<16x65xf32>
    %c0_15 = arith.constant 0 : index
    %c0_16 = arith.constant 0 : index
    %34 = vector.load %arg14[%c0_15, %c0_16] : memref<16x32xf32, #tpu.memory_space<vmem>>, vector<16x32xf32>
    %35 = vector.extract_strided_slice %33 {offsets = [0, 0], sizes = [16, 32], strides = [1, 1]} : vector<16x65xf32> to vector<16x32xf32>
    %36 = arith.addf %34, %35 : vector<16x32xf32>
    %c0_17 = arith.constant 0 : index
    %c0_18 = arith.constant 0 : index
    %37 = vector.load %arg14[%c0_17, %c0_18] : memref<16x32xf32, #tpu.memory_space<vmem>>, vector<16x32xf32>
    tpu.vector_store %arg14[%c0_17, %c0_18], %36 {strides = array<i32>} : memref<16x32xf32, #tpu.memory_space<vmem>>, vector<16x32xf32>,
    %c0_19 = arith.constant 0 : index
    %c0_20 = arith.constant 0 : index
    %38 = vector.load %arg15[%c0_19, %c0_20] : memref<16x32xf32, #tpu.memory_space<vmem>>, vector<16x32xf32>
    %39 = vector.extract_strided_slice %33 {offsets = [0, 32], sizes = [16, 32], strides = [1, 1]} : vector<16x65xf32> to vector<16x32xf32>
    %40 = arith.addf %38, %39 : vector<16x32xf32>
    %c0_21 = arith.constant 0 : index
    %c0_22 = arith.constant 0 : index
    %41 = vector.load %arg15[%c0_21, %c0_22] : memref<16x32xf32, #tpu.memory_space<vmem>>, vector<16x32xf32>
    tpu.vector_store %arg15[%c0_21, %c0_22], %40 {strides = array<i32>} : memref<16x32xf32, #tpu.memory_space<vmem>>, vector<16x32xf32>,
    %c0_23 = arith.constant 0 : index
    %c0_24 = arith.constant 0 : index
    %42 = vector.load %arg16[%c0_23, %c0_24] : memref<16x1xf32, #tpu.memory_space<vmem>>, vector<16x1xf32>
    %43 = vector.extract_strided_slice %33 {offsets = [0, 64], sizes = [16, 1], strides = [1, 1]} : vector<16x65xf32> to vector<16x1xf32>
    %44 = arith.addf %42, %43 : vector<16x1xf32>
    %c0_25 = arith.constant 0 : index
    %c0_26 = arith.constant 0 : index
    %45 = vector.load %arg16[%c0_25, %c0_26] : memref<16x1xf32, #tpu.memory_space<vmem>>, vector<16x1xf32>
    tpu.vector_store %arg16[%c0_25, %c0_26], %44 {strides = array<i32>} : memref<16x1xf32, #tpu.memory_space<vmem>>, vector<16x1xf32>,
    %46 = vector.shape_cast %29 : vector<64x16xf32> to vector<64x16x1xf32>
    %cst_27 = arith.constant 0.000000e+00 : f32
    %47 = vector.broadcast %cst_27 : f32 to vector<64x16x1xf32>
    %48 = arith.cmpf ogt, %46, %47 : vector<64x16x1xf32>
    %49 = vector.shape_cast %24 : vector<64x32xf32> to vector<64x1x32xf32>
    %cst_28 = arith.constant 0xFF800000 : f32
    %50 = vector.shape_cast %48 : vector<64x16x1xi1> to vector<64x16x1xi1>
    %51 = vector.broadcast %50 : vector<64x16x1xi1> to vector<64x16x32xi1>
    %52 = vector.shape_cast %49 : vector<64x1x32xf32> to vector<64x1x32xf32>
    %53 = vector.broadcast %52 : vector<64x1x32xf32> to vector<64x16x32xf32>
    %54 = vector.broadcast %cst_28 : f32 to vector<64x16x32xf32>
    %55 = arith.select %51, %53, %54 : vector<64x16x32xi1>, vector<64x16x32xf32>
    %cst_29 = arith.constant dense<0xFF800000> : vector<16x32xf32>
    %56 = vector.multi_reduction <maximumf>, %55, %cst_29 [0] : vector<64x16x32xf32> to vector<16x32xf32>
    %cst_30 = arith.constant 0x7F800000 : f32
    %57 = vector.shape_cast %48 : vector<64x16x1xi1> to vector<64x16x1xi1>
    %58 = vector.broadcast %57 : vector<64x16x1xi1> to vector<64x16x32xi1>
    %59 = vector.shape_cast %49 : vector<64x1x32xf32> to vector<64x1x32xf32>
    %60 = vector.broadcast %59 : vector<64x1x32xf32> to vector<64x16x32xf32>
    %61 = vector.broadcast %cst_30 : f32 to vector<64x16x32xf32>
    %62 = arith.select %58, %60, %61 : vector<64x16x32xi1>, vector<64x16x32xf32>
    %cst_31 = arith.constant dense<0x7F800000> : vector<16x32xf32>
    %63 = vector.multi_reduction <minimumf>, %62, %cst_31 [0] : vector<64x16x32xf32> to vector<16x32xf32>
    %c0_32 = arith.constant 0 : index
    %c0_33 = arith.constant 0 : index
    %64 = vector.load %arg17[%c0_32, %c0_33] : memref<16x32xf32, #tpu.memory_space<vmem>>, vector<16x32xf32>
    %65 = arith.maximumf %64, %56 : vector<16x32xf32>
    %c0_34 = arith.constant 0 : index
    %c0_35 = arith.constant 0 : index
    %66 = vector.load %arg17[%c0_34, %c0_35] : memref<16x32xf32, #tpu.memory_space<vmem>>, vector<16x32xf32>
    tpu.vector_store %arg17[%c0_34, %c0_35], %65 {strides = array<i32>} : memref<16x32xf32, #tpu.memory_space<vmem>>, vector<16x32xf32>,
    %c0_36 = arith.constant 0 : index
    %c0_37 = arith.constant 0 : index
    %67 = vector.load %arg18[%c0_36, %c0_37] : memref<16x32xf32, #tpu.memory_space<vmem>>, vector<16x32xf32>
    %68 = arith.minimumf %67, %63 : vector<16x32xf32>
    %c0_38 = arith.constant 0 : index
    %c0_39 = arith.constant 0 : index
    %69 = vector.load %arg18[%c0_38, %c0_39] : memref<16x32xf32, #tpu.memory_space<vmem>>, vector<16x32xf32>
    tpu.vector_store %arg18[%c0_38, %c0_39], %68 {strides = array<i32>} : memref<16x32xf32, #tpu.memory_space<vmem>>, vector<16x32xf32>,
    %c0_i32_40 = arith.constant 0 : i32
    %70 = arith.cmpi eq, %arg0, %c0_i32_40 : i32
    %71 = arith.extui %70 : i1 to i32
    %c0_i32_41 = arith.constant 0 : i32
    %72 = arith.cmpi ne, %71, %c0_i32_41 : i32
    scf.if %72 {
      %c0_42 = arith.constant 0 : index
      %c0_43 = arith.constant 0 : index
      %73 = vector.load %arg16[%c0_42, %c0_43] : memref<16x1xf32, #tpu.memory_space<vmem>>, vector<16x1xf32>
      %cst_44 = arith.constant 0.000000e+00 : f32
      %74 = vector.broadcast %cst_44 : f32 to vector<16x1xf32>
      %75 = arith.cmpf ogt, %73, %74 : vector<16x1xf32>
      %c0_45 = arith.constant 0 : index
      %c0_46 = arith.constant 0 : index
      %76 = vector.load %arg14[%c0_45, %c0_46] : memref<16x32xf32, #tpu.memory_space<vmem>>, vector<16x32xf32>
      %cst_47 = arith.constant 1.000000e+00 : f32
      %77 = vector.broadcast %cst_47 : f32 to vector<16x1xf32>
      %78 = arith.maximumf %73, %77 : vector<16x1xf32>
      %79 = vector.broadcast %78 : vector<16x1xf32> to vector<16x32xf32>
      %80 = arith.divf %76, %79 : vector<16x32xf32>
      %cst_48 = arith.constant 0.000000e+00 : f32
      %81 = vector.shape_cast %75 : vector<16x1xi1> to vector<16x1xi1>
      %82 = vector.broadcast %81 : vector<16x1xi1> to vector<16x32xi1>
      %83 = vector.broadcast %cst_48 : f32 to vector<16x32xf32>
      %84 = arith.select %82, %80, %83 : vector<16x32xi1>, vector<16x32xf32>
      %c0_49 = arith.constant 0 : index
      %c0_50 = arith.constant 0 : index
      %85 = vector.load %arg17[%c0_49, %c0_50] : memref<16x32xf32, #tpu.memory_space<vmem>>, vector<16x32xf32>
      %cst_51 = arith.constant 0.000000e+00 : f32
      %86 = vector.shape_cast %75 : vector<16x1xi1> to vector<16x1xi1>
      %87 = vector.broadcast %86 : vector<16x1xi1> to vector<16x32xi1>
      %88 = vector.broadcast %cst_51 : f32 to vector<16x32xf32>
      %89 = arith.select %87, %85, %88 : vector<16x32xi1>, vector<16x32xf32>
      %c0_52 = arith.constant 0 : index
      %c0_53 = arith.constant 0 : index
      %90 = vector.load %arg18[%c0_52, %c0_53] : memref<16x32xf32, #tpu.memory_space<vmem>>, vector<16x32xf32>
      %cst_54 = arith.constant 0.000000e+00 : f32
      %91 = vector.shape_cast %75 : vector<16x1xi1> to vector<16x1xi1>
      %92 = vector.broadcast %91 : vector<16x1xi1> to vector<16x32xi1>
      %93 = vector.broadcast %cst_54 : f32 to vector<16x32xf32>
      %94 = arith.select %92, %90, %93 : vector<16x32xi1>, vector<16x32xf32>
      %c0_55 = arith.constant 0 : index
      %c0_56 = arith.constant 0 : index
      %95 = vector.load %arg15[%c0_55, %c0_56] : memref<16x32xf32, #tpu.memory_space<vmem>>, vector<16x32xf32>
      %96 = arith.mulf %76, %76 : vector<16x32xf32>
      %97 = arith.subf %95, %96 : vector<16x32xf32>
      %cst_57 = arith.constant 9.99999993E-9 : f32
      %98 = vector.broadcast %cst_57 : f32 to vector<16x32xf32>
      %99 = arith.maximumf %97, %98 : vector<16x32xf32>
      %100 = math.sqrt %99 : vector<16x32xf32>
      %101 = tpu.concatenate %84, %89, %94, %100 in 1 : vector<16x32xf32>, vector<16x32xf32>, vector<16x32xf32>, vector<16x32xf32> -> vector<16x128xf32>
      %c0_58 = arith.constant 0 : index
      %c0_59 = arith.constant 0 : index
      %102 = vector.load %arg8[%c0_58, %c0_59] : memref<128x32xf32, #tpu.memory_space<vmem>>, vector<128x32xf32>
      %cst_60 = arith.constant dense<0.000000e+00> : vector<16x32xf32>
      %103 = tpu.matmul %101, %102, %cst_60 {dimension_numbers = #tpu.dot_dimension_numbers<[1], [0], [0], [1], [0, 0, 1, 1], [], []>} : vector<16x128xf32>, vector<128x32xf32>, vector<16x32xf32> -> vector<16x32xf32>
      %c0_61 = arith.constant 0 : index
      %c0_62 = arith.constant 0 : index
      %104 = vector.load %arg9[%c0_61, %c0_62] : memref<1x32xf32, #tpu.memory_space<vmem>>, vector<1x32xf32>
      %105 = vector.broadcast %104 : vector<1x32xf32> to vector<16x32xf32>
      %106 = arith.addf %103, %105 : vector<16x32xf32>
      %c0_63 = arith.constant 0 : index
      %c0_64 = arith.constant 0 : index
      %107 = vector.load %arg6[%c0_63, %c0_64] : memref<8x32xf32, #tpu.memory_space<vmem>>, vector<8x32xf32>
      %108 = vector.extract_strided_slice %106 {offsets = [0, 0], sizes = [8, 32], strides = [1, 1]} : vector<16x32xf32> to vector<8x32xf32>
      %c0_65 = arith.constant 0 : index
      %c0_66 = arith.constant 0 : index
      %109 = vector.load %arg7[%c0_65, %c0_66] : memref<8x32xf32, #tpu.memory_space<vmem>>, vector<8x32xf32>
      %110 = tpu.concatenate %108, %107, %109 in 1 : vector<8x32xf32>, vector<8x32xf32>, vector<8x32xf32> -> vector<8x96xf32>
      %c0_67 = arith.constant 0 : index
      %c0_68 = arith.constant 0 : index
      %111 = vector.load %arg10[%c0_67, %c0_68] : memref<96x32xf32, #tpu.memory_space<vmem>>, vector<96x32xf32>
      %cst_69 = arith.constant dense<0.000000e+00> : vector<8x32xf32>
      %112 = tpu.matmul %110, %111, %cst_69 {dimension_numbers = #tpu.dot_dimension_numbers<[1], [0], [0], [1], [0, 0, 1, 1], [], []>} : vector<8x96xf32>, vector<96x32xf32>, vector<8x32xf32> -> vector<8x32xf32>
      %113 = arith.negf %112 : vector<8x32xf32>
      %114 = math.exp %113 : vector<8x32xf32>
      %cst_70 = arith.constant 1.000000e+00 : f32
      %115 = vector.broadcast %cst_70 : f32 to vector<8x32xf32>
      %116 = arith.addf %115, %114 : vector<8x32xf32>
      %117 = arith.divf %115, %116 : vector<8x32xf32>
      %118 = arith.mulf %108, %117 : vector<8x32xf32>
      %119 = arith.addf %118, %107 : vector<8x32xf32>
      %120 = vector.extract_strided_slice %106 {offsets = [8, 0], sizes = [8, 32], strides = [1, 1]} : vector<16x32xf32> to vector<8x32xf32>
      %121 = tpu.concatenate %119, %120 in 0 : vector<8x32xf32>, vector<8x32xf32> -> vector<16x32xf32>
      %cst_71 = arith.constant dense<0.000000e+00> : vector<16xf32>
      %122 = vector.multi_reduction <add>, %121, %cst_71 [1] : vector<16x32xf32> to vector<16xf32>
      %123 = vector.shape_cast %122 : vector<16xf32> to vector<16x1xf32>
      %cst_72 = arith.constant 3.200000e+01 : f32
      %124 = vector.broadcast %cst_72 : f32 to vector<16x1xf32>
      %125 = arith.divf %123, %124 : vector<16x1xf32>
      %126 = vector.broadcast %125 : vector<16x1xf32> to vector<16x32xf32>
      %127 = arith.subf %121, %126 : vector<16x32xf32>
      %128 = arith.mulf %127, %127 : vector<16x32xf32>
      %cst_73 = arith.constant dense<0.000000e+00> : vector<16xf32>
      %129 = vector.multi_reduction <add>, %128, %cst_73 [1] : vector<16x32xf32> to vector<16xf32>
      %130 = vector.shape_cast %129 : vector<16xf32> to vector<16x1xf32>
      %cst_74 = arith.constant 3.200000e+01 : f32
      %131 = vector.broadcast %cst_74 : f32 to vector<16x1xf32>
      %132 = arith.divf %130, %131 : vector<16x1xf32>
      %cst_75 = arith.constant 9.99999974E-6 : f32
      %133 = vector.broadcast %cst_75 : f32 to vector<16x1xf32>
      %134 = arith.addf %132, %133 : vector<16x1xf32>
      %135 = math.rsqrt %134 : vector<16x1xf32>
      %136 = vector.broadcast %135 : vector<16x1xf32> to vector<16x32xf32>
      %137 = arith.mulf %127, %136 : vector<16x32xf32>
      %c0_76 = arith.constant 0 : index
      %c0_77 = arith.constant 0 : index
      %138 = vector.load %arg11[%c0_76, %c0_77] : memref<1x32xf32, #tpu.memory_space<vmem>>, vector<1x32xf32>
      %139 = vector.broadcast %138 : vector<1x32xf32> to vector<16x32xf32>
      %140 = arith.mulf %137, %139 : vector<16x32xf32>
      %c0_78 = arith.constant 0 : index
      %c0_79 = arith.constant 0 : index
      %141 = vector.load %arg12[%c0_78, %c0_79] : memref<1x32xf32, #tpu.memory_space<vmem>>, vector<1x32xf32>
      %142 = vector.broadcast %141 : vector<1x32xf32> to vector<16x32xf32>
      %143 = arith.addf %140, %142 : vector<16x32xf32>
      %cst_80 = arith.constant 0.000000e+00 : f32
      %144 = vector.broadcast %cst_80 : f32 to vector<16x96xf32>
      %145 = tpu.concatenate %143, %144 in 1 : vector<16x32xf32>, vector<16x96xf32> -> vector<16x128xf32>
      %c0_81 = arith.constant 0 : index
      %c0_82 = arith.constant 0 : index
      %146 = vector.load %arg13[%c0_81, %c0_82] : memref<16x128xf32, #tpu.memory_space<vmem>>, vector<16x128xf32>
      tpu.vector_store %arg13[%c0_81, %c0_82], %145 {strides = array<i32>} : memref<16x128xf32, #tpu.memory_space<vmem>>, vector<16x128xf32>,
    } else {
    }
    return
  }
  func.func @transform_0(%arg0: i32) -> (i32, i32) {
    %c0_i32 = arith.constant 0 : i32
    %c0_i32_0 = arith.constant 0 : i32
    return %arg0, %c0_i32 : i32, i32
  }
  func.func @transform_1(%arg0: i32) -> (i32, i32) {
    %c0_i32 = arith.constant 0 : i32
    %c0_i32_0 = arith.constant 0 : i32
    return %arg0, %c0_i32 : i32, i32
  }
  func.func @transform_2(%arg0: i32) -> (i32, i32) {
    %c0_i32 = arith.constant 0 : i32
    %c0_i32_0 = arith.constant 0 : i32
    return %arg0, %c0_i32 : i32, i32
  }
  func.func @transform_3(%arg0: i32) -> (i32, i32) {
    %c0_i32 = arith.constant 0 : i32
    %c0_i32_0 = arith.constant 0 : i32
    return %arg0, %c0_i32 : i32, i32
  }
  func.func @transform_4(%arg0: i32) -> (i32, i32) {
    %c0_i32 = arith.constant 0 : i32
    %c0_i32_0 = arith.constant 0 : i32
    %c0_i32_1 = arith.constant 0 : i32
    return %c0_i32, %c0_i32_0 : i32, i32
  }
  func.func @transform_5(%arg0: i32) -> (i32, i32) {
    %c0_i32 = arith.constant 0 : i32
    %c0_i32_0 = arith.constant 0 : i32
    %c0_i32_1 = arith.constant 0 : i32
    return %c0_i32, %c0_i32_0 : i32, i32
  }
  func.func @transform_6(%arg0: i32) -> (i32, i32) {
    %c0_i32 = arith.constant 0 : i32
    %c0_i32_0 = arith.constant 0 : i32
    %c0_i32_1 = arith.constant 0 : i32
    return %c0_i32, %c0_i32_0 : i32, i32
  }
  func.func @transform_7(%arg0: i32) -> (i32, i32) {
    %c0_i32 = arith.constant 0 : i32
    %c0_i32_0 = arith.constant 0 : i32
    %c0_i32_1 = arith.constant 0 : i32
    return %c0_i32, %c0_i32_0 : i32, i32
  }
  func.func @transform_8(%arg0: i32) -> (i32, i32) {
    %c0_i32 = arith.constant 0 : i32
    %c0_i32_0 = arith.constant 0 : i32
    %c0_i32_1 = arith.constant 0 : i32
    return %c0_i32, %c0_i32_0 : i32, i32
  }
  func.func @transform_9(%arg0: i32) -> (i32, i32) {
    %c0_i32 = arith.constant 0 : i32
    %c0_i32_0 = arith.constant 0 : i32
    %c0_i32_1 = arith.constant 0 : i32
    return %c0_i32, %c0_i32_0 : i32, i32
  }
  func.func @transform_10(%arg0: i32) -> (i32, i32) {
    %c0_i32 = arith.constant 0 : i32
    %c0_i32_0 = arith.constant 0 : i32
    %c0_i32_1 = arith.constant 0 : i32
    return %c0_i32, %c0_i32_0 : i32, i32
  }
  func.func @transform_11(%arg0: i32) -> (i32, i32) {
    %c0_i32 = arith.constant 0 : i32
    %c0_i32_0 = arith.constant 0 : i32
    %c0_i32_1 = arith.constant 0 : i32
    return %c0_i32, %c0_i32_0 : i32, i32
  }
  func.func @transform_12(%arg0: i32) -> (i32, i32) {
    %c0_i32 = arith.constant 0 : i32
    %c0_i32_0 = arith.constant 0 : i32
    %c0_i32_1 = arith.constant 0 : i32
    return %c0_i32, %c0_i32_0 : i32, i32
  }
}

</mosaic_0001>

<llo_original>
// kernel: div.4
$region0: #{div.4}
  #allocation0 [shape = 's32[1]{0}', space=sflag, size = 0x4, scoped, tag = 'scoped memory for div.4']
  %s0 = inlined_call_operand.vmem [shape: f32[2], index: 0, kind: input, shape index: {}]
  %s1 = inlined_call_operand.vmem [shape: f32[2], index: 1, kind: input, shape index: {}]
  %s2 = inlined_call_operand.vmem [shape: f32[2], index: 2, kind: output, shape index: {}]
  %v3 = vld [vmem:[%s0] sm:$0x1]
  %v4 = vld [vmem:[%s1] sm:$0x1]
  %5 = xla_tuple %v3, %v4
  %6 = xla_tuple %5
  %v7 = vrcp.pop %v4
  %v8 = vmul.f32 %v3, %v7
  %9 = xla_tuple %v8
  %10 = vst [vmem:[%s2] sm:$0x1] %v8

// kernel: single_pna_neair_block.1
$region0: #{single_pna_neair_block.1}
  #allocation0 [shape = 'u32[]', space=smem, size = 0x4, offset = 0x4, fixed_abs, tag = 'smem constant byte address 0x4 - core index']
  #allocation1 [shape = 'u32[144,128]{1,0:T(1,128)}', space=vmem, size = 0x12000, scoped, tag = 'internal scratch']
  #allocation2 [shape = 'f32[16,32]{1,0:T(8,128)}', space=vmem, size = 0x2000, scoped, tag = 'scratch operand']
  #allocation3 [shape = 'f32[16,32]{1,0:T(8,128)}', space=vmem, size = 0x2000, scoped, tag = 'scratch operand']
  #allocation4 [shape = 'f32[16,1]{1,0:T(8,128)}', space=vmem, size = 0x2000, scoped, tag = 'scratch operand']
  #allocation5 [shape = 'f32[16,32]{1,0:T(8,128)}', space=vmem, size = 0x2000, scoped, tag = 'scratch operand']
  #allocation6 [shape = 'f32[16,32]{1,0:T(8,128)}', space=vmem, size = 0x2000, scoped, tag = 'scratch operand']
  %s0 = inlined_call_operand.vmem [shape: s32[64,1], index: 0, kind: input, shape index: {}]
  %s1 = inlined_call_operand.vmem [shape: s32[64,1], index: 1, kind: input, shape index: {}]
  %s2 = inlined_call_operand.vmem [shape: s32[64,1], index: 2, kind: input, shape index: {}]
  %s3 = inlined_call_operand.vmem [shape: f32[64,1], index: 3, kind: input, shape index: {}]
  %s4 = inlined_call_operand.vmem [shape: f32[16,64], index: 4, kind: input, shape index: {}]
  %s5 = inlined_call_operand.vmem [shape: f32[8,32], index: 5, kind: input, shape index: {}]
  %s6 = inlined_call_operand.vmem [shape: f32[8,32], index: 6, kind: input, shape index: {}]
  %s7 = inlined_call_operand.vmem [shape: f32[128,32], index: 7, kind: input, shape index: {}]
  %s8 = inlined_call_operand.vmem [shape: f32[1,32], index: 8, kind: input, shape index: {}]
  %s9 = inlined_call_operand.vmem [shape: f32[96,32], index: 9, kind: input, shape index: {}]
  %s10 = inlined_call_operand.vmem [shape: f32[1,32], index: 10, kind: input, shape index: {}]
  %s11 = inlined_call_operand.vmem [shape: f32[1,32], index: 11, kind: input, shape index: {}]
  %s12 = inlined_call_operand.hbm [shape: f32[16,128], index: 12, kind: output, shape index: {}]
  %s13 = sld [smem:[#allocation0]]
  $region66: #{single_pna_neair_block.1} parent=0
    _
  %s15 = ssub.s32 1, %s13
  %s16 = scalar_select 0, %s15, %s13
  $region1: #{single_pna_neair_block.1} parent=0
    #allocation7 [shape = 'u8[8192]{0}', space=vmem, size = 0x2000, scoped, tag = 'output window, operand 0, single buffered']
    #allocation8 [shape = 's32[1]{0}', space=sflag, size = 0x4, scoped, tag = 'scoped memory for single_pna_neair_block.1']
    %17 = vsyncpa [#allocation8], 0
    // Predicated region
    $region2: #{single_pna_neair_block.1} parent=1 // pred_check
      _
    $region3: #{single_pna_neair_block.1} parent=1 // pred_check_branch
      %19 = sbr.rel (0) target = $region5
    $region4: #{single_pna_neair_block.1} parent=1 // pred_region
      _
    $region5: #{single_pna_neair_block.1} parent=1 // pred_fallthru
      _
    // Predicated region
    $region6: #{single_pna_neair_block.1} parent=1 // pred_check
      _
    $region7: #{single_pna_neair_block.1} parent=1 // pred_check_branch
      %21 = sbr.rel (0) target = $region9
    $region8: #{single_pna_neair_block.1} parent=1 // pred_region
      _
    $region9: #{single_pna_neair_block.1} parent=1 // pred_fallthru
      _
    // Predicated region
    $region10: #{single_pna_neair_block.1} parent=1 // pred_check
      _
    $region11: #{single_pna_neair_block.1} parent=1 // pred_check_branch
      %23 = sbr.rel (0) target = $region13
    $region12: #{single_pna_neair_block.1} parent=1 // pred_region
      _
    $region13: #{single_pna_neair_block.1} parent=1 // pred_fallthru
      _
    // Predicated region
    $region14: #{single_pna_neair_block.1} parent=1 // pred_check
      _
    $region15: #{single_pna_neair_block.1} parent=1 // pred_check_branch
      %25 = sbr.rel (0) target = $region17
    $region16: #{single_pna_neair_block.1} parent=1 // pred_region
      _
    $region17: #{single_pna_neair_block.1} parent=1 // pred_fallthru
      _
    // Predicated region
    $region18: #{single_pna_neair_block.1} parent=1 // pred_check
      _
    $region19: #{single_pna_neair_block.1} parent=1 // pred_check_branch
      %27 = sbr.rel (0) target = $region21
    $region20: #{single_pna_neair_block.1} parent=1 // pred_region
      _
    $region21: #{single_pna_neair_block.1} parent=1 // pred_fallthru
      _
    // Predicated region
    $region22: #{single_pna_neair_block.1} parent=1 // pred_check
      _
    $region23: #{single_pna_neair_block.1} parent=1 // pred_check_branch
      %29 = sbr.rel (0) target = $region25
    $region24: #{single_pna_neair_block.1} parent=1 // pred_region
      _
    $region25: #{single_pna_neair_block.1} parent=1 // pred_fallthru
      _
    // Predicated region
    $region26: #{single_pna_neair_block.1} parent=1 // pred_check
      _
    $region27: #{single_pna_neair_block.1} parent=1 // pred_check_branch
      %31 = sbr.rel (0) target = $region29
    $region28: #{single_pna_neair_block.1} parent=1 // pred_region
      _
    $region29: #{single_pna_neair_block.1} parent=1 // pred_fallthru
      _
    // Predicated region
    $region30: #{single_pna_neair_block.1} parent=1 // pred_check
      _
    $region31: #{single_pna_neair_block.1} parent=1 // pred_check_branch
      %33 = sbr.rel (0) target = $region33
    $region32: #{single_pna_neair_block.1} parent=1 // pred_region
      _
    $region33: #{single_pna_neair_block.1} parent=1 // pred_fallthru
      _
    // Predicated region
    $region34: #{single_pna_neair_block.1} parent=1 // pred_check
      _
    $region35: #{single_pna_neair_block.1} parent=1 // pred_check_branch
      %35 = sbr.rel (0) target = $region37
    $region36: #{single_pna_neair_block.1} parent=1 // pred_region
      _
    $region37: #{single_pna_neair_block.1} parent=1 // pred_fallthru
      _
    // Predicated region
    $region38: #{single_pna_neair_block.1} parent=1 // pred_check
      _
    $region39: #{single_pna_neair_block.1} parent=1 // pred_check_branch
      %37 = sbr.rel (0) target = $region41
    $region40: #{single_pna_neair_block.1} parent=1 // pred_region
      _
    $region41: #{single_pna_neair_block.1} parent=1 // pred_fallthru
      _
    // Predicated region
    $region42: #{single_pna_neair_block.1} parent=1 // pred_check
      _
    $region43: #{single_pna_neair_block.1} parent=1 // pred_check_branch
      %39 = sbr.rel (0) target = $region45
    $region44: #{single_pna_neair_block.1} parent=1 // pred_region
      _
    $region45: #{single_pna_neair_block.1} parent=1 // pred_fallthru
      _
    // Predicated region
    $region46: #{single_pna_neair_block.1} parent=1 // pred_check
      _
    $region47: #{single_pna_neair_block.1} parent=1 // pred_check_branch
      %41 = sbr.rel (0) target = $region49
    $region48: #{single_pna_neair_block.1} parent=1 // pred_region
      _
    $region49: #{single_pna_neair_block.1} parent=1 // pred_fallthru
      _
    %p42 = scmp.eq.s32.totalorder 0, 0
    // Predicated region
    $region50: #{single_pna_neair_block.1} parent=1 // pred_check
      %p43 = pneg %p42
    $region51: #{single_pna_neair_block.1} parent=1 // pred_check_branch
      %45 = sbr.rel (%p43) target = $region53
    $region52: #{single_pna_neair_block.1} parent=1 // pred_region
      %vm46 = vcmask 261120
      %47 = vst.msk [vmem:[#allocation2] sm:$0xff] %vm46, 0.0
      %48 = vst.msk [vmem:[#allocation2 + $0x8] sm:$0xff] %vm46, 0.0
      %49 = vst.msk [vmem:[#allocation3] sm:$0xff] %vm46, 0.0
      %50 = vst.msk [vmem:[#allocation3 + $0x8] sm:$0xff] %vm46, 0.0
      %vm51 = vcmask 7168
      %52 = vst.msk [vmem:[#allocation4] sm:$0xff] %vm51, 0.0
      %53 = vst.msk [vmem:[#allocation4 + $0x8] sm:$0xff] %vm51, 0.0
      %54 = vst.msk [vmem:[#allocation5] sm:$0xff] %vm46, -inf
      %55 = vst.msk [vmem:[#allocation5 + $0x8] sm:$0xff] %vm46, -inf
      %56 = vst.msk [vmem:[#allocation6] sm:$0xff] %vm46, inf
      %57 = vst.msk [vmem:[#allocation6 + $0x8] sm:$0xff] %vm46, inf
    $region53: #{single_pna_neair_block.1} parent=1 // pred_fallthru
      _
    %v58 = vld [vmem:[%s0] sm:$0xff]
    %v59 = vld [vmem:[%s0 + $0x8] sm:$0xff]
    %v60 = vld [vmem:[%s0 + $0x10] sm:$0xff]
    %v61 = vld [vmem:[%s0 + $0x18] sm:$0xff]
    %v62 = vld [vmem:[%s0 + $0x20] sm:$0xff]
    %v63 = vld [vmem:[%s0 + $0x28] sm:$0xff]
    %v64 = vld [vmem:[%s0 + $0x30] sm:$0xff]
    %v65 = vld [vmem:[%s0 + $0x38] sm:$0xff]
    %v66 = vld [vmem:[%s1] sm:$0xff]
    %v67 = vld [vmem:[%s1 + $0x8] sm:$0xff]
    %v68 = vld [vmem:[%s1 + $0x10] sm:$0xff]
    %v69 = vld [vmem:[%s1 + $0x18] sm:$0xff]
    %v70 = vld [vmem:[%s1 + $0x20] sm:$0xff]
    %v71 = vld [vmem:[%s1 + $0x28] sm:$0xff]
    %v72 = vld [vmem:[%s1 + $0x30] sm:$0xff]
    %v73 = vld [vmem:[%s1 + $0x38] sm:$0xff]
    %v74 = vld [vmem:[%s2] sm:$0xff]
    %v75 = vld [vmem:[%s2 + $0x8] sm:$0xff]
    %v76 = vld [vmem:[%s2 + $0x10] sm:$0xff]
    %v77 = vld [vmem:[%s2 + $0x18] sm:$0xff]
    %v78 = vld [vmem:[%s2 + $0x20] sm:$0xff]
    %v79 = vld [vmem:[%s2 + $0x28] sm:$0xff]
    %v80 = vld [vmem:[%s2 + $0x30] sm:$0xff]
    %v81 = vld [vmem:[%s2 + $0x38] sm:$0xff]
    %v82 = vld [vmem:[%s3] sm:$0xff]
    %v83 = vld [vmem:[%s3 + $0x8] sm:$0xff]
    %v84 = vld [vmem:[%s3 + $0x10] sm:$0xff]
    %v85 = vld [vmem:[%s3 + $0x18] sm:$0xff]
    %v86 = vld [vmem:[%s3 + $0x20] sm:$0xff]
    %v87 = vld [vmem:[%s3 + $0x28] sm:$0xff]
    %v88 = vld [vmem:[%s3 + $0x30] sm:$0xff]
    %v89 = vld [vmem:[%s3 + $0x38] sm:$0xff]
    %v90 = vlaneseq
    %v91 = vand.u32 %v90, 127
    %92 = vset.pattern.permute.xlu0 0
    %93 = vperm.xlu0 %92, %v58
    %v94 = vpop.permute.xlu0 %93
    %95 = vset.pattern.permute.xlu0 0
    %96 = vperm.xlu0 %95, %v59
    %v97 = vpop.permute.xlu0 %96
    %98 = vset.pattern.permute.xlu0 0
    %99 = vperm.xlu0 %98, %v60
    %v100 = vpop.permute.xlu0 %99
    %101 = vset.pattern.permute.xlu0 0
    %102 = vperm.xlu0 %101, %v61
    %v103 = vpop.permute.xlu0 %102
    %104 = vset.pattern.permute.xlu0 0
    %105 = vperm.xlu0 %104, %v62
    %v106 = vpop.permute.xlu0 %105
    %107 = vset.pattern.permute.xlu0 0
    %108 = vperm.xlu0 %107, %v63
    %v109 = vpop.permute.xlu0 %108
    %110 = vset.pattern.permute.xlu0 0
    %111 = vperm.xlu0 %110, %v64
    %v112 = vpop.permute.xlu0 %111
    %113 = vset.pattern.permute.xlu0 0
    %114 = vperm.xlu0 %113, %v65
    %v115 = vpop.permute.xlu0 %114
    %vm116 = vcmp.eq.s32.totalorder %v91, %v94
    %vm117 = vcmp.eq.s32.totalorder %v91, %v97
    %vm118 = vcmp.eq.s32.totalorder %v91, %v100
    %vm119 = vcmp.eq.s32.totalorder %v91, %v103
    %vm120 = vcmp.eq.s32.totalorder %v91, %v106
    %vm121 = vcmp.eq.s32.totalorder %v91, %v109
    %vm122 = vcmp.eq.s32.totalorder %v91, %v112
    %vm123 = vcmp.eq.s32.totalorder %v91, %v115
    %125 = vset.pattern.permute.xlu0 0
    %126 = vperm.xlu0 %125, %v82
    %v127 = vpop.permute.xlu0 %126
    %130 = vset.pattern.permute.xlu0 0
    %131 = vperm.xlu0 %130, %v83
    %v132 = vpop.permute.xlu0 %131
    %135 = vset.pattern.permute.xlu0 0
    %136 = vperm.xlu0 %135, %v84
    %v137 = vpop.permute.xlu0 %136
    %140 = vset.pattern.permute.xlu0 0
    %141 = vperm.xlu0 %140, %v85
    %v142 = vpop.permute.xlu0 %141
    %145 = vset.pattern.permute.xlu0 0
    %146 = vperm.xlu0 %145, %v86
    %v147 = vpop.permute.xlu0 %146
    %150 = vset.pattern.permute.xlu0 0
    %151 = vperm.xlu0 %150, %v87
    %v152 = vpop.permute.xlu0 %151
    %155 = vset.pattern.permute.xlu0 0
    %156 = vperm.xlu0 %155, %v88
    %v157 = vpop.permute.xlu0 %156
    %160 = vset.pattern.permute.xlu0 0
    %161 = vperm.xlu0 %160, %v89
    %v162 = vpop.permute.xlu0 %161
    %v164 = vsel %vm116, %v127, 0.0
    %v165 = vsel %vm117, %v132, 0.0
    %v166 = vsel %vm118, %v137, 0.0
    %v167 = vsel %vm119, %v142, 0.0
    %v168 = vsel %vm120, %v147, 0.0
    %v169 = vsel %vm121, %v152, 0.0
    %v170 = vsel %vm122, %v157, 0.0
    %v171 = vsel %vm123, %v162, 0.0
    %172 = vset.pattern.permute.xlu0 0
    %173 = vperm.xlu0 %172, %v66
    %v174 = vpop.permute.xlu0 %173
    %175 = vset.pattern.permute.xlu0 0
    %176 = vperm.xlu0 %175, %v67
    %v177 = vpop.permute.xlu0 %176
    %178 = vset.pattern.permute.xlu0 0
    %179 = vperm.xlu0 %178, %v68
    %v180 = vpop.permute.xlu0 %179
    %181 = vset.pattern.permute.xlu0 0
    %182 = vperm.xlu0 %181, %v69
    %v183 = vpop.permute.xlu0 %182
    %184 = vset.pattern.permute.xlu0 0
    %185 = vperm.xlu0 %184, %v70
    %v186 = vpop.permute.xlu0 %185
    %187 = vset.pattern.permute.xlu0 0
    %188 = vperm.xlu0 %187, %v71
    %v189 = vpop.permute.xlu0 %188
    %190 = vset.pattern.permute.xlu0 0
    %191 = vperm.xlu0 %190, %v72
    %v192 = vpop.permute.xlu0 %191
    %193 = vset.pattern.permute.xlu0 0
    %194 = vperm.xlu0 %193, %v73
    %v195 = vpop.permute.xlu0 %194
    %vm196 = vcmp.eq.s32.totalorder %v91, %v174
    %vm197 = vcmp.eq.s32.totalorder %v91, %v177
    %vm198 = vcmp.eq.s32.totalorder %v91, %v180
    %vm199 = vcmp.eq.s32.totalorder %v91, %v183
    %vm200 = vcmp.eq.s32.totalorder %v91, %v186
    %vm201 = vcmp.eq.s32.totalorder %v91, %v189
    %vm202 = vcmp.eq.s32.totalorder %v91, %v192
    %vm203 = vcmp.eq.s32.totalorder %v91, %v195
    %v204 = vsel %vm196, 1.0, 0.0
    %v205 = vsel %vm197, 1.0, 0.0
    %v206 = vsel %vm198, 1.0, 0.0
    %v207 = vsel %vm199, 1.0, 0.0
    %v208 = vsel %vm200, 1.0, 0.0
    %v209 = vsel %vm201, 1.0, 0.0
    %v210 = vsel %vm202, 1.0, 0.0
    %v211 = vsel %vm203, 1.0, 0.0
    %v212 = vadd.f32 %v164, %v204
    %v213 = vadd.f32 %v165, %v205
    %v214 = vadd.f32 %v166, %v206
    %v215 = vadd.f32 %v167, %v207
    %v216 = vadd.f32 %v168, %v208
    %v217 = vadd.f32 %v169, %v209
    %v218 = vadd.f32 %v170, %v210
    %v219 = vadd.f32 %v171, %v211
    %v220 = vld [vmem:[%s4] sm:$0xff]
    %v221 = vld [vmem:[%s4 + $0x8] sm:$0xff]
    %vm222 = vcmask 130048
    %v224 = vsel %vm222, %v212, 0
    %v227 = vsel %vm222, %v213, 0
    %v230 = vsel %vm222, %v214, 0
    %v233 = vsel %vm222, %v215, 0
    %v236 = vsel %vm222, %v216, 0
    %v239 = vsel %vm222, %v217, 0
    %v242 = vsel %vm222, %v218, 0
    %v245 = vsel %vm222, %v219, 0
    %247 = vmatprep.subr.mxu0 0.0
    %248 = vmatpush1.msra.mxu0 %v220
    %249 = vmatprep.subr.mxu0 0.0
    %250 = vmatpush1.msra.mxu0 %v221
    %251 = vmatprep.subr.mxu0 0.0
    %252 = vmatpush1.msra.mxu0 0.0
    %253 = vmatprep.subr.mxu0 0.0
    %254 = vmatpush1.msra.mxu0 0.0
    %255 = vmatprep.subr.mxu0 0.0
    %256 = vmatpush1.msra.mxu0 0.0
    %257 = vmatprep.subr.mxu0 0.0
    %258 = vmatpush1.msra.mxu0 0.0
    %259 = vmatprep.subr.mxu0 0.0
    %260 = vmatpush1.msra.mxu0 0.0
    %261 = vmatprep.subr.mxu0 0.0
    %262 = vmatpush1.msra.mxu0 0.0
    %263 = vmatprep.subr.mxu0 0.0
    %264 = vmatpush1.msra.mxu0 0.0
    %265 = vmatprep.subr.mxu0 0.0
    %266 = vmatpush1.msra.mxu0 0.0
    %267 = vmatprep.subr.mxu0 0.0
    %268 = vmatpush1.msra.mxu0 0.0
    %269 = vmatprep.subr.mxu0 0.0
    %270 = vmatpush1.msra.mxu0 0.0
    %271 = vmatprep.subr.mxu0 0.0
    %272 = vmatpush1.msra.mxu0 0.0
    %273 = vmatprep.subr.mxu0 0.0
    %274 = vmatpush1.msra.mxu0 0.0
    %275 = vmatprep.subr.mxu0 0.0
    %276 = vmatpush1.msra.mxu0 0.0
    %277 = vmatprep.subr.mxu0 0.0
    %278 = vmatpush1.msra.mxu0 0.0
    %279 = vmatprep.subr.mxu0 0.0
    %280 = vmatpush1.msra.mxu0 0.0
    %281 = vmatprep.subr.mxu0 0.0
    %282 = vmatpush1.msra.mxu0 0.0
    %283 = vmatprep.subr.mxu0 0.0
    %284 = vmatpush1.msra.mxu0 0.0
    %285 = vmatprep.subr.mxu0 0.0
    %286 = vmatpush1.msra.mxu0 0.0
    %287 = vmatprep.subr.mxu0 0.0
    %288 = vmatpush1.msra.mxu0 0.0
    %289 = vmatprep.subr.mxu0 0.0
    %290 = vmatpush1.msra.mxu0 0.0
    %291 = vmatprep.subr.mxu0 0.0
    %292 = vmatpush1.msra.mxu0 0.0
    %293 = vmatprep.subr.mxu0 0.0
    %294 = vmatpush1.msra.mxu0 0.0
    %295 = vmatprep.subr.mxu0 0.0
    %296 = vmatpush1.msra.mxu0 0.0
    %297 = vmatprep.subr.mxu0 0.0
    %298 = vmatpush1.msra.mxu0 0.0
    %299 = vmatprep.subr.mxu0 0.0
    %300 = vmatpush1.msra.mxu0 0.0
    %301 = vmatprep.subr.mxu0 0.0
    %302 = vmatpush1.msra.mxu0 0.0
    %303 = vmatprep.subr.mxu0 0.0
    %304 = vmatpush1.msra.mxu0 0.0
    %305 = vmatprep.subr.mxu0 0.0
    %306 = vmatpush1.msra.mxu0 0.0
    %307 = vmatprep.subr.mxu0 0.0
    %308 = vmatpush1.msra.mxu0 0.0
    %309 = vmatprep.subr.mxu0 0.0
    %310 = vmatpush1.msra.mxu0 0.0
    %311 = vmatprep.mubr.f32.mxu0 0.0
    %312 = vmatmul.mubr.f32.gmra.mrb[0].mxu0 %v224
    %v313 = vpop.f32.mrb[0].mxu0
    %v314 = vadd.f32 0.0, %v313
    %v315 = vpop.f32.mrb[0].mxu0
    %316 = vmatprep.mubr.f32.mxu0 0.0
    %317 = vmatmul.mubr.f32.gmra.mrb[0].mxu0 %v227
    %v318 = vpop.f32.mrb[0].mxu0
    %v319 = vadd.f32 0.0, %v318
    %v320 = vpop.f32.mrb[0].mxu0
    %321 = vmatprep.mubr.f32.mxu0 0.0
    %322 = vmatmul.mubr.f32.gmra.mrb[0].mxu0 %v230
    %v323 = vpop.f32.mrb[0].mxu0
    %v324 = vadd.f32 0.0, %v323
    %v325 = vpop.f32.mrb[0].mxu0
    %326 = vmatprep.mubr.f32.mxu0 0.0
    %327 = vmatmul.mubr.f32.gmra.mrb[0].mxu0 %v233
    %v328 = vpop.f32.mrb[0].mxu0
    %v329 = vadd.f32 0.0, %v328
    %v330 = vpop.f32.mrb[0].mxu0
    %331 = vmatprep.mubr.f32.mxu0 0.0
    %332 = vmatmul.mubr.f32.gmra.mrb[0].mxu0 %v236
    %v333 = vpop.f32.mrb[0].mxu0
    %v334 = vadd.f32 0.0, %v333
    %v335 = vpop.f32.mrb[0].mxu0
    %336 = vmatprep.mubr.f32.mxu0 0.0
    %337 = vmatmul.mubr.f32.gmra.mrb[0].mxu0 %v239
    %v338 = vpop.f32.mrb[0].mxu0
    %v339 = vadd.f32 0.0, %v338
    %v340 = vpop.f32.mrb[0].mxu0
    %341 = vmatprep.mubr.f32.mxu0 0.0
    %342 = vmatmul.mubr.f32.gmra.mrb[0].mxu0 %v242
    %v343 = vpop.f32.mrb[0].mxu0
    %v344 = vadd.f32 0.0, %v343
    %v345 = vpop.f32.mrb[0].mxu0
    %346 = vmatprep.mubr.f32.mxu0 0.0
    %347 = vmatmul.mubr.f32.gmra.mrb[0].mxu0 %v245
    %v348 = vpop.f32.mrb[0].mxu0
    %v349 = vadd.f32 0.0, %v348
    %v350 = vpop.f32.mrb[0].mxu0
    %351 = vdwg.mxu0
    %360 = vrot.lane.b32.xlu0 %v314, 96
    %v361 = vpop.permute.xlu0 %360
    %362 = vrot.lane.b32.xlu0 %v319, 96
    %v363 = vpop.permute.xlu0 %362
    %364 = vrot.lane.b32.xlu0 %v324, 96
    %v365 = vpop.permute.xlu0 %364
    %366 = vrot.lane.b32.xlu0 %v329, 96
    %v367 = vpop.permute.xlu0 %366
    %368 = vrot.lane.b32.xlu0 %v334, 96
    %v369 = vpop.permute.xlu0 %368
    %370 = vrot.lane.b32.xlu0 %v339, 96
    %v371 = vpop.permute.xlu0 %370
    %372 = vrot.lane.b32.xlu0 %v344, 96
    %v373 = vpop.permute.xlu0 %372
    %374 = vrot.lane.b32.xlu0 %v349, 96
    %v375 = vpop.permute.xlu0 %374
    %v384 = vmul.f32 %v314, %v361
    %v385 = vmul.f32 %v319, %v363
    %v386 = vmul.f32 %v324, %v365
    %v387 = vmul.f32 %v329, %v367
    %v388 = vmul.f32 %v334, %v369
    %v389 = vmul.f32 %v339, %v371
    %v390 = vmul.f32 %v344, %v373
    %v391 = vmul.f32 %v349, %v375
    %392 = vset.pattern.permute.xlu0 0
    %393 = vperm.xlu0 %392, %v74
    %v394 = vpop.permute.xlu0 %393
    %395 = vset.pattern.permute.xlu0 0
    %396 = vperm.xlu0 %395, %v75
    %v397 = vpop.permute.xlu0 %396
    %398 = vset.pattern.permute.xlu0 0
    %399 = vperm.xlu0 %398, %v76
    %v400 = vpop.permute.xlu0 %399
    %401 = vset.pattern.permute.xlu0 0
    %402 = vperm.xlu0 %401, %v77
    %v403 = vpop.permute.xlu0 %402
    %404 = vset.pattern.permute.xlu0 0
    %405 = vperm.xlu0 %404, %v78
    %v406 = vpop.permute.xlu0 %405
    %407 = vset.pattern.permute.xlu0 0
    %408 = vperm.xlu0 %407, %v79
    %v409 = vpop.permute.xlu0 %408
    %410 = vset.pattern.permute.xlu0 0
    %411 = vperm.xlu0 %410, %v80
    %v412 = vpop.permute.xlu0 %411
    %413 = vset.pattern.permute.xlu0 0
    %414 = vperm.xlu0 %413, %v81
    %v415 = vpop.permute.xlu0 %414
    %vm416 = vcmp.eq.s32.totalorder %v91, %v394
    %vm417 = vcmp.eq.s32.totalorder %v91, %v397
    %vm418 = vcmp.eq.s32.totalorder %v91, %v400
    %vm419 = vcmp.eq.s32.totalorder %v91, %v403
    %vm420 = vcmp.eq.s32.totalorder %v91, %v406
    %vm421 = vcmp.eq.s32.totalorder %v91, %v409
    %vm422 = vcmp.eq.s32.totalorder %v91, %v412
    %vm423 = vcmp.eq.s32.totalorder %v91, %v415
    %v424 = vsel %vm416, 1, 0
    %v425 = vsel %vm417, 1, 0
    %v426 = vsel %vm418, 1, 0
    %v427 = vsel %vm419, 1, 0
    %v428 = vsel %vm420, 1, 0
    %v429 = vsel %vm421, 1, 0
    %v430 = vsel %vm422, 1, 0
    %v431 = vsel %vm423, 1, 0
    %v432 = vcvt.s32.f32 %v424
    %v433 = vcvt.s32.f32 %v425
    %v434 = vcvt.s32.f32 %v426
    %v435 = vcvt.s32.f32 %v427
    %v436 = vcvt.s32.f32 %v428
    %v437 = vcvt.s32.f32 %v429
    %v438 = vcvt.s32.f32 %v430
    %v439 = vcvt.s32.f32 %v431
    %v440 = vmul.f32 %v384, %v384
    %v441 = vmul.f32 %v385, %v385
    %v442 = vmul.f32 %v386, %v386
    %v443 = vmul.f32 %v387, %v387
    %v444 = vmul.f32 %v388, %v388
    %v445 = vmul.f32 %v389, %v389
    %v446 = vmul.f32 %v390, %v390
    %v447 = vmul.f32 %v391, %v391
    %456 = vrot.lane.b32.xlu0 %v440, 32
    %v457 = vpop.permute.xlu0 %456
    %458 = vrot.lane.b32.xlu0 %v441, 32
    %v459 = vpop.permute.xlu0 %458
    %460 = vrot.lane.b32.xlu0 %v442, 32
    %v461 = vpop.permute.xlu0 %460
    %462 = vrot.lane.b32.xlu0 %v443, 32
    %v463 = vpop.permute.xlu0 %462
    %464 = vrot.lane.b32.xlu0 %v444, 32
    %v465 = vpop.permute.xlu0 %464
    %466 = vrot.lane.b32.xlu0 %v445, 32
    %v467 = vpop.permute.xlu0 %466
    %468 = vrot.lane.b32.xlu0 %v446, 32
    %v469 = vpop.permute.xlu0 %468
    %470 = vrot.lane.b32.xlu0 %v447, 32
    %v471 = vpop.permute.xlu0 %470
    %vm480 = vcmask 261120
    %v481 = vsel %vm480, %v384, %v457
    %v482 = vsel %vm480, %v385, %v459
    %v483 = vsel %vm480, %v386, %v461
    %v484 = vsel %vm480, %v387, %v463
    %v485 = vsel %vm480, %v388, %v465
    %v486 = vsel %vm480, %v389, %v467
    %v487 = vsel %vm480, %v390, %v469
    %v488 = vsel %vm480, %v391, %v471
    %vm489 = vcmask 523264
    %v490 = vsel %vm489, %v481, 1.0
    %v491 = vsel %vm489, %v482, 1.0
    %v492 = vsel %vm489, %v483, 1.0
    %v493 = vsel %vm489, %v484, 1.0
    %v494 = vsel %vm489, %v485, 1.0
    %v495 = vsel %vm489, %v486, 1.0
    %v496 = vsel %vm489, %v487, 1.0
    %v497 = vsel %vm489, %v488, 1.0
    %498 = vxpose.xlu0.b32.start [1/16] %v432, 128
    %499 = vxpose.xlu0.b32.cont [2/16] %v433, 128
    %500 = vxpose.xlu0.b32.cont [3/16] %v434, 128
    %501 = vxpose.xlu0.b32.cont [4/16] %v435, 128
    %502 = vxpose.xlu0.b32.cont [5/16] %v436, 128
    %503 = vxpose.xlu0.b32.cont [6/16] %v437, 128
    %504 = vxpose.xlu0.b32.cont [7/16] %v438, 128
    %505 = vxpose.xlu0.b32.cont [8/16] %v439, 128
    %506 = vxpose.xlu0.b32.cont [9/16] 0.0, 128
    %507 = vxpose.xlu0.b32.cont [10/16] 0.0, 128
    %508 = vxpose.xlu0.b32.cont [11/16] 0.0, 128
    %509 = vxpose.xlu0.b32.cont [12/16] 0.0, 128
    %510 = vxpose.xlu0.b32.cont [13/16] 0.0, 128
    %511 = vxpose.xlu0.b32.cont [14/16] 0.0, 128
    %512 = vxpose.xlu0.b32.cont [15/16] 0.0, 128
    %513 = vxpose.xlu0.b32.end [16/16] 0.0, 128
    %v514 = vpop.trf.xlu0
    %v515 = vpop.trf.xlu0
    %v516 = vpop.trf.xlu0
    %v517 = vpop.trf.xlu0
    %v518 = vpop.trf.xlu0
    %v519 = vpop.trf.xlu0
    %v520 = vpop.trf.xlu0
    %v521 = vpop.trf.xlu0
    %v522 = vpop.trf.xlu0
    %v523 = vpop.trf.xlu0
    %v524 = vpop.trf.xlu0
    %v525 = vpop.trf.xlu0
    %v526 = vpop.trf.xlu0
    %v527 = vpop.trf.xlu0
    %v528 = vpop.trf.xlu0
    %v529 = vpop.trf.xlu0
    %v531 = vsel %vm489, %v514, 0
    %v534 = vsel %vm489, %v515, 0
    %536 = vmatprep.subr.mxu0 0.0
    %537 = vmatpush1.msra.mxu0 %v490
    %538 = vmatprep.subr.mxu0 0.0
    %539 = vmatpush1.msra.mxu0 %v491
    %540 = vmatprep.subr.mxu0 0.0
    %541 = vmatpush1.msra.mxu0 %v492
    %542 = vmatprep.subr.mxu0 0.0
    %543 = vmatpush1.msra.mxu0 %v493
    %544 = vmatprep.subr.mxu0 0.0
    %545 = vmatpush1.msra.mxu0 %v494
    %546 = vmatprep.subr.mxu0 0.0
    %547 = vmatpush1.msra.mxu0 %v495
    %548 = vmatprep.subr.mxu0 0.0
    %549 = vmatpush1.msra.mxu0 %v496
    %550 = vmatprep.subr.mxu0 0.0
    %551 = vmatpush1.msra.mxu0 %v497
    %552 = vmatprep.subr.mxu0 0.0
    %553 = vmatpush1.msra.mxu0 0.0
    %554 = vmatprep.subr.mxu0 0.0
    %555 = vmatpush1.msra.mxu0 0.0
    %556 = vmatprep.subr.mxu0 0.0
    %557 = vmatpush1.msra.mxu0 0.0
    %558 = vmatprep.subr.mxu0 0.0
    %559 = vmatpush1.msra.mxu0 0.0
    %560 = vmatprep.subr.mxu0 0.0
    %561 = vmatpush1.msra.mxu0 0.0
    %562 = vmatprep.subr.mxu0 0.0
    %563 = vmatpush1.msra.mxu0 0.0
    %564 = vmatprep.subr.mxu0 0.0
    %565 = vmatpush1.msra.mxu0 0.0
    %566 = vmatprep.subr.mxu0 0.0
    %567 = vmatpush1.msra.mxu0 0.0
    %568 = vmatprep.subr.mxu0 0.0
    %569 = vmatpush1.msra.mxu0 0.0
    %570 = vmatprep.subr.mxu0 0.0
    %571 = vmatpush1.msra.mxu0 0.0
    %572 = vmatprep.subr.mxu0 0.0
    %573 = vmatpush1.msra.mxu0 0.0
    %574 = vmatprep.subr.mxu0 0.0
    %575 = vmatpush1.msra.mxu0 0.0
    %576 = vmatprep.subr.mxu0 0.0
    %577 = vmatpush1.msra.mxu0 0.0
    %578 = vmatprep.subr.mxu0 0.0
    %579 = vmatpush1.msra.mxu0 0.0
    %580 = vmatprep.subr.mxu0 0.0
    %581 = vmatpush1.msra.mxu0 0.0
    %582 = vmatprep.subr.mxu0 0.0
    %583 = vmatpush1.msra.mxu0 0.0
    %584 = vmatprep.subr.mxu0 0.0
    %585 = vmatpush1.msra.mxu0 0.0
    %586 = vmatprep.subr.mxu0 0.0
    %587 = vmatpush1.msra.mxu0 0.0
    %588 = vmatprep.subr.mxu0 0.0
    %589 = vmatpush1.msra.mxu0 0.0
    %590 = vmatprep.subr.mxu0 0.0
    %591 = vmatpush1.msra.mxu0 0.0
    %592 = vmatprep.subr.mxu0 0.0
    %593 = vmatpush1.msra.mxu0 0.0
    %594 = vmatprep.subr.mxu0 0.0
    %595 = vmatpush1.msra.mxu0 0.0
    %596 = vmatprep.subr.mxu0 0.0
    %597 = vmatpush1.msra.mxu0 0.0
    %598 = vmatprep.subr.mxu0 0.0
    %599 = vmatpush1.msra.mxu0 0.0
    %600 = vmatprep.mubr.f32.mxu0 0.0
    %601 = vmatmul.mubr.f32.gmra.mrb[0].mxu0 %v531
    %v602 = vpop.f32.mrb[0].mxu0
    %v603 = vadd.f32 0.0, %v602
    %v604 = vpop.f32.mrb[0].mxu0
    %605 = vmatprep.mubr.f32.mxu0 0.0
    %606 = vmatmul.mubr.f32.gmra.mrb[0].mxu0 %v534
    %v607 = vpop.f32.mrb[0].mxu0
    %v608 = vadd.f32 0.0, %v607
    %v609 = vpop.f32.mrb[0].mxu0
    %610 = vdwg.mxu0
    %v611 = vld [vmem:[#allocation2] sm:$0xff]
    %v612 = vld [vmem:[#allocation2 + $0x8] sm:$0xff]
    %v613 = vadd.f32 %v611, %v603
    %v614 = vadd.f32 %v612, %v608
    %615 = vst.msk [vmem:[#allocation2] sm:$0xff] %vm480, %v613
    %616 = vst.msk [vmem:[#allocation2 + $0x8] sm:$0xff] %vm480, %v614
    %v617 = vld [vmem:[#allocation3] sm:$0xff]
    %v618 = vld [vmem:[#allocation3 + $0x8] sm:$0xff]
    %621 = vrot.lane.b32.xlu0 %v603, 96
    %v622 = vpop.permute.xlu0 %621
    %623 = vrot.lane.b32.xlu0 %v608, 96
    %v624 = vpop.permute.xlu0 %623
    %v627 = vadd.f32 %v617, %v622
    %v628 = vadd.f32 %v618, %v624
    %629 = vst.msk [vmem:[#allocation3] sm:$0xff] %vm480, %v627
    %630 = vst.msk [vmem:[#allocation3 + $0x8] sm:$0xff] %vm480, %v628
    %v631 = vld [vmem:[#allocation4] sm:$0xff]
    %v632 = vld [vmem:[#allocation4 + $0x8] sm:$0xff]
    %633 = vrot.lane.b32.xlu0 %v603, 64
    %v634 = vpop.permute.xlu0 %633
    %635 = vrot.lane.b32.xlu0 %v608, 64
    %v636 = vpop.permute.xlu0 %635
    %v639 = vadd.f32 %v631, %v634
    %v640 = vadd.f32 %v632, %v636
    %vm641 = vcmask 7168
    %642 = vst.msk [vmem:[#allocation4] sm:$0xff] %vm641, %v639
    %643 = vst.msk [vmem:[#allocation4 + $0x8] sm:$0xff] %vm641, %v640
    %v644 = vlaneseq
    %v645 = vshrl.u32 %v644, 7
    %v646 = vsub.s32 0, %v645
    %v647 = vrot.slane %v432, %v646
    %649 = vbcast.lane.b32.xlu0 %v647, 256
    %v650 = vpop.permute.xlu0 %649
    %s652 = sor.u32 256, 8
    %653 = vbcast.lane.b32.xlu0 %v647, %s652
    %v654 = vpop.permute.xlu0 %653
    %v655 = vlaneseq
    %v656 = vshrl.u32 %v655, 7
    %v657 = vsub.s32 1, %v656
    %v658 = vrot.slane %v432, %v657
    %660 = vbcast.lane.b32.xlu0 %v658, 256
    %v661 = vpop.permute.xlu0 %660
    %s663 = sor.u32 256, 8
    %664 = vbcast.lane.b32.xlu0 %v658, %s663
    %v665 = vpop.permute.xlu0 %664
    %v666 = vlaneseq
    %v667 = vshrl.u32 %v666, 7
    %v668 = vsub.s32 2, %v667
    %v669 = vrot.slane %v432, %v668
    %671 = vbcast.lane.b32.xlu0 %v669, 256
    %v672 = vpop.permute.xlu0 %671
    %s674 = sor.u32 256, 8
    %675 = vbcast.lane.b32.xlu0 %v669, %s674
    %v676 = vpop.permute.xlu0 %675
    %v677 = vlaneseq
    %v678 = vshrl.u32 %v677, 7
    %v679 = vsub.s32 3, %v678
    %v680 = vrot.slane %v432, %v679
    %682 = vbcast.lane.b32.xlu0 %v680, 256
    %v683 = vpop.permute.xlu0 %682
    %s685 = sor.u32 256, 8
    %686 = vbcast.lane.b32.xlu0 %v680, %s685
    %v687 = vpop.permute.xlu0 %686
    %v688 = vlaneseq
    %v689 = vshrl.u32 %v688, 7
    %v690 = vsub.s32 4, %v689
    %v691 = vrot.slane %v432, %v690
    %693 = vbcast.lane.b32.xlu0 %v691, 256
    %v694 = vpop.permute.xlu0 %693
    %s696 = sor.u32 256, 8
    %697 = vbcast.lane.b32.xlu0 %v691, %s696
    %v698 = vpop.permute.xlu0 %697
    %v699 = vlaneseq
    %v700 = vshrl.u32 %v699, 7
    %v701 = vsub.s32 5, %v700
    %v702 = vrot.slane %v432, %v701
    %704 = vbcast.lane.b32.xlu0 %v702, 256
    %v705 = vpop.permute.xlu0 %704
    %s707 = sor.u32 256, 8
    %708 = vbcast.lane.b32.xlu0 %v702, %s707
    %v709 = vpop.permute.xlu0 %708
    %v710 = vlaneseq
    %v711 = vshrl.u32 %v710, 7
    %v712 = vsub.s32 6, %v711
    %v713 = vrot.slane %v432, %v712
    %715 = vbcast.lane.b32.xlu0 %v713, 256
    %v716 = vpop.permute.xlu0 %715
    %s718 = sor.u32 256, 8
    %719 = vbcast.lane.b32.xlu0 %v713, %s718
    %v720 = vpop.permute.xlu0 %719
    %v721 = vlaneseq
    %v722 = vshrl.u32 %v721, 7
    %v723 = vsub.s32 7, %v722
    %v724 = vrot.slane %v432, %v723
    %726 = vbcast.lane.b32.xlu0 %v724, 256
    %v727 = vpop.permute.xlu0 %726
    %s729 = sor.u32 256, 8
    %730 = vbcast.lane.b32.xlu0 %v724, %s729
    %v731 = vpop.permute.xlu0 %730
    %v732 = vlaneseq
    %v733 = vshrl.u32 %v732, 7
    %v734 = vsub.s32 0, %v733
    %v735 = vrot.slane %v433, %v734
    %737 = vbcast.lane.b32.xlu0 %v735, 256
    %v738 = vpop.permute.xlu0 %737
    %s740 = sor.u32 256, 8
    %741 = vbcast.lane.b32.xlu0 %v735, %s740
    %v742 = vpop.permute.xlu0 %741
    %v743 = vlaneseq
    %v744 = vshrl.u32 %v743, 7
    %v745 = vsub.s32 1, %v744
    %v746 = vrot.slane %v433, %v745
    %748 = vbcast.lane.b32.xlu0 %v746, 256
    %v749 = vpop.permute.xlu0 %748
    %s751 = sor.u32 256, 8
    %752 = vbcast.lane.b32.xlu0 %v746, %s751
    %v753 = vpop.permute.xlu0 %752
    %v754 = vlaneseq
    %v755 = vshrl.u32 %v754, 7
    %v756 = vsub.s32 2, %v755
    %v757 = vrot.slane %v433, %v756
    %759 = vbcast.lane.b32.xlu0 %v757, 256
    %v760 = vpop.permute.xlu0 %759
    %s762 = sor.u32 256, 8
    %763 = vbcast.lane.b32.xlu0 %v757, %s762
    %v764 = vpop.permute.xlu0 %763
    %v765 = vlaneseq
    %v766 = vshrl.u32 %v765, 7
    %v767 = vsub.s32 3, %v766
    %v768 = vrot.slane %v433, %v767
    %770 = vbcast.lane.b32.xlu0 %v768, 256
    %v771 = vpop.permute.xlu0 %770
    %s773 = sor.u32 256, 8
    %774 = vbcast.lane.b32.xlu0 %v768, %s773
    %v775 = vpop.permute.xlu0 %774
    %v776 = vlaneseq
    %v777 = vshrl.u32 %v776, 7
    %v778 = vsub.s32 4, %v777
    %v779 = vrot.slane %v433, %v778
    %781 = vbcast.lane.b32.xlu0 %v779, 256
    %v782 = vpop.permute.xlu0 %781
    %s784 = sor.u32 256, 8
    %785 = vbcast.lane.b32.xlu0 %v779, %s784
    %v786 = vpop.permute.xlu0 %785
    %v787 = vlaneseq
    %v788 = vshrl.u32 %v787, 7
    %v789 = vsub.s32 5, %v788
    %v790 = vrot.slane %v433, %v789
    %792 = vbcast.lane.b32.xlu0 %v790, 256
    %v793 = vpop.permute.xlu0 %792
    %s795 = sor.u32 256, 8
    %796 = vbcast.lane.b32.xlu0 %v790, %s795
    %v797 = vpop.permute.xlu0 %796
    %v798 = vlaneseq
    %v799 = vshrl.u32 %v798, 7
    %v800 = vsub.s32 6, %v799
    %v801 = vrot.slane %v433, %v800
    %803 = vbcast.lane.b32.xlu0 %v801, 256
    %v804 = vpop.permute.xlu0 %803
    %s806 = sor.u32 256, 8
    %807 = vbcast.lane.b32.xlu0 %v801, %s806
    %v808 = vpop.permute.xlu0 %807
    %v809 = vlaneseq
    %v810 = vshrl.u32 %v809, 7
    %v811 = vsub.s32 7, %v810
    %v812 = vrot.slane %v433, %v811
    %814 = vbcast.lane.b32.xlu0 %v812, 256
    %v815 = vpop.permute.xlu0 %814
    %s817 = sor.u32 256, 8
    %818 = vbcast.lane.b32.xlu0 %v812, %s817
    %v819 = vpop.permute.xlu0 %818
    %v820 = vlaneseq
    %v821 = vshrl.u32 %v820, 7
    %v822 = vsub.s32 0, %v821
    %v823 = vrot.slane %v434, %v822
    %825 = vbcast.lane.b32.xlu0 %v823, 256
    %v826 = vpop.permute.xlu0 %825
    %s828 = sor.u32 256, 8
    %829 = vbcast.lane.b32.xlu0 %v823, %s828
    %v830 = vpop.permute.xlu0 %829
    %v831 = vlaneseq
    %v832 = vshrl.u32 %v831, 7
    %v833 = vsub.s32 1, %v832
    %v834 = vrot.slane %v434, %v833
    %836 = vbcast.lane.b32.xlu0 %v834, 256
    %v837 = vpop.permute.xlu0 %836
    %s839 = sor.u32 256, 8
    %840 = vbcast.lane.b32.xlu0 %v834, %s839
    %v841 = vpop.permute.xlu0 %840
    %v842 = vlaneseq
    %v843 = vshrl.u32 %v842, 7
    %v844 = vsub.s32 2, %v843
    %v845 = vrot.slane %v434, %v844
    %847 = vbcast.lane.b32.xlu0 %v845, 256
    %v848 = vpop.permute.xlu0 %847
    %s850 = sor.u32 256, 8
    %851 = vbcast.lane.b32.xlu0 %v845, %s850
    %v852 = vpop.permute.xlu0 %851
    %v853 = vlaneseq
    %v854 = vshrl.u32 %v853, 7
    %v855 = vsub.s32 3, %v854
    %v856 = vrot.slane %v434, %v855
    %858 = vbcast.lane.b32.xlu0 %v856, 256
    %v859 = vpop.permute.xlu0 %858
    %s861 = sor.u32 256, 8
    %862 = vbcast.lane.b32.xlu0 %v856, %s861
    %v863 = vpop.permute.xlu0 %862
    %v864 = vlaneseq
    %v865 = vshrl.u32 %v864, 7
    %v866 = vsub.s32 4, %v865
    %v867 = vrot.slane %v434, %v866
    %869 = vbcast.lane.b32.xlu0 %v867, 256
    %v870 = vpop.permute.xlu0 %869
    %s872 = sor.u32 256, 8
    %873 = vbcast.lane.b32.xlu0 %v867, %s872
    %v874 = vpop.permute.xlu0 %873
    %v875 = vlaneseq
    %v876 = vshrl.u32 %v875, 7
    %v877 = vsub.s32 5, %v876
    %v878 = vrot.slane %v434, %v877
    %880 = vbcast.lane.b32.xlu0 %v878, 256
    %v881 = vpop.permute.xlu0 %880
    %s883 = sor.u32 256, 8
    %884 = vbcast.lane.b32.xlu0 %v878, %s883
    %v885 = vpop.permute.xlu0 %884
    %v886 = vlaneseq
    %v887 = vshrl.u32 %v886, 7
    %v888 = vsub.s32 6, %v887
    %v889 = vrot.slane %v434, %v888
    %891 = vbcast.lane.b32.xlu0 %v889, 256
    %v892 = vpop.permute.xlu0 %891
    %s894 = sor.u32 256, 8
    %895 = vbcast.lane.b32.xlu0 %v889, %s894
    %v896 = vpop.permute.xlu0 %895
    %v897 = vlaneseq
    %v898 = vshrl.u32 %v897, 7
    %v899 = vsub.s32 7, %v898
    %v900 = vrot.slane %v434, %v899
    %902 = vbcast.lane.b32.xlu0 %v900, 256
    %v903 = vpop.permute.xlu0 %902
    %s905 = sor.u32 256, 8
    %906 = vbcast.lane.b32.xlu0 %v900, %s905
    %v907 = vpop.permute.xlu0 %906
    %v908 = vlaneseq
    %v909 = vshrl.u32 %v908, 7
    %v910 = vsub.s32 0, %v909
    %v911 = vrot.slane %v435, %v910
    %913 = vbcast.lane.b32.xlu0 %v911, 256
    %v914 = vpop.permute.xlu0 %913
    %s916 = sor.u32 256, 8
    %917 = vbcast.lane.b32.xlu0 %v911, %s916
    %v918 = vpop.permute.xlu0 %917
    %v919 = vlaneseq
    %v920 = vshrl.u32 %v919, 7
    %v921 = vsub.s32 1, %v920
    %v922 = vrot.slane %v435, %v921
    %924 = vbcast.lane.b32.xlu0 %v922, 256
    %v925 = vpop.permute.xlu0 %924
    %s927 = sor.u32 256, 8
    %928 = vbcast.lane.b32.xlu0 %v922, %s927
    %v929 = vpop.permute.xlu0 %928
    %v930 = vlaneseq
    %v931 = vshrl.u32 %v930, 7
    %v932 = vsub.s32 2, %v931
    %v933 = vrot.slane %v435, %v932
    %935 = vbcast.lane.b32.xlu0 %v933, 256
    %v936 = vpop.permute.xlu0 %935
    %s938 = sor.u32 256, 8
    %939 = vbcast.lane.b32.xlu0 %v933, %s938
    %v940 = vpop.permute.xlu0 %939
    %v941 = vlaneseq
    %v942 = vshrl.u32 %v941, 7
    %v943 = vsub.s32 3, %v942
    %v944 = vrot.slane %v435, %v943
    %946 = vbcast.lane.b32.xlu0 %v944, 256
    %v947 = vpop.permute.xlu0 %946
    %s949 = sor.u32 256, 8
    %950 = vbcast.lane.b32.xlu0 %v944, %s949
    %v951 = vpop.permute.xlu0 %950
    %v952 = vlaneseq
    %v953 = vshrl.u32 %v952, 7
    %v954 = vsub.s32 4, %v953
    %v955 = vrot.slane %v435, %v954
    %957 = vbcast.lane.b32.xlu0 %v955, 256
    %v958 = vpop.permute.xlu0 %957
    %s960 = sor.u32 256, 8
    %961 = vbcast.lane.b32.xlu0 %v955, %s960
    %v962 = vpop.permute.xlu0 %961
    %v963 = vlaneseq
    %v964 = vshrl.u32 %v963, 7
    %v965 = vsub.s32 5, %v964
    %v966 = vrot.slane %v435, %v965
    %968 = vbcast.lane.b32.xlu0 %v966, 256
    %v969 = vpop.permute.xlu0 %968
    %s971 = sor.u32 256, 8
    %972 = vbcast.lane.b32.xlu0 %v966, %s971
    %v973 = vpop.permute.xlu0 %972
    %v974 = vlaneseq
    %v975 = vshrl.u32 %v974, 7
    %v976 = vsub.s32 6, %v975
    %v977 = vrot.slane %v435, %v976
    %979 = vbcast.lane.b32.xlu0 %v977, 256
    %v980 = vpop.permute.xlu0 %979
    %s982 = sor.u32 256, 8
    %983 = vbcast.lane.b32.xlu0 %v977, %s982
    %v984 = vpop.permute.xlu0 %983
    %v985 = vlaneseq
    %v986 = vshrl.u32 %v985, 7
    %v987 = vsub.s32 7, %v986
    %v988 = vrot.slane %v435, %v987
    %990 = vbcast.lane.b32.xlu0 %v988, 256
    %v991 = vpop.permute.xlu0 %990
    %s993 = sor.u32 256, 8
    %994 = vbcast.lane.b32.xlu0 %v988, %s993
    %v995 = vpop.permute.xlu0 %994
    %v996 = vlaneseq
    %v997 = vshrl.u32 %v996, 7
    %v998 = vsub.s32 0, %v997
    %v999 = vrot.slane %v436, %v998
    %1001 = vbcast.lane.b32.xlu0 %v999, 256
    %v1002 = vpop.permute.xlu0 %1001
    %s1004 = sor.u32 256, 8
    %1005 = vbcast.lane.b32.xlu0 %v999, %s1004
    %v1006 = vpop.permute.xlu0 %1005
    %v1007 = vlaneseq
    %v1008 = vshrl.u32 %v1007, 7
    %v1009 = vsub.s32 1, %v1008
    %v1010 = vrot.slane %v436, %v1009
    %1012 = vbcast.lane.b32.xlu0 %v1010, 256
    %v1013 = vpop.permute.xlu0 %1012
    %s1015 = sor.u32 256, 8
    %1016 = vbcast.lane.b32.xlu0 %v1010, %s1015
    %v1017 = vpop.permute.xlu0 %1016
    %v1018 = vlaneseq
    %v1019 = vshrl.u32 %v1018, 7
    %v1020 = vsub.s32 2, %v1019
    %v1021 = vrot.slane %v436, %v1020
    %1023 = vbcast.lane.b32.xlu0 %v1021, 256
    %v1024 = vpop.permute.xlu0 %1023
    %s1026 = sor.u32 256, 8
    %1027 = vbcast.lane.b32.xlu0 %v1021, %s1026
    %v1028 = vpop.permute.xlu0 %1027
    %v1029 = vlaneseq
    %v1030 = vshrl.u32 %v1029, 7
    %v1031 = vsub.s32 3, %v1030
    %v1032 = vrot.slane %v436, %v1031
    %1034 = vbcast.lane.b32.xlu0 %v1032, 256
    %v1035 = vpop.permute.xlu0 %1034
    %s1037 = sor.u32 256, 8
    %1038 = vbcast.lane.b32.xlu0 %v1032, %s1037
    %v1039 = vpop.permute.xlu0 %1038
    %v1040 = vlaneseq
    %v1041 = vshrl.u32 %v1040, 7
    %v1042 = vsub.s32 4, %v1041
    %v1043 = vrot.slane %v436, %v1042
    %1045 = vbcast.lane.b32.xlu0 %v1043, 256
    %v1046 = vpop.permute.xlu0 %1045
    %s1048 = sor.u32 256, 8
    %1049 = vbcast.lane.b32.xlu0 %v1043, %s1048
    %v1050 = vpop.permute.xlu0 %1049
    %v1051 = vlaneseq
    %v1052 = vshrl.u32 %v1051, 7
    %v1053 = vsub.s32 5, %v1052
    %v1054 = vrot.slane %v436, %v1053
    %1056 = vbcast.lane.b32.xlu0 %v1054, 256
    %v1057 = vpop.permute.xlu0 %1056
    %s1059 = sor.u32 256, 8
    %1060 = vbcast.lane.b32.xlu0 %v1054, %s1059
    %v1061 = vpop.permute.xlu0 %1060
    %v1062 = vlaneseq
    %v1063 = vshrl.u32 %v1062, 7
    %v1064 = vsub.s32 6, %v1063
    %v1065 = vrot.slane %v436, %v1064
    %1067 = vbcast.lane.b32.xlu0 %v1065, 256
    %v1068 = vpop.permute.xlu0 %1067
    %s1070 = sor.u32 256, 8
    %1071 = vbcast.lane.b32.xlu0 %v1065, %s1070
    %v1072 = vpop.permute.xlu0 %1071
    %v1073 = vlaneseq
    %v1074 = vshrl.u32 %v1073, 7
    %v1075 = vsub.s32 7, %v1074
    %v1076 = vrot.slane %v436, %v1075
    %1078 = vbcast.lane.b32.xlu0 %v1076, 256
    %v1079 = vpop.permute.xlu0 %1078
    %s1081 = sor.u32 256, 8
    %1082 = vbcast.lane.b32.xlu0 %v1076, %s1081
    %v1083 = vpop.permute.xlu0 %1082
    %v1084 = vlaneseq
    %v1085 = vshrl.u32 %v1084, 7
    %v1086 = vsub.s32 0, %v1085
    %v1087 = vrot.slane %v437, %v1086
    %1089 = vbcast.lane.b32.xlu0 %v1087, 256
    %v1090 = vpop.permute.xlu0 %1089
    %s1092 = sor.u32 256, 8
    %1093 = vbcast.lane.b32.xlu0 %v1087, %s1092
    %v1094 = vpop.permute.xlu0 %1093
    %v1095 = vlaneseq
    %v1096 = vshrl.u32 %v1095, 7
    %v1097 = vsub.s32 1, %v1096
    %v1098 = vrot.slane %v437, %v1097
    %1100 = vbcast.lane.b32.xlu0 %v1098, 256
    %v1101 = vpop.permute.xlu0 %1100
    %s1103 = sor.u32 256, 8
    %1104 = vbcast.lane.b32.xlu0 %v1098, %s1103
    %v1105 = vpop.permute.xlu0 %1104
    %v1106 = vlaneseq
    %v1107 = vshrl.u32 %v1106, 7
    %v1108 = vsub.s32 2, %v1107
    %v1109 = vrot.slane %v437, %v1108
    %1111 = vbcast.lane.b32.xlu0 %v1109, 256
    %v1112 = vpop.permute.xlu0 %1111
    %s1114 = sor.u32 256, 8
    %1115 = vbcast.lane.b32.xlu0 %v1109, %s1114
    %v1116 = vpop.permute.xlu0 %1115
    %v1117 = vlaneseq
    %v1118 = vshrl.u32 %v1117, 7
    %v1119 = vsub.s32 3, %v1118
    %v1120 = vrot.slane %v437, %v1119
    %1122 = vbcast.lane.b32.xlu0 %v1120, 256
    %v1123 = vpop.permute.xlu0 %1122
    %s1125 = sor.u32 256, 8
    %1126 = vbcast.lane.b32.xlu0 %v1120, %s1125
    %v1127 = vpop.permute.xlu0 %1126
    %v1128 = vlaneseq
    %v1129 = vshrl.u32 %v1128, 7
    %v1130 = vsub.s32 4, %v1129
    %v1131 = vrot.slane %v437, %v1130
    %1133 = vbcast.lane.b32.xlu0 %v1131, 256
    %v1134 = vpop.permute.xlu0 %1133
    %s1136 = sor.u32 256, 8
    %1137 = vbcast.lane.b32.xlu0 %v1131, %s1136
    %v1138 = vpop.permute.xlu0 %1137
    %v1139 = vlaneseq
    %v1140 = vshrl.u32 %v1139, 7
    %v1141 = vsub.s32 5, %v1140
    %v1142 = vrot.slane %v437, %v1141
    %1144 = vbcast.lane.b32.xlu0 %v1142, 256
    %v1145 = vpop.permute.xlu0 %1144
    %s1147 = sor.u32 256, 8
    %1148 = vbcast.lane.b32.xlu0 %v1142, %s1147
    %v1149 = vpop.permute.xlu0 %1148
    %v1150 = vlaneseq
    %v1151 = vshrl.u32 %v1150, 7
    %v1152 = vsub.s32 6, %v1151
    %v1153 = vrot.slane %v437, %v1152
    %1155 = vbcast.lane.b32.xlu0 %v1153, 256
    %v1156 = vpop.permute.xlu0 %1155
    %s1158 = sor.u32 256, 8
    %1159 = vbcast.lane.b32.xlu0 %v1153, %s1158
    %v1160 = vpop.permute.xlu0 %1159
    %v1161 = vlaneseq
    %v1162 = vshrl.u32 %v1161, 7
    %v1163 = vsub.s32 7, %v1162
    %v1164 = vrot.slane %v437, %v1163
    %1166 = vbcast.lane.b32.xlu0 %v1164, 256
    %v1167 = vpop.permute.xlu0 %1166
    %s1169 = sor.u32 256, 8
    %1170 = vbcast.lane.b32.xlu0 %v1164, %s1169
    %v1171 = vpop.permute.xlu0 %1170
    %v1172 = vlaneseq
    %v1173 = vshrl.u32 %v1172, 7
    %v1174 = vsub.s32 0, %v1173
    %v1175 = vrot.slane %v438, %v1174
    %1177 = vbcast.lane.b32.xlu0 %v1175, 256
    %v1178 = vpop.permute.xlu0 %1177
    %s1180 = sor.u32 256, 8
    %1181 = vbcast.lane.b32.xlu0 %v1175, %s1180
    %v1182 = vpop.permute.xlu0 %1181
    %v1183 = vlaneseq
    %v1184 = vshrl.u32 %v1183, 7
    %v1185 = vsub.s32 1, %v1184
    %v1186 = vrot.slane %v438, %v1185
    %1188 = vbcast.lane.b32.xlu0 %v1186, 256
    %v1189 = vpop.permute.xlu0 %1188
    %s1191 = sor.u32 256, 8
    %1192 = vbcast.lane.b32.xlu0 %v1186, %s1191
    %v1193 = vpop.permute.xlu0 %1192
    %v1194 = vlaneseq
    %v1195 = vshrl.u32 %v1194, 7
    %v1196 = vsub.s32 2, %v1195
    %v1197 = vrot.slane %v438, %v1196
    %1199 = vbcast.lane.b32.xlu0 %v1197, 256
    %v1200 = vpop.permute.xlu0 %1199
    %s1202 = sor.u32 256, 8
    %1203 = vbcast.lane.b32.xlu0 %v1197, %s1202
    %v1204 = vpop.permute.xlu0 %1203
    %v1205 = vlaneseq
    %v1206 = vshrl.u32 %v1205, 7
    %v1207 = vsub.s32 3, %v1206
    %v1208 = vrot.slane %v438, %v1207
    %1210 = vbcast.lane.b32.xlu0 %v1208, 256
    %v1211 = vpop.permute.xlu0 %1210
    %s1213 = sor.u32 256, 8
    %1214 = vbcast.lane.b32.xlu0 %v1208, %s1213
    %v1215 = vpop.permute.xlu0 %1214
    %v1216 = vlaneseq
    %v1217 = vshrl.u32 %v1216, 7
    %v1218 = vsub.s32 4, %v1217
    %v1219 = vrot.slane %v438, %v1218
    %1221 = vbcast.lane.b32.xlu0 %v1219, 256
    %v1222 = vpop.permute.xlu0 %1221
    %s1224 = sor.u32 256, 8
    %1225 = vbcast.lane.b32.xlu0 %v1219, %s1224
    %v1226 = vpop.permute.xlu0 %1225
    %v1227 = vlaneseq
    %v1228 = vshrl.u32 %v1227, 7
    %v1229 = vsub.s32 5, %v1228
    %v1230 = vrot.slane %v438, %v1229
    %1232 = vbcast.lane.b32.xlu0 %v1230, 256
    %v1233 = vpop.permute.xlu0 %1232
    %s1235 = sor.u32 256, 8
    %1236 = vbcast.lane.b32.xlu0 %v1230, %s1235
    %v1237 = vpop.permute.xlu0 %1236
    %v1238 = vlaneseq
    %v1239 = vshrl.u32 %v1238, 7
    %v1240 = vsub.s32 6, %v1239
    %v1241 = vrot.slane %v438, %v1240
    %1243 = vbcast.lane.b32.xlu0 %v1241, 256
    %v1244 = vpop.permute.xlu0 %1243
    %s1246 = sor.u32 256, 8
    %1247 = vbcast.lane.b32.xlu0 %v1241, %s1246
    %v1248 = vpop.permute.xlu0 %1247
    %v1249 = vlaneseq
    %v1250 = vshrl.u32 %v1249, 7
    %v1251 = vsub.s32 7, %v1250
    %v1252 = vrot.slane %v438, %v1251
    %1254 = vbcast.lane.b32.xlu0 %v1252, 256
    %v1255 = vpop.permute.xlu0 %1254
    %s1257 = sor.u32 256, 8
    %1258 = vbcast.lane.b32.xlu0 %v1252, %s1257
    %v1259 = vpop.permute.xlu0 %1258
    %v1260 = vlaneseq
    %v1261 = vshrl.u32 %v1260, 7
    %v1262 = vsub.s32 0, %v1261
    %v1263 = vrot.slane %v439, %v1262
    %1265 = vbcast.lane.b32.xlu0 %v1263, 256
    %v1266 = vpop.permute.xlu0 %1265
    %s1268 = sor.u32 256, 8
    %1269 = vbcast.lane.b32.xlu0 %v1263, %s1268
    %v1270 = vpop.permute.xlu0 %1269
    %v1271 = vlaneseq
    %v1272 = vshrl.u32 %v1271, 7
    %v1273 = vsub.s32 1, %v1272
    %v1274 = vrot.slane %v439, %v1273
    %1276 = vbcast.lane.b32.xlu0 %v1274, 256
    %v1277 = vpop.permute.xlu0 %1276
    %s1279 = sor.u32 256, 8
    %1280 = vbcast.lane.b32.xlu0 %v1274, %s1279
    %v1281 = vpop.permute.xlu0 %1280
    %v1282 = vlaneseq
    %v1283 = vshrl.u32 %v1282, 7
    %v1284 = vsub.s32 2, %v1283
    %v1285 = vrot.slane %v439, %v1284
    %1287 = vbcast.lane.b32.xlu0 %v1285, 256
    %v1288 = vpop.permute.xlu0 %1287
    %s1290 = sor.u32 256, 8
    %1291 = vbcast.lane.b32.xlu0 %v1285, %s1290
    %v1292 = vpop.permute.xlu0 %1291
    %v1293 = vlaneseq
    %v1294 = vshrl.u32 %v1293, 7
    %v1295 = vsub.s32 3, %v1294
    %v1296 = vrot.slane %v439, %v1295
    %1298 = vbcast.lane.b32.xlu0 %v1296, 256
    %v1299 = vpop.permute.xlu0 %1298
    %s1301 = sor.u32 256, 8
    %1302 = vbcast.lane.b32.xlu0 %v1296, %s1301
    %v1303 = vpop.permute.xlu0 %1302
    %v1304 = vlaneseq
    %v1305 = vshrl.u32 %v1304, 7
    %v1306 = vsub.s32 4, %v1305
    %v1307 = vrot.slane %v439, %v1306
    %1309 = vbcast.lane.b32.xlu0 %v1307, 256
    %v1310 = vpop.permute.xlu0 %1309
    %s1312 = sor.u32 256, 8
    %1313 = vbcast.lane.b32.xlu0 %v1307, %s1312
    %v1314 = vpop.permute.xlu0 %1313
    %v1315 = vlaneseq
    %v1316 = vshrl.u32 %v1315, 7
    %v1317 = vsub.s32 5, %v1316
    %v1318 = vrot.slane %v439, %v1317
    %1320 = vbcast.lane.b32.xlu0 %v1318, 256
    %v1321 = vpop.permute.xlu0 %1320
    %s1323 = sor.u32 256, 8
    %1324 = vbcast.lane.b32.xlu0 %v1318, %s1323
    %v1325 = vpop.permute.xlu0 %1324
    %v1326 = vlaneseq
    %v1327 = vshrl.u32 %v1326, 7
    %v1328 = vsub.s32 6, %v1327
    %v1329 = vrot.slane %v439, %v1328
    %1331 = vbcast.lane.b32.xlu0 %v1329, 256
    %v1332 = vpop.permute.xlu0 %1331
    %s1334 = sor.u32 256, 8
    %1335 = vbcast.lane.b32.xlu0 %v1329, %s1334
    %v1336 = vpop.permute.xlu0 %1335
    %v1337 = vlaneseq
    %v1338 = vshrl.u32 %v1337, 7
    %v1339 = vsub.s32 7, %v1338
    %v1340 = vrot.slane %v439, %v1339
    %1342 = vbcast.lane.b32.xlu0 %v1340, 256
    %v1343 = vpop.permute.xlu0 %1342
    %s1345 = sor.u32 256, 8
    %1346 = vbcast.lane.b32.xlu0 %v1340, %s1345
    %v1347 = vpop.permute.xlu0 %1346
    %vm1348 = vcmp.gt.f32.partialorder %v650, 0.0
    %vm1349 = vcmp.gt.f32.partialorder %v654, 0.0
    %vm1350 = vcmp.gt.f32.partialorder %v661, 0.0
    %vm1351 = vcmp.gt.f32.partialorder %v665, 0.0
    %vm1352 = vcmp.gt.f32.partialorder %v672, 0.0
    %vm1353 = vcmp.gt.f32.partialorder %v676, 0.0
    %vm1354 = vcmp.gt.f32.partialorder %v683, 0.0
    %vm1355 = vcmp.gt.f32.partialorder %v687, 0.0
    %vm1356 = vcmp.gt.f32.partialorder %v694, 0.0
    %vm1357 = vcmp.gt.f32.partialorder %v698, 0.0
    %vm1358 = vcmp.gt.f32.partialorder %v705, 0.0
    %vm1359 = vcmp.gt.f32.partialorder %v709, 0.0
    %vm1360 = vcmp.gt.f32.partialorder %v716, 0.0
    %vm1361 = vcmp.gt.f32.partialorder %v720, 0.0
    %vm1362 = vcmp.gt.f32.partialorder %v727, 0.0
    %vm1363 = vcmp.gt.f32.partialorder %v731, 0.0
    %vm1364 = vcmp.gt.f32.partialorder %v738, 0.0
    %vm1365 = vcmp.gt.f32.partialorder %v742, 0.0
    %vm1366 = vcmp.gt.f32.partialorder %v749, 0.0
    %vm1367 = vcmp.gt.f32.partialorder %v753, 0.0
    %vm1368 = vcmp.gt.f32.partialorder %v760, 0.0
    %vm1369 = vcmp.gt.f32.partialorder %v764, 0.0
    %vm1370 = vcmp.gt.f32.partialorder %v771, 0.0
    %vm1371 = vcmp.gt.f32.partialorder %v775, 0.0
    %vm1372 = vcmp.gt.f32.partialorder %v782, 0.0
    %vm1373 = vcmp.gt.f32.partialorder %v786, 0.0
    %vm1374 = vcmp.gt.f32.partialorder %v793, 0.0
    %vm1375 = vcmp.gt.f32.partialorder %v797, 0.0
    %vm1376 = vcmp.gt.f32.partialorder %v804, 0.0
    %vm1377 = vcmp.gt.f32.partialorder %v808, 0.0
    %vm1378 = vcmp.gt.f32.partialorder %v815, 0.0
    %vm1379 = vcmp.gt.f32.partialorder %v819, 0.0
    %vm1380 = vcmp.gt.f32.partialorder %v826, 0.0
    %vm1381 = vcmp.gt.f32.partialorder %v830, 0.0
    %vm1382 = vcmp.gt.f32.partialorder %v837, 0.0
    %vm1383 = vcmp.gt.f32.partialorder %v841, 0.0
    %vm1384 = vcmp.gt.f32.partialorder %v848, 0.0
    %vm1385 = vcmp.gt.f32.partialorder %v852, 0.0
    %vm1386 = vcmp.gt.f32.partialorder %v859, 0.0
    %vm1387 = vcmp.gt.f32.partialorder %v863, 0.0
    %vm1388 = vcmp.gt.f32.partialorder %v870, 0.0
    %vm1389 = vcmp.gt.f32.partialorder %v874, 0.0
    %vm1390 = vcmp.gt.f32.partialorder %v881, 0.0
    %vm1391 = vcmp.gt.f32.partialorder %v885, 0.0
    %vm1392 = vcmp.gt.f32.partialorder %v892, 0.0
    %vm1393 = vcmp.gt.f32.partialorder %v896, 0.0
    %vm1394 = vcmp.gt.f32.partialorder %v903, 0.0
    %vm1395 = vcmp.gt.f32.partialorder %v907, 0.0
    %vm1396 = vcmp.gt.f32.partialorder %v914, 0.0
    %vm1397 = vcmp.gt.f32.partialorder %v918, 0.0
    %vm1398 = vcmp.gt.f32.partialorder %v925, 0.0
    %vm1399 = vcmp.gt.f32.partialorder %v929, 0.0
    %vm1400 = vcmp.gt.f32.partialorder %v936, 0.0
    %vm1401 = vcmp.gt.f32.partialorder %v940, 0.0
    %vm1402 = vcmp.gt.f32.partialorder %v947, 0.0
    %vm1403 = vcmp.gt.f32.partialorder %v951, 0.0
    %vm1404 = vcmp.gt.f32.partialorder %v958, 0.0
    %vm1405 = vcmp.gt.f32.partialorder %v962, 0.0
    %vm1406 = vcmp.gt.f32.partialorder %v969, 0.0
    %vm1407 = vcmp.gt.f32.partialorder %v973, 0.0
    %vm1408 = vcmp.gt.f32.partialorder %v980, 0.0
    %vm1409 = vcmp.gt.f32.partialorder %v984, 0.0
    %vm1410 = vcmp.gt.f32.partialorder %v991, 0.0
    %vm1411 = vcmp.gt.f32.partialorder %v995, 0.0
    %vm1412 = vcmp.gt.f32.partialorder %v1002, 0.0
    %vm1413 = vcmp.gt.f32.partialorder %v1006, 0.0
    %vm1414 = vcmp.gt.f32.partialorder %v1013, 0.0
    %vm1415 = vcmp.gt.f32.partialorder %v1017, 0.0
    %vm1416 = vcmp.gt.f32.partialorder %v1024, 0.0
    %vm1417 = vcmp.gt.f32.partialorder %v1028, 0.0
    %vm1418 = vcmp.gt.f32.partialorder %v1035, 0.0
    %vm1419 = vcmp.gt.f32.partialorder %v1039, 0.0
    %vm1420 = vcmp.gt.f32.partialorder %v1046, 0.0
    %vm1421 = vcmp.gt.f32.partialorder %v1050, 0.0
    %vm1422 = vcmp.gt.f32.partialorder %v1057, 0.0
    %vm1423 = vcmp.gt.f32.partialorder %v1061, 0.0
    %vm1424 = vcmp.gt.f32.partialorder %v1068, 0.0
    %vm1425 = vcmp.gt.f32.partialorder %v1072, 0.0
    %vm1426 = vcmp.gt.f32.partialorder %v1079, 0.0
    %vm1427 = vcmp.gt.f32.partialorder %v1083, 0.0
    %vm1428 = vcmp.gt.f32.partialorder %v1090, 0.0
    %vm1429 = vcmp.gt.f32.partialorder %v1094, 0.0
    %vm1430 = vcmp.gt.f32.partialorder %v1101, 0.0
    %vm1431 = vcmp.gt.f32.partialorder %v1105, 0.0
    %vm1432 = vcmp.gt.f32.partialorder %v1112, 0.0
    %vm1433 = vcmp.gt.f32.partialorder %v1116, 0.0
    %vm1434 = vcmp.gt.f32.partialorder %v1123, 0.0
    %vm1435 = vcmp.gt.f32.partialorder %v1127, 0.0
    %vm1436 = vcmp.gt.f32.partialorder %v1134, 0.0
    %vm1437 = vcmp.gt.f32.partialorder %v1138, 0.0
    %vm1438 = vcmp.gt.f32.partialorder %v1145, 0.0
    %vm1439 = vcmp.gt.f32.partialorder %v1149, 0.0
    %vm1440 = vcmp.gt.f32.partialorder %v1156, 0.0
    %vm1441 = vcmp.gt.f32.partialorder %v1160, 0.0
    %vm1442 = vcmp.gt.f32.partialorder %v1167, 0.0
    %vm1443 = vcmp.gt.f32.partialorder %v1171, 0.0
    %vm1444 = vcmp.gt.f32.partialorder %v1178, 0.0
    %vm1445 = vcmp.gt.f32.partialorder %v1182, 0.0
    %vm1446 = vcmp.gt.f32.partialorder %v1189, 0.0
    %vm1447 = vcmp.gt.f32.partialorder %v1193, 0.0
    %vm1448 = vcmp.gt.f32.partialorder %v1200, 0.0
    %vm1449 = vcmp.gt.f32.partialorder %v1204, 0.0
    %vm1450 = vcmp.gt.f32.partialorder %v1211, 0.0
    %vm1451 = vcmp.gt.f32.partialorder %v1215, 0.0
    %vm1452 = vcmp.gt.f32.partialorder %v1222, 0.0
    %vm1453 = vcmp.gt.f32.partialorder %v1226, 0.0
    %vm1454 = vcmp.gt.f32.partialorder %v1233, 0.0
    %vm1455 = vcmp.gt.f32.partialorder %v1237, 0.0
    %vm1456 = vcmp.gt.f32.partialorder %v1244, 0.0
    %vm1457 = vcmp.gt.f32.partialorder %v1248, 0.0
    %vm1458 = vcmp.gt.f32.partialorder %v1255, 0.0
    %vm1459 = vcmp.gt.f32.partialorder %v1259, 0.0
    %vm1460 = vcmp.gt.f32.partialorder %v1266, 0.0
    %vm1461 = vcmp.gt.f32.partialorder %v1270, 0.0
    %vm1462 = vcmp.gt.f32.partialorder %v1277, 0.0
    %vm1463 = vcmp.gt.f32.partialorder %v1281, 0.0
    %vm1464 = vcmp.gt.f32.partialorder %v1288, 0.0
    %vm1465 = vcmp.gt.f32.partialorder %v1292, 0.0
    %vm1466 = vcmp.gt.f32.partialorder %v1299, 0.0
    %vm1467 = vcmp.gt.f32.partialorder %v1303, 0.0
    %vm1468 = vcmp.gt.f32.partialorder %v1310, 0.0
    %vm1469 = vcmp.gt.f32.partialorder %v1314, 0.0
    %vm1470 = vcmp.gt.f32.partialorder %v1321, 0.0
    %vm1471 = vcmp.gt.f32.partialorder %v1325, 0.0
    %vm1472 = vcmp.gt.f32.partialorder %v1332, 0.0
    %vm1473 = vcmp.gt.f32.partialorder %v1336, 0.0
    %vm1474 = vcmp.gt.f32.partialorder %v1343, 0.0
    %vm1475 = vcmp.gt.f32.partialorder %v1347, 0.0
    %v1484 = vcombine.high %v384, %v384
    %v1486 = vunpack.c.l.s4 1966171168
    %v1487 = vunpack.c.0.s8 %v1486
    %v1488 = vlaneseq
    %v1489 = vshrl.u32 %v1488, 7
    %v1490 = vsub.s32 %v1487, %v1489
    %v1491 = vrot.slane %v384, %v1490
    %v1493 = vunpack.c.l.s4 1966171168
    %v1494 = vunpack.c.0.s8 %v1493
    %v1495 = vlaneseq
    %v1496 = vshrl.u32 %v1495, 7
    %v1497 = vsub.s32 %v1494, %v1496
    %v1498 = vrot.slane %v1484, %v1497
    %v1499 = vcombine.high %v1491, %v1491
    %v1500 = vcombine.high %v1498, %v1498
    %v1502 = vunpack.c.l.s4 1966171168
    %v1503 = vunpack.c.0.s8 %v1502
    %v1504 = vlaneseq
    %v1505 = vshrl.u32 %v1504, 7
    %v1506 = vsub.s32 %v1503, %v1505
    %v1507 = vrot.slane %v1491, %v1506
    %v1509 = vunpack.c.l.s4 1966171168
    %v1510 = vunpack.c.0.s8 %v1509
    %v1511 = vlaneseq
    %v1512 = vshrl.u32 %v1511, 7
    %v1513 = vsub.s32 %v1510, %v1512
    %v1514 = vrot.slane %v1498, %v1513
    %v1516 = vunpack.c.l.s4 1966171168
    %v1517 = vunpack.c.0.s8 %v1516
    %v1518 = vlaneseq
    %v1519 = vshrl.u32 %v1518, 7
    %v1520 = vsub.s32 %v1517, %v1519
    %v1521 = vrot.slane %v1499, %v1520
    %v1523 = vunpack.c.l.s4 1966171168
    %v1524 = vunpack.c.0.s8 %v1523
    %v1525 = vlaneseq
    %v1526 = vshrl.u32 %v1525, 7
    %v1527 = vsub.s32 %v1524, %v1526
    %v1528 = vrot.slane %v1500, %v1527
    %v1529 = vcombine.high %v1507, %v1507
    %v1530 = vcombine.high %v1514, %v1514
    %v1531 = vcombine.high %v1521, %v1521
    %v1532 = vcombine.high %v1528, %v1528
    %v1533 = vcombine.high %v385, %v385
    %v1535 = vunpack.c.l.s4 1966171168
    %v1536 = vunpack.c.0.s8 %v1535
    %v1537 = vlaneseq
    %v1538 = vshrl.u32 %v1537, 7
    %v1539 = vsub.s32 %v1536, %v1538
    %v1540 = vrot.slane %v385, %v1539
    %v1542 = vunpack.c.l.s4 1966171168
    %v1543 = vunpack.c.0.s8 %v1542
    %v1544 = vlaneseq
    %v1545 = vshrl.u32 %v1544, 7
    %v1546 = vsub.s32 %v1543, %v1545
    %v1547 = vrot.slane %v1533, %v1546
    %v1548 = vcombine.high %v1540, %v1540
    %v1549 = vcombine.high %v1547, %v1547
    %v1551 = vunpack.c.l.s4 1966171168
    %v1552 = vunpack.c.0.s8 %v1551
    %v1553 = vlaneseq
    %v1554 = vshrl.u32 %v1553, 7
    %v1555 = vsub.s32 %v1552, %v1554
    %v1556 = vrot.slane %v1540, %v1555
    %v1558 = vunpack.c.l.s4 1966171168
    %v1559 = vunpack.c.0.s8 %v1558
    %v1560 = vlaneseq
    %v1561 = vshrl.u32 %v1560, 7
    %v1562 = vsub.s32 %v1559, %v1561
    %v1563 = vrot.slane %v1547, %v1562
    %v1565 = vunpack.c.l.s4 1966171168
    %v1566 = vunpack.c.0.s8 %v1565
    %v1567 = vlaneseq
    %v1568 = vshrl.u32 %v1567, 7
    %v1569 = vsub.s32 %v1566, %v1568
    %v1570 = vrot.slane %v1548, %v1569
    %v1572 = vunpack.c.l.s4 1966171168
    %v1573 = vunpack.c.0.s8 %v1572
    %v1574 = vlaneseq
    %v1575 = vshrl.u32 %v1574, 7
    %v1576 = vsub.s32 %v1573, %v1575
    %v1577 = vrot.slane %v1549, %v1576
    %v1578 = vcombine.high %v1556, %v1556
    %v1579 = vcombine.high %v1563, %v1563
    %v1580 = vcombine.high %v1570, %v1570
    %v1581 = vcombine.high %v1577, %v1577
    %v1582 = vcombine.high %v386, %v386
    %v1584 = vunpack.c.l.s4 1966171168
    %v1585 = vunpack.c.0.s8 %v1584
    %v1586 = vlaneseq
    %v1587 = vshrl.u32 %v1586, 7
    %v1588 = vsub.s32 %v1585, %v1587
    %v1589 = vrot.slane %v386, %v1588
    %v1591 = vunpack.c.l.s4 1966171168
    %v1592 = vunpack.c.0.s8 %v1591
    %v1593 = vlaneseq
    %v1594 = vshrl.u32 %v1593, 7
    %v1595 = vsub.s32 %v1592, %v1594
    %v1596 = vrot.slane %v1582, %v1595
    %v1597 = vcombine.high %v1589, %v1589
    %v1598 = vcombine.high %v1596, %v1596
    %v1600 = vunpack.c.l.s4 1966171168
    %v1601 = vunpack.c.0.s8 %v1600
    %v1602 = vlaneseq
    %v1603 = vshrl.u32 %v1602, 7
    %v1604 = vsub.s32 %v1601, %v1603
    %v1605 = vrot.slane %v1589, %v1604
    %v1607 = vunpack.c.l.s4 1966171168
    %v1608 = vunpack.c.0.s8 %v1607
    %v1609 = vlaneseq
    %v1610 = vshrl.u32 %v1609, 7
    %v1611 = vsub.s32 %v1608, %v1610
    %v1612 = vrot.slane %v1596, %v1611
    %v1614 = vunpack.c.l.s4 1966171168
    %v1615 = vunpack.c.0.s8 %v1614
    %v1616 = vlaneseq
    %v1617 = vshrl.u32 %v1616, 7
    %v1618 = vsub.s32 %v1615, %v1617
    %v1619 = vrot.slane %v1597, %v1618
    %v1621 = vunpack.c.l.s4 1966171168
    %v1622 = vunpack.c.0.s8 %v1621
    %v1623 = vlaneseq
    %v1624 = vshrl.u32 %v1623, 7
    %v1625 = vsub.s32 %v1622, %v1624
    %v1626 = vrot.slane %v1598, %v1625
    %v1627 = vcombine.high %v1605, %v1605
    %v1628 = vcombine.high %v1612, %v1612
    %v1629 = vcombine.high %v1619, %v1619
    %v1630 = vcombine.high %v1626, %v1626
    %v1631 = vcombine.high %v387, %v387
    %v1633 = vunpack.c.l.s4 1966171168
    %v1634 = vunpack.c.0.s8 %v1633
    %v1635 = vlaneseq
    %v1636 = vshrl.u32 %v1635, 7
    %v1637 = vsub.s32 %v1634, %v1636
    %v1638 = vrot.slane %v387, %v1637
    %v1640 = vunpack.c.l.s4 1966171168
    %v1641 = vunpack.c.0.s8 %v1640
    %v1642 = vlaneseq
    %v1643 = vshrl.u32 %v1642, 7
    %v1644 = vsub.s32 %v1641, %v1643
    %v1645 = vrot.slane %v1631, %v1644
    %v1646 = vcombine.high %v1638, %v1638
    %v1647 = vcombine.high %v1645, %v1645
    %v1649 = vunpack.c.l.s4 1966171168
    %v1650 = vunpack.c.0.s8 %v1649
    %v1651 = vlaneseq
    %v1652 = vshrl.u32 %v1651, 7
    %v1653 = vsub.s32 %v1650, %v1652
    %v1654 = vrot.slane %v1638, %v1653
    %v1656 = vunpack.c.l.s4 1966171168
    %v1657 = vunpack.c.0.s8 %v1656
    %v1658 = vlaneseq
    %v1659 = vshrl.u32 %v1658, 7
    %v1660 = vsub.s32 %v1657, %v1659
    %v1661 = vrot.slane %v1645, %v1660
    %v1663 = vunpack.c.l.s4 1966171168
    %v1664 = vunpack.c.0.s8 %v1663
    %v1665 = vlaneseq
    %v1666 = vshrl.u32 %v1665, 7
    %v1667 = vsub.s32 %v1664, %v1666
    %v1668 = vrot.slane %v1646, %v1667
    %v1670 = vunpack.c.l.s4 1966171168
    %v1671 = vunpack.c.0.s8 %v1670
    %v1672 = vlaneseq
    %v1673 = vshrl.u32 %v1672, 7
    %v1674 = vsub.s32 %v1671, %v1673
    %v1675 = vrot.slane %v1647, %v1674
    %v1676 = vcombine.high %v1654, %v1654
    %v1677 = vcombine.high %v1661, %v1661
    %v1678 = vcombine.high %v1668, %v1668
    %v1679 = vcombine.high %v1675, %v1675
    %v1680 = vcombine.high %v388, %v388
    %v1682 = vunpack.c.l.s4 1966171168
    %v1683 = vunpack.c.0.s8 %v1682
    %v1684 = vlaneseq
    %v1685 = vshrl.u32 %v1684, 7
    %v1686 = vsub.s32 %v1683, %v1685
    %v1687 = vrot.slane %v388, %v1686
    %v1689 = vunpack.c.l.s4 1966171168
    %v1690 = vunpack.c.0.s8 %v1689
    %v1691 = vlaneseq
    %v1692 = vshrl.u32 %v1691, 7
    %v1693 = vsub.s32 %v1690, %v1692
    %v1694 = vrot.slane %v1680, %v1693
    %v1695 = vcombine.high %v1687, %v1687
    %v1696 = vcombine.high %v1694, %v1694
    %v1698 = vunpack.c.l.s4 1966171168
    %v1699 = vunpack.c.0.s8 %v1698
    %v1700 = vlaneseq
    %v1701 = vshrl.u32 %v1700, 7
    %v1702 = vsub.s32 %v1699, %v1701
    %v1703 = vrot.slane %v1687, %v1702
    %v1705 = vunpack.c.l.s4 1966171168
    %v1706 = vunpack.c.0.s8 %v1705
    %v1707 = vlaneseq
    %v1708 = vshrl.u32 %v1707, 7
    %v1709 = vsub.s32 %v1706, %v1708
    %v1710 = vrot.slane %v1694, %v1709
    %v1712 = vunpack.c.l.s4 1966171168
    %v1713 = vunpack.c.0.s8 %v1712
    %v1714 = vlaneseq
    %v1715 = vshrl.u32 %v1714, 7
    %v1716 = vsub.s32 %v1713, %v1715
    %v1717 = vrot.slane %v1695, %v1716
    %v1719 = vunpack.c.l.s4 1966171168
    %v1720 = vunpack.c.0.s8 %v1719
    %v1721 = vlaneseq
    %v1722 = vshrl.u32 %v1721, 7
    %v1723 = vsub.s32 %v1720, %v1722
    %v1724 = vrot.slane %v1696, %v1723
    %v1725 = vcombine.high %v1703, %v1703
    %v1726 = vcombine.high %v1710, %v1710
    %v1727 = vcombine.high %v1717, %v1717
    %v1728 = vcombine.high %v1724, %v1724
    %v1729 = vcombine.high %v389, %v389
    %v1731 = vunpack.c.l.s4 1966171168
    %v1732 = vunpack.c.0.s8 %v1731
    %v1733 = vlaneseq
    %v1734 = vshrl.u32 %v1733, 7
    %v1735 = vsub.s32 %v1732, %v1734
    %v1736 = vrot.slane %v389, %v1735
    %v1738 = vunpack.c.l.s4 1966171168
    %v1739 = vunpack.c.0.s8 %v1738
    %v1740 = vlaneseq
    %v1741 = vshrl.u32 %v1740, 7
    %v1742 = vsub.s32 %v1739, %v1741
    %v1743 = vrot.slane %v1729, %v1742
    %v1744 = vcombine.high %v1736, %v1736
    %v1745 = vcombine.high %v1743, %v1743
    %v1747 = vunpack.c.l.s4 1966171168
    %v1748 = vunpack.c.0.s8 %v1747
    %v1749 = vlaneseq
    %v1750 = vshrl.u32 %v1749, 7
    %v1751 = vsub.s32 %v1748, %v1750
    %v1752 = vrot.slane %v1736, %v1751
    %v1754 = vunpack.c.l.s4 1966171168
    %v1755 = vunpack.c.0.s8 %v1754
    %v1756 = vlaneseq
    %v1757 = vshrl.u32 %v1756, 7
    %v1758 = vsub.s32 %v1755, %v1757
    %v1759 = vrot.slane %v1743, %v1758
    %v1761 = vunpack.c.l.s4 1966171168
    %v1762 = vunpack.c.0.s8 %v1761
    %v1763 = vlaneseq
    %v1764 = vshrl.u32 %v1763, 7
    %v1765 = vsub.s32 %v1762, %v1764
    %v1766 = vrot.slane %v1744, %v1765
    %v1768 = vunpack.c.l.s4 1966171168
    %v1769 = vunpack.c.0.s8 %v1768
    %v1770 = vlaneseq
    %v1771 = vshrl.u32 %v1770, 7
    %v1772 = vsub.s32 %v1769, %v1771
    %v1773 = vrot.slane %v1745, %v1772
    %v1774 = vcombine.high %v1752, %v1752
    %v1775 = vcombine.high %v1759, %v1759
    %v1776 = vcombine.high %v1766, %v1766
    %v1777 = vcombine.high %v1773, %v1773
    %v1778 = vcombine.high %v390, %v390
    %v1780 = vunpack.c.l.s4 1966171168
    %v1781 = vunpack.c.0.s8 %v1780
    %v1782 = vlaneseq
    %v1783 = vshrl.u32 %v1782, 7
    %v1784 = vsub.s32 %v1781, %v1783
    %v1785 = vrot.slane %v390, %v1784
    %v1787 = vunpack.c.l.s4 1966171168
    %v1788 = vunpack.c.0.s8 %v1787
    %v1789 = vlaneseq
    %v1790 = vshrl.u32 %v1789, 7
    %v1791 = vsub.s32 %v1788, %v1790
    %v1792 = vrot.slane %v1778, %v1791
    %v1793 = vcombine.high %v1785, %v1785
    %v1794 = vcombine.high %v1792, %v1792
    %v1796 = vunpack.c.l.s4 1966171168
    %v1797 = vunpack.c.0.s8 %v1796
    %v1798 = vlaneseq
    %v1799 = vshrl.u32 %v1798, 7
    %v1800 = vsub.s32 %v1797, %v1799
    %v1801 = vrot.slane %v1785, %v1800
    %v1803 = vunpack.c.l.s4 1966171168
    %v1804 = vunpack.c.0.s8 %v1803
    %v1805 = vlaneseq
    %v1806 = vshrl.u32 %v1805, 7
    %v1807 = vsub.s32 %v1804, %v1806
    %v1808 = vrot.slane %v1792, %v1807
    %v1810 = vunpack.c.l.s4 1966171168
    %v1811 = vunpack.c.0.s8 %v1810
    %v1812 = vlaneseq
    %v1813 = vshrl.u32 %v1812, 7
    %v1814 = vsub.s32 %v1811, %v1813
    %v1815 = vrot.slane %v1793, %v1814
    %v1817 = vunpack.c.l.s4 1966171168
    %v1818 = vunpack.c.0.s8 %v1817
    %v1819 = vlaneseq
    %v1820 = vshrl.u32 %v1819, 7
    %v1821 = vsub.s32 %v1818, %v1820
    %v1822 = vrot.slane %v1794, %v1821
    %v1823 = vcombine.high %v1801, %v1801
    %v1824 = vcombine.high %v1808, %v1808
    %v1825 = vcombine.high %v1815, %v1815
    %v1826 = vcombine.high %v1822, %v1822
    %v1827 = vcombine.high %v391, %v391
    %v1829 = vunpack.c.l.s4 1966171168
    %v1830 = vunpack.c.0.s8 %v1829
    %v1831 = vlaneseq
    %v1832 = vshrl.u32 %v1831, 7
    %v1833 = vsub.s32 %v1830, %v1832
    %v1834 = vrot.slane %v391, %v1833
    %v1836 = vunpack.c.l.s4 1966171168
    %v1837 = vunpack.c.0.s8 %v1836
    %v1838 = vlaneseq
    %v1839 = vshrl.u32 %v1838, 7
    %v1840 = vsub.s32 %v1837, %v1839
    %v1841 = vrot.slane %v1827, %v1840
    %v1842 = vcombine.high %v1834, %v1834
    %v1843 = vcombine.high %v1841, %v1841
    %v1845 = vunpack.c.l.s4 1966171168
    %v1846 = vunpack.c.0.s8 %v1845
    %v1847 = vlaneseq
    %v1848 = vshrl.u32 %v1847, 7
    %v1849 = vsub.s32 %v1846, %v1848
    %v1850 = vrot.slane %v1834, %v1849
    %v1852 = vunpack.c.l.s4 1966171168
    %v1853 = vunpack.c.0.s8 %v1852
    %v1854 = vlaneseq
    %v1855 = vshrl.u32 %v1854, 7
    %v1856 = vsub.s32 %v1853, %v1855
    %v1857 = vrot.slane %v1841, %v1856
    %v1859 = vunpack.c.l.s4 1966171168
    %v1860 = vunpack.c.0.s8 %v1859
    %v1861 = vlaneseq
    %v1862 = vshrl.u32 %v1861, 7
    %v1863 = vsub.s32 %v1860, %v1862
    %v1864 = vrot.slane %v1842, %v1863
    %v1866 = vunpack.c.l.s4 1966171168
    %v1867 = vunpack.c.0.s8 %v1866
    %v1868 = vlaneseq
    %v1869 = vshrl.u32 %v1868, 7
    %v1870 = vsub.s32 %v1867, %v1869
    %v1871 = vrot.slane %v1843, %v1870
    %v1872 = vcombine.high %v1850, %v1850
    %v1873 = vcombine.high %v1857, %v1857
    %v1874 = vcombine.high %v1864, %v1864
    %v1875 = vcombine.high %v1871, %v1871
    %v1876 = vsel %vm1348, 1, 0
    %v1877 = vsel %vm1349, 1, 0
    %v1878 = vsel %vm1350, 1, 0
    %v1879 = vsel %vm1351, 1, 0
    %v1880 = vsel %vm1352, 1, 0
    %v1881 = vsel %vm1353, 1, 0
    %v1882 = vsel %vm1354, 1, 0
    %v1883 = vsel %vm1355, 1, 0
    %v1884 = vsel %vm1356, 1, 0
    %v1885 = vsel %vm1357, 1, 0
    %v1886 = vsel %vm1358, 1, 0
    %v1887 = vsel %vm1359, 1, 0
    %v1888 = vsel %vm1360, 1, 0
    %v1889 = vsel %vm1361, 1, 0
    %v1890 = vsel %vm1362, 1, 0
    %v1891 = vsel %vm1363, 1, 0
    %v1892 = vsel %vm1364, 1, 0
    %v1893 = vsel %vm1365, 1, 0
    %v1894 = vsel %vm1366, 1, 0
    %v1895 = vsel %vm1367, 1, 0
    %v1896 = vsel %vm1368, 1, 0
    %v1897 = vsel %vm1369, 1, 0
    %v1898 = vsel %vm1370, 1, 0
    %v1899 = vsel %vm1371, 1, 0
    %v1900 = vsel %vm1372, 1, 0
    %v1901 = vsel %vm1373, 1, 0
    %v1902 = vsel %vm1374, 1, 0
    %v1903 = vsel %vm1375, 1, 0
    %v1904 = vsel %vm1376, 1, 0
    %v1905 = vsel %vm1377, 1, 0
    %v1906 = vsel %vm1378, 1, 0
    %v1907 = vsel %vm1379, 1, 0
    %v1908 = vsel %vm1380, 1, 0
    %v1909 = vsel %vm1381, 1, 0
    %v1910 = vsel %vm1382, 1, 0
    %v1911 = vsel %vm1383, 1, 0
    %v1912 = vsel %vm1384, 1, 0
    %v1913 = vsel %vm1385, 1, 0
    %v1914 = vsel %vm1386, 1, 0
    %v1915 = vsel %vm1387, 1, 0
    %v1916 = vsel %vm1388, 1, 0
    %v1917 = vsel %vm1389, 1, 0
    %v1918 = vsel %vm1390, 1, 0
    %v1919 = vsel %vm1391, 1, 0
    %v1920 = vsel %vm1392, 1, 0
    %v1921 = vsel %vm1393, 1, 0
    %v1922 = vsel %vm1394, 1, 0
    %v1923 = vsel %vm1395, 1, 0
    %v1924 = vsel %vm1396, 1, 0
    %v1925 = vsel %vm1397, 1, 0
    %v1926 = vsel %vm1398, 1, 0
    %v1927 = vsel %vm1399, 1, 0
    %v1928 = vsel %vm1400, 1, 0
    %v1929 = vsel %vm1401, 1, 0
    %v1930 = vsel %vm1402, 1, 0
    %v1931 = vsel %vm1403, 1, 0
    %v1932 = vsel %vm1404, 1, 0
    %v1933 = vsel %vm1405, 1, 0
    %v1934 = vsel %vm1406, 1, 0
    %v1935 = vsel %vm1407, 1, 0
    %v1936 = vsel %vm1408, 1, 0
    %v1937 = vsel %vm1409, 1, 0
    %v1938 = vsel %vm1410, 1, 0
    %v1939 = vsel %vm1411, 1, 0
    %v1940 = vsel %vm1412, 1, 0
    %v1941 = vsel %vm1413, 1, 0
    %v1942 = vsel %vm1414, 1, 0
    %v1943 = vsel %vm1415, 1, 0
    %v1944 = vsel %vm1416, 1, 0
    %v1945 = vsel %vm1417, 1, 0
    %v1946 = vsel %vm1418, 1, 0
    %v1947 = vsel %vm1419, 1, 0
    %v1948 = vsel %vm1420, 1, 0
    %v1949 = vsel %vm1421, 1, 0
    %v1950 = vsel %vm1422, 1, 0
    %v1951 = vsel %vm1423, 1, 0
    %v1952 = vsel %vm1424, 1, 0
    %v1953 = vsel %vm1425, 1, 0
    %v1954 = vsel %vm1426, 1, 0
    %v1955 = vsel %vm1427, 1, 0
    %v1956 = vsel %vm1428, 1, 0
    %v1957 = vsel %vm1429, 1, 0
    %v1958 = vsel %vm1430, 1, 0
    %v1959 = vsel %vm1431, 1, 0
    %v1960 = vsel %vm1432, 1, 0
    %v1961 = vsel %vm1433, 1, 0
    %v1962 = vsel %vm1434, 1, 0
    %v1963 = vsel %vm1435, 1, 0
    %v1964 = vsel %vm1436, 1, 0
    %v1965 = vsel %vm1437, 1, 0
    %v1966 = vsel %vm1438, 1, 0
    %v1967 = vsel %vm1439, 1, 0
    %v1968 = vsel %vm1440, 1, 0
    %v1969 = vsel %vm1441, 1, 0
    %v1970 = vsel %vm1442, 1, 0
    %v1971 = vsel %vm1443, 1, 0
    %v1972 = vsel %vm1444, 1, 0
    %v1973 = vsel %vm1445, 1, 0
    %v1974 = vsel %vm1446, 1, 0
    %v1975 = vsel %vm1447, 1, 0
    %v1976 = vsel %vm1448, 1, 0
    %v1977 = vsel %vm1449, 1, 0
    %v1978 = vsel %vm1450, 1, 0
    %v1979 = vsel %vm1451, 1, 0
    %v1980 = vsel %vm1452, 1, 0
    %v1981 = vsel %vm1453, 1, 0
    %v1982 = vsel %vm1454, 1, 0
    %v1983 = vsel %vm1455, 1, 0
    %v1984 = vsel %vm1456, 1, 0
    %v1985 = vsel %vm1457, 1, 0
    %v1986 = vsel %vm1458, 1, 0
    %v1987 = vsel %vm1459, 1, 0
    %v1988 = vsel %vm1460, 1, 0
    %v1989 = vsel %vm1461, 1, 0
    %v1990 = vsel %vm1462, 1, 0
    %v1991 = vsel %vm1463, 1, 0
    %v1992 = vsel %vm1464, 1, 0
    %v1993 = vsel %vm1465, 1, 0
    %v1994 = vsel %vm1466, 1, 0
    %v1995 = vsel %vm1467, 1, 0
    %v1996 = vsel %vm1468, 1, 0
    %v1997 = vsel %vm1469, 1, 0
    %v1998 = vsel %vm1470, 1, 0
    %v1999 = vsel %vm1471, 1, 0
    %v2000 = vsel %vm1472, 1, 0
    %v2001 = vsel %vm1473, 1, 0
    %v2002 = vsel %vm1474, 1, 0
    %v2003 = vsel %vm1475, 1, 0
    %vm2004 = vcmp.eq.s32.totalorder %v1876, 1
    %vm2005 = vcmp.eq.s32.totalorder %v1877, 1
    %vm2006 = vcmp.eq.s32.totalorder %v1878, 1
    %vm2007 = vcmp.eq.s32.totalorder %v1879, 1
    %vm2008 = vcmp.eq.s32.totalorder %v1880, 1
    %vm2009 = vcmp.eq.s32.totalorder %v1881, 1
    %vm2010 = vcmp.eq.s32.totalorder %v1882, 1
    %vm2011 = vcmp.eq.s32.totalorder %v1883, 1
    %vm2012 = vcmp.eq.s32.totalorder %v1884, 1
    %vm2013 = vcmp.eq.s32.totalorder %v1885, 1
    %vm2014 = vcmp.eq.s32.totalorder %v1886, 1
    %vm2015 = vcmp.eq.s32.totalorder %v1887, 1
    %vm2016 = vcmp.eq.s32.totalorder %v1888, 1
    %vm2017 = vcmp.eq.s32.totalorder %v1889, 1
    %vm2018 = vcmp.eq.s32.totalorder %v1890, 1
    %vm2019 = vcmp.eq.s32.totalorder %v1891, 1
    %vm2020 = vcmp.eq.s32.totalorder %v1892, 1
    %vm2021 = vcmp.eq.s32.totalorder %v1893, 1
    %vm2022 = vcmp.eq.s32.totalorder %v1894, 1
    %vm2023 = vcmp.eq.s32.totalorder %v1895, 1
    %vm2024 = vcmp.eq.s32.totalorder %v1896, 1
    %vm2025 = vcmp.eq.s32.totalorder %v1897, 1
    %vm2026 = vcmp.eq.s32.totalorder %v1898, 1
    %vm2027 = vcmp.eq.s32.totalorder %v1899, 1
    %vm2028 = vcmp.eq.s32.totalorder %v1900, 1
    %vm2029 = vcmp.eq.s32.totalorder %v1901, 1
    %vm2030 = vcmp.eq.s32.totalorder %v1902, 1
    %vm2031 = vcmp.eq.s32.totalorder %v1903, 1
    %vm2032 = vcmp.eq.s32.totalorder %v1904, 1
    %vm2033 = vcmp.eq.s32.totalorder %v1905, 1
    %vm2034 = vcmp.eq.s32.totalorder %v1906, 1
    %vm2035 = vcmp.eq.s32.totalorder %v1907, 1
    %vm2036 = vcmp.eq.s32.totalorder %v1908, 1
    %vm2037 = vcmp.eq.s32.totalorder %v1909, 1
    %vm2038 = vcmp.eq.s32.totalorder %v1910, 1
    %vm2039 = vcmp.eq.s32.totalorder %v1911, 1
    %vm2040 = vcmp.eq.s32.totalorder %v1912, 1
    %vm2041 = vcmp.eq.s32.totalorder %v1913, 1
    %vm2042 = vcmp.eq.s32.totalorder %v1914, 1
    %vm2043 = vcmp.eq.s32.totalorder %v1915, 1
    %vm2044 = vcmp.eq.s32.totalorder %v1916, 1
    %vm2045 = vcmp.eq.s32.totalorder %v1917, 1
    %vm2046 = vcmp.eq.s32.totalorder %v1918, 1
    %vm2047 = vcmp.eq.s32.totalorder %v1919, 1
    %vm2048 = vcmp.eq.s32.totalorder %v1920, 1
    %vm2049 = vcmp.eq.s32.totalorder %v1921, 1
    %vm2050 = vcmp.eq.s32.totalorder %v1922, 1
    %vm2051 = vcmp.eq.s32.totalorder %v1923, 1
    %vm2052 = vcmp.eq.s32.totalorder %v1924, 1
    %vm2053 = vcmp.eq.s32.totalorder %v1925, 1
    %vm2054 = vcmp.eq.s32.totalorder %v1926, 1
    %vm2055 = vcmp.eq.s32.totalorder %v1927, 1
    %vm2056 = vcmp.eq.s32.totalorder %v1928, 1
    %vm2057 = vcmp.eq.s32.totalorder %v1929, 1
    %vm2058 = vcmp.eq.s32.totalorder %v1930, 1
    %vm2059 = vcmp.eq.s32.totalorder %v1931, 1
    %vm2060 = vcmp.eq.s32.totalorder %v1932, 1
    %vm2061 = vcmp.eq.s32.totalorder %v1933, 1
    %vm2062 = vcmp.eq.s32.totalorder %v1934, 1
    %vm2063 = vcmp.eq.s32.totalorder %v1935, 1
    %vm2064 = vcmp.eq.s32.totalorder %v1936, 1
    %vm2065 = vcmp.eq.s32.totalorder %v1937, 1
    %vm2066 = vcmp.eq.s32.totalorder %v1938, 1
    %vm2067 = vcmp.eq.s32.totalorder %v1939, 1
    %vm2068 = vcmp.eq.s32.totalorder %v1940, 1
    %vm2069 = vcmp.eq.s32.totalorder %v1941, 1
    %vm2070 = vcmp.eq.s32.totalorder %v1942, 1
    %vm2071 = vcmp.eq.s32.totalorder %v1943, 1
    %vm2072 = vcmp.eq.s32.totalorder %v1944, 1
    %vm2073 = vcmp.eq.s32.totalorder %v1945, 1
    %vm2074 = vcmp.eq.s32.totalorder %v1946, 1
    %vm2075 = vcmp.eq.s32.totalorder %v1947, 1
    %vm2076 = vcmp.eq.s32.totalorder %v1948, 1
    %vm2077 = vcmp.eq.s32.totalorder %v1949, 1
    %vm2078 = vcmp.eq.s32.totalorder %v1950, 1
    %vm2079 = vcmp.eq.s32.totalorder %v1951, 1
    %vm2080 = vcmp.eq.s32.totalorder %v1952, 1
    %vm2081 = vcmp.eq.s32.totalorder %v1953, 1
    %vm2082 = vcmp.eq.s32.totalorder %v1954, 1
    %vm2083 = vcmp.eq.s32.totalorder %v1955, 1
    %vm2084 = vcmp.eq.s32.totalorder %v1956, 1
    %vm2085 = vcmp.eq.s32.totalorder %v1957, 1
    %vm2086 = vcmp.eq.s32.totalorder %v1958, 1
    %vm2087 = vcmp.eq.s32.totalorder %v1959, 1
    %vm2088 = vcmp.eq.s32.totalorder %v1960, 1
    %vm2089 = vcmp.eq.s32.totalorder %v1961, 1
    %vm2090 = vcmp.eq.s32.totalorder %v1962, 1
    %vm2091 = vcmp.eq.s32.totalorder %v1963, 1
    %vm2092 = vcmp.eq.s32.totalorder %v1964, 1
    %vm2093 = vcmp.eq.s32.totalorder %v1965, 1
    %vm2094 = vcmp.eq.s32.totalorder %v1966, 1
    %vm2095 = vcmp.eq.s32.totalorder %v1967, 1
    %vm2096 = vcmp.eq.s32.totalorder %v1968, 1
    %vm2097 = vcmp.eq.s32.totalorder %v1969, 1
    %vm2098 = vcmp.eq.s32.totalorder %v1970, 1
    %vm2099 = vcmp.eq.s32.totalorder %v1971, 1
    %vm2100 = vcmp.eq.s32.totalorder %v1972, 1
    %vm2101 = vcmp.eq.s32.totalorder %v1973, 1
    %vm2102 = vcmp.eq.s32.totalorder %v1974, 1
    %vm2103 = vcmp.eq.s32.totalorder %v1975, 1
    %vm2104 = vcmp.eq.s32.totalorder %v1976, 1
    %vm2105 = vcmp.eq.s32.totalorder %v1977, 1
    %vm2106 = vcmp.eq.s32.totalorder %v1978, 1
    %vm2107 = vcmp.eq.s32.totalorder %v1979, 1
    %vm2108 = vcmp.eq.s32.totalorder %v1980, 1
    %vm2109 = vcmp.eq.s32.totalorder %v1981, 1
    %vm2110 = vcmp.eq.s32.totalorder %v1982, 1
    %vm2111 = vcmp.eq.s32.totalorder %v1983, 1
    %vm2112 = vcmp.eq.s32.totalorder %v1984, 1
    %vm2113 = vcmp.eq.s32.totalorder %v1985, 1
    %vm2114 = vcmp.eq.s32.totalorder %v1986, 1
    %vm2115 = vcmp.eq.s32.totalorder %v1987, 1
    %vm2116 = vcmp.eq.s32.totalorder %v1988, 1
    %vm2117 = vcmp.eq.s32.totalorder %v1989, 1
    %vm2118 = vcmp.eq.s32.totalorder %v1990, 1
    %vm2119 = vcmp.eq.s32.totalorder %v1991, 1
    %vm2120 = vcmp.eq.s32.totalorder %v1992, 1
    %vm2121 = vcmp.eq.s32.totalorder %v1993, 1
    %vm2122 = vcmp.eq.s32.totalorder %v1994, 1
    %vm2123 = vcmp.eq.s32.totalorder %v1995, 1
    %vm2124 = vcmp.eq.s32.totalorder %v1996, 1
    %vm2125 = vcmp.eq.s32.totalorder %v1997, 1
    %vm2126 = vcmp.eq.s32.totalorder %v1998, 1
    %vm2127 = vcmp.eq.s32.totalorder %v1999, 1
    %vm2128 = vcmp.eq.s32.totalorder %v2000, 1
    %vm2129 = vcmp.eq.s32.totalorder %v2001, 1
    %vm2130 = vcmp.eq.s32.totalorder %v2002, 1
    %vm2131 = vcmp.eq.s32.totalorder %v2003, 1
    %v2132 = vlaneseq
    %v2133 = vshrl.u32 %v2132, 7
    %v2134 = vsub.s32 0, %v2133
    %v2135 = vrot.slane %v1507, %v2134
    %v2136 = vlaneseq
    %v2137 = vshrl.u32 %v2136, 7
    %v2138 = vsub.s32 0, %v2137
    %v2139 = vrot.slane %v1521, %v2138
    %v2140 = vlaneseq
    %v2141 = vshrl.u32 %v2140, 7
    %v2142 = vsub.s32 0, %v2141
    %v2143 = vrot.slane %v1529, %v2142
    %v2144 = vlaneseq
    %v2145 = vshrl.u32 %v2144, 7
    %v2146 = vsub.s32 0, %v2145
    %v2147 = vrot.slane %v1531, %v2146
    %v2148 = vlaneseq
    %v2149 = vshrl.u32 %v2148, 7
    %v2150 = vsub.s32 0, %v2149
    %v2151 = vrot.slane %v1514, %v2150
    %v2152 = vlaneseq
    %v2153 = vshrl.u32 %v2152, 7
    %v2154 = vsub.s32 0, %v2153
    %v2155 = vrot.slane %v1528, %v2154
    %v2156 = vlaneseq
    %v2157 = vshrl.u32 %v2156, 7
    %v2158 = vsub.s32 0, %v2157
    %v2159 = vrot.slane %v1530, %v2158
    %v2160 = vlaneseq
    %v2161 = vshrl.u32 %v2160, 7
    %v2162 = vsub.s32 0, %v2161
    %v2163 = vrot.slane %v1532, %v2162
    %v2164 = vlaneseq
    %v2165 = vshrl.u32 %v2164, 7
    %v2166 = vsub.s32 0, %v2165
    %v2167 = vrot.slane %v1556, %v2166
    %v2168 = vlaneseq
    %v2169 = vshrl.u32 %v2168, 7
    %v2170 = vsub.s32 0, %v2169
    %v2171 = vrot.slane %v1570, %v2170
    %v2172 = vlaneseq
    %v2173 = vshrl.u32 %v2172, 7
    %v2174 = vsub.s32 0, %v2173
    %v2175 = vrot.slane %v1578, %v2174
    %v2176 = vlaneseq
    %v2177 = vshrl.u32 %v2176, 7
    %v2178 = vsub.s32 0, %v2177
    %v2179 = vrot.slane %v1580, %v2178
    %v2180 = vlaneseq
    %v2181 = vshrl.u32 %v2180, 7
    %v2182 = vsub.s32 0, %v2181
    %v2183 = vrot.slane %v1563, %v2182
    %v2184 = vlaneseq
    %v2185 = vshrl.u32 %v2184, 7
    %v2186 = vsub.s32 0, %v2185
    %v2187 = vrot.slane %v1577, %v2186
    %v2188 = vlaneseq
    %v2189 = vshrl.u32 %v2188, 7
    %v2190 = vsub.s32 0, %v2189
    %v2191 = vrot.slane %v1579, %v2190
    %v2192 = vlaneseq
    %v2193 = vshrl.u32 %v2192, 7
    %v2194 = vsub.s32 0, %v2193
    %v2195 = vrot.slane %v1581, %v2194
    %v2196 = vlaneseq
    %v2197 = vshrl.u32 %v2196, 7
    %v2198 = vsub.s32 0, %v2197
    %v2199 = vrot.slane %v1605, %v2198
    %v2200 = vlaneseq
    %v2201 = vshrl.u32 %v2200, 7
    %v2202 = vsub.s32 0, %v2201
    %v2203 = vrot.slane %v1619, %v2202
    %v2204 = vlaneseq
    %v2205 = vshrl.u32 %v2204, 7
    %v2206 = vsub.s32 0, %v2205
    %v2207 = vrot.slane %v1627, %v2206
    %v2208 = vlaneseq
    %v2209 = vshrl.u32 %v2208, 7
    %v2210 = vsub.s32 0, %v2209
    %v2211 = vrot.slane %v1629, %v2210
    %v2212 = vlaneseq
    %v2213 = vshrl.u32 %v2212, 7
    %v2214 = vsub.s32 0, %v2213
    %v2215 = vrot.slane %v1612, %v2214
    %v2216 = vlaneseq
    %v2217 = vshrl.u32 %v2216, 7
    %v2218 = vsub.s32 0, %v2217
    %v2219 = vrot.slane %v1626, %v2218
    %v2220 = vlaneseq
    %v2221 = vshrl.u32 %v2220, 7
    %v2222 = vsub.s32 0, %v2221
    %v2223 = vrot.slane %v1628, %v2222
    %v2224 = vlaneseq
    %v2225 = vshrl.u32 %v2224, 7
    %v2226 = vsub.s32 0, %v2225
    %v2227 = vrot.slane %v1630, %v2226
    %v2228 = vlaneseq
    %v2229 = vshrl.u32 %v2228, 7
    %v2230 = vsub.s32 0, %v2229
    %v2231 = vrot.slane %v1654, %v2230
    %v2232 = vlaneseq
    %v2233 = vshrl.u32 %v2232, 7
    %v2234 = vsub.s32 0, %v2233
    %v2235 = vrot.slane %v1668, %v2234
    %v2236 = vlaneseq
    %v2237 = vshrl.u32 %v2236, 7
    %v2238 = vsub.s32 0, %v2237
    %v2239 = vrot.slane %v1676, %v2238
    %v2240 = vlaneseq
    %v2241 = vshrl.u32 %v2240, 7
    %v2242 = vsub.s32 0, %v2241
    %v2243 = vrot.slane %v1678, %v2242
    %v2244 = vlaneseq
    %v2245 = vshrl.u32 %v2244, 7
    %v2246 = vsub.s32 0, %v2245
    %v2247 = vrot.slane %v1661, %v2246
    %v2248 = vlaneseq
    %v2249 = vshrl.u32 %v2248, 7
    %v2250 = vsub.s32 0, %v2249
    %v2251 = vrot.slane %v1675, %v2250
    %v2252 = vlaneseq
    %v2253 = vshrl.u32 %v2252, 7
    %v2254 = vsub.s32 0, %v2253
    %v2255 = vrot.slane %v1677, %v2254
    %v2256 = vlaneseq
    %v2257 = vshrl.u32 %v2256, 7
    %v2258 = vsub.s32 0, %v2257
    %v2259 = vrot.slane %v1679, %v2258
    %v2260 = vlaneseq
    %v2261 = vshrl.u32 %v2260, 7
    %v2262 = vsub.s32 0, %v2261
    %v2263 = vrot.slane %v1703, %v2262
    %v2264 = vlaneseq
    %v2265 = vshrl.u32 %v2264, 7
    %v2266 = vsub.s32 0, %v2265
    %v2267 = vrot.slane %v1717, %v2266
    %v2268 = vlaneseq
    %v2269 = vshrl.u32 %v2268, 7
    %v2270 = vsub.s32 0, %v2269
    %v2271 = vrot.slane %v1725, %v2270
    %v2272 = vlaneseq
    %v2273 = vshrl.u32 %v2272, 7
    %v2274 = vsub.s32 0, %v2273
    %v2275 = vrot.slane %v1727, %v2274
    %v2276 = vlaneseq
    %v2277 = vshrl.u32 %v2276, 7
    %v2278 = vsub.s32 0, %v2277
    %v2279 = vrot.slane %v1710, %v2278
    %v2280 = vlaneseq
    %v2281 = vshrl.u32 %v2280, 7
    %v2282 = vsub.s32 0, %v2281
    %v2283 = vrot.slane %v1724, %v2282
    %v2284 = vlaneseq
    %v2285 = vshrl.u32 %v2284, 7
    %v2286 = vsub.s32 0, %v2285
    %v2287 = vrot.slane %v1726, %v2286
    %v2288 = vlaneseq
    %v2289 = vshrl.u32 %v2288, 7
    %v2290 = vsub.s32 0, %v2289
    %v2291 = vrot.slane %v1728, %v2290
    %v2292 = vlaneseq
    %v2293 = vshrl.u32 %v2292, 7
    %v2294 = vsub.s32 0, %v2293
    %v2295 = vrot.slane %v1752, %v2294
    %v2296 = vlaneseq
    %v2297 = vshrl.u32 %v2296, 7
    %v2298 = vsub.s32 0, %v2297
    %v2299 = vrot.slane %v1766, %v2298
    %v2300 = vlaneseq
    %v2301 = vshrl.u32 %v2300, 7
    %v2302 = vsub.s32 0, %v2301
    %v2303 = vrot.slane %v1774, %v2302
    %v2304 = vlaneseq
    %v2305 = vshrl.u32 %v2304, 7
    %v2306 = vsub.s32 0, %v2305
    %v2307 = vrot.slane %v1776, %v2306
    %v2308 = vlaneseq
    %v2309 = vshrl.u32 %v2308, 7
    %v2310 = vsub.s32 0, %v2309
    %v2311 = vrot.slane %v1759, %v2310
    %v2312 = vlaneseq
    %v2313 = vshrl.u32 %v2312, 7
    %v2314 = vsub.s32 0, %v2313
    %v2315 = vrot.slane %v1773, %v2314
    %v2316 = vlaneseq
    %v2317 = vshrl.u32 %v2316, 7
    %v2318 = vsub.s32 0, %v2317
    %v2319 = vrot.slane %v1775, %v2318
    %v2320 = vlaneseq
    %v2321 = vshrl.u32 %v2320, 7
    %v2322 = vsub.s32 0, %v2321
    %v2323 = vrot.slane %v1777, %v2322
    %v2324 = vlaneseq
    %v2325 = vshrl.u32 %v2324, 7
    %v2326 = vsub.s32 0, %v2325
    %v2327 = vrot.slane %v1801, %v2326
    %v2328 = vlaneseq
    %v2329 = vshrl.u32 %v2328, 7
    %v2330 = vsub.s32 0, %v2329
    %v2331 = vrot.slane %v1815, %v2330
    %v2332 = vlaneseq
    %v2333 = vshrl.u32 %v2332, 7
    %v2334 = vsub.s32 0, %v2333
    %v2335 = vrot.slane %v1823, %v2334
    %v2336 = vlaneseq
    %v2337 = vshrl.u32 %v2336, 7
    %v2338 = vsub.s32 0, %v2337
    %v2339 = vrot.slane %v1825, %v2338
    %v2340 = vlaneseq
    %v2341 = vshrl.u32 %v2340, 7
    %v2342 = vsub.s32 0, %v2341
    %v2343 = vrot.slane %v1808, %v2342
    %v2344 = vlaneseq
    %v2345 = vshrl.u32 %v2344, 7
    %v2346 = vsub.s32 0, %v2345
    %v2347 = vrot.slane %v1822, %v2346
    %v2348 = vlaneseq
    %v2349 = vshrl.u32 %v2348, 7
    %v2350 = vsub.s32 0, %v2349
    %v2351 = vrot.slane %v1824, %v2350
    %v2352 = vlaneseq
    %v2353 = vshrl.u32 %v2352, 7
    %v2354 = vsub.s32 0, %v2353
    %v2355 = vrot.slane %v1826, %v2354
    %v2356 = vlaneseq
    %v2357 = vshrl.u32 %v2356, 7
    %v2358 = vsub.s32 0, %v2357
    %v2359 = vrot.slane %v1850, %v2358
    %v2360 = vlaneseq
    %v2361 = vshrl.u32 %v2360, 7
    %v2362 = vsub.s32 0, %v2361
    %v2363 = vrot.slane %v1864, %v2362
    %v2364 = vlaneseq
    %v2365 = vshrl.u32 %v2364, 7
    %v2366 = vsub.s32 0, %v2365
    %v2367 = vrot.slane %v1872, %v2366
    %v2368 = vlaneseq
    %v2369 = vshrl.u32 %v2368, 7
    %v2370 = vsub.s32 0, %v2369
    %v2371 = vrot.slane %v1874, %v2370
    %v2372 = vlaneseq
    %v2373 = vshrl.u32 %v2372, 7
    %v2374 = vsub.s32 0, %v2373
    %v2375 = vrot.slane %v1857, %v2374
    %v2376 = vlaneseq
    %v2377 = vshrl.u32 %v2376, 7
    %v2378 = vsub.s32 0, %v2377
    %v2379 = vrot.slane %v1871, %v2378
    %v2380 = vlaneseq
    %v2381 = vshrl.u32 %v2380, 7
    %v2382 = vsub.s32 0, %v2381
    %v2383 = vrot.slane %v1873, %v2382
    %v2384 = vlaneseq
    %v2385 = vshrl.u32 %v2384, 7
    %v2386 = vsub.s32 0, %v2385
    %v2387 = vrot.slane %v1875, %v2386
    %v2452 = vsel %vm2004, %v2135, -inf
    %v2453 = vsel %vm2005, %v2135, -inf
    %v2454 = vsel %vm2006, %v2139, -inf
    %v2455 = vsel %vm2007, %v2139, -inf
    %v2456 = vsel %vm2008, %v2143, -inf
    %v2457 = vsel %vm2009, %v2143, -inf
    %v2458 = vsel %vm2010, %v2147, -inf
    %v2459 = vsel %vm2011, %v2147, -inf
    %v2460 = vsel %vm2012, %v2151, -inf
    %v2461 = vsel %vm2013, %v2151, -inf
    %v2462 = vsel %vm2014, %v2155, -inf
    %v2463 = vsel %vm2015, %v2155, -inf
    %v2464 = vsel %vm2016, %v2159, -inf
    %v2465 = vsel %vm2017, %v2159, -inf
    %v2466 = vsel %vm2018, %v2163, -inf
    %v2467 = vsel %vm2019, %v2163, -inf
    %v2468 = vsel %vm2020, %v2167, -inf
    %v2469 = vsel %vm2021, %v2167, -inf
    %v2470 = vsel %vm2022, %v2171, -inf
    %v2471 = vsel %vm2023, %v2171, -inf
    %v2472 = vsel %vm2024, %v2175, -inf
    %v2473 = vsel %vm2025, %v2175, -inf
    %v2474 = vsel %vm2026, %v2179, -inf
    %v2475 = vsel %vm2027, %v2179, -inf
    %v2476 = vsel %vm2028, %v2183, -inf
    %v2477 = vsel %vm2029, %v2183, -inf
    %v2478 = vsel %vm2030, %v2187, -inf
    %v2479 = vsel %vm2031, %v2187, -inf
    %v2480 = vsel %vm2032, %v2191, -inf
    %v2481 = vsel %vm2033, %v2191, -inf
    %v2482 = vsel %vm2034, %v2195, -inf
    %v2483 = vsel %vm2035, %v2195, -inf
    %v2484 = vsel %vm2036, %v2199, -inf
    %v2485 = vsel %vm2037, %v2199, -inf
    %v2486 = vsel %vm2038, %v2203, -inf
    %v2487 = vsel %vm2039, %v2203, -inf
    %v2488 = vsel %vm2040, %v2207, -inf
    %v2489 = vsel %vm2041, %v2207, -inf
    %v2490 = vsel %vm2042, %v2211, -inf
    %v2491 = vsel %vm2043, %v2211, -inf
    %v2492 = vsel %vm2044, %v2215, -inf
    %v2493 = vsel %vm2045, %v2215, -inf
    %v2494 = vsel %vm2046, %v2219, -inf
    %v2495 = vsel %vm2047, %v2219, -inf
    %v2496 = vsel %vm2048, %v2223, -inf
    %v2497 = vsel %vm2049, %v2223, -inf
    %v2498 = vsel %vm2050, %v2227, -inf
    %v2499 = vsel %vm2051, %v2227, -inf
    %v2500 = vsel %vm2052, %v2231, -inf
    %v2501 = vsel %vm2053, %v2231, -inf
    %v2502 = vsel %vm2054, %v2235, -inf
    %v2503 = vsel %vm2055, %v2235, -inf
    %v2504 = vsel %vm2056, %v2239, -inf
    %v2505 = vsel %vm2057, %v2239, -inf
    %v2506 = vsel %vm2058, %v2243, -inf
    %v2507 = vsel %vm2059, %v2243, -inf
    %v2508 = vsel %vm2060, %v2247, -inf
    %v2509 = vsel %vm2061, %v2247, -inf
    %v2510 = vsel %vm2062, %v2251, -inf
    %v2511 = vsel %vm2063, %v2251, -inf
    %v2512 = vsel %vm2064, %v2255, -inf
    %v2513 = vsel %vm2065, %v2255, -inf
    %v2514 = vsel %vm2066, %v2259, -inf
    %v2515 = vsel %vm2067, %v2259, -inf
    %v2516 = vsel %vm2068, %v2263, -inf
    %v2517 = vsel %vm2069, %v2263, -inf
    %v2518 = vsel %vm2070, %v2267, -inf
    %v2519 = vsel %vm2071, %v2267, -inf
    %v2520 = vsel %vm2072, %v2271, -inf
    %v2521 = vsel %vm2073, %v2271, -inf
    %v2522 = vsel %vm2074, %v2275, -inf
    %v2523 = vsel %vm2075, %v2275, -inf
    %v2524 = vsel %vm2076, %v2279, -inf
    %v2525 = vsel %vm2077, %v2279, -inf
    %v2526 = vsel %vm2078, %v2283, -inf
    %v2527 = vsel %vm2079, %v2283, -inf
    %v2528 = vsel %vm2080, %v2287, -inf
    %v2529 = vsel %vm2081, %v2287, -inf
    %v2530 = vsel %vm2082, %v2291, -inf
    %v2531 = vsel %vm2083, %v2291, -inf
    %v2532 = vsel %vm2084, %v2295, -inf
    %v2533 = vsel %vm2085, %v2295, -inf
    %v2534 = vsel %vm2086, %v2299, -inf
    %v2535 = vsel %vm2087, %v2299, -inf
    %v2536 = vsel %vm2088, %v2303, -inf
    %v2537 = vsel %vm2089, %v2303, -inf
    %v2538 = vsel %vm2090, %v2307, -inf
    %v2539 = vsel %vm2091, %v2307, -inf
    %v2540 = vsel %vm2092, %v2311, -inf
    %v2541 = vsel %vm2093, %v2311, -inf
    %v2542 = vsel %vm2094, %v2315, -inf
    %v2543 = vsel %vm2095, %v2315, -inf
    %v2544 = vsel %vm2096, %v2319, -inf
    %v2545 = vsel %vm2097, %v2319, -inf
    %v2546 = vsel %vm2098, %v2323, -inf
    %v2547 = vsel %vm2099, %v2323, -inf
    %v2548 = vsel %vm2100, %v2327, -inf
    %v2549 = vsel %vm2101, %v2327, -inf
    %v2550 = vsel %vm2102, %v2331, -inf
    %v2551 = vsel %vm2103, %v2331, -inf
    %v2552 = vsel %vm2104, %v2335, -inf
    %v2553 = vsel %vm2105, %v2335, -inf
    %v2554 = vsel %vm2106, %v2339, -inf
    %v2555 = vsel %vm2107, %v2339, -inf
    %v2556 = vsel %vm2108, %v2343, -inf
    %v2557 = vsel %vm2109, %v2343, -inf
    %v2558 = vsel %vm2110, %v2347, -inf
    %v2559 = vsel %vm2111, %v2347, -inf
    %v2560 = vsel %vm2112, %v2351, -inf
    %v2561 = vsel %vm2113, %v2351, -inf
    %v2562 = vsel %vm2114, %v2355, -inf
    %v2563 = vsel %vm2115, %v2355, -inf
    %v2564 = vsel %vm2116, %v2359, -inf
    %v2565 = vsel %vm2117, %v2359, -inf
    %v2566 = vsel %vm2118, %v2363, -inf
    %v2567 = vsel %vm2119, %v2363, -inf
    %v2568 = vsel %vm2120, %v2367, -inf
    %v2569 = vsel %vm2121, %v2367, -inf
    %v2570 = vsel %vm2122, %v2371, -inf
    %v2571 = vsel %vm2123, %v2371, -inf
    %v2572 = vsel %vm2124, %v2375, -inf
    %v2573 = vsel %vm2125, %v2375, -inf
    %v2574 = vsel %vm2126, %v2379, -inf
    %v2575 = vsel %vm2127, %v2379, -inf
    %v2576 = vsel %vm2128, %v2383, -inf
    %v2577 = vsel %vm2129, %v2383, -inf
    %v2578 = vsel %vm2130, %v2387, -inf
    %v2579 = vsel %vm2131, %v2387, -inf
    %v2580 = vsel %vm480, %v2452, -inf
    %v2581 = vsel %vm480, %v2454, -inf
    %v2582 = vsel %vm480, %v2456, -inf
    %v2583 = vmax.f32 %v2580, %v2582
    %v2584 = vsel %vm480, %v2458, -inf
    %v2585 = vmax.f32 %v2581, %v2584
    %v2586 = vsel %vm480, %v2460, -inf
    %v2587 = vmax.f32 %v2583, %v2586
    %v2588 = vsel %vm480, %v2462, -inf
    %v2589 = vmax.f32 %v2585, %v2588
    %v2590 = vsel %vm480, %v2464, -inf
    %v2591 = vmax.f32 %v2587, %v2590
    %v2592 = vsel %vm480, %v2466, -inf
    %v2593 = vmax.f32 %v2589, %v2592
    %v2594 = vsel %vm480, %v2468, -inf
    %v2595 = vmax.f32 %v2591, %v2594
    %v2596 = vsel %vm480, %v2470, -inf
    %v2597 = vmax.f32 %v2593, %v2596
    %v2598 = vsel %vm480, %v2472, -inf
    %v2599 = vmax.f32 %v2595, %v2598
    %v2600 = vsel %vm480, %v2474, -inf
    %v2601 = vmax.f32 %v2597, %v2600
    %v2602 = vsel %vm480, %v2476, -inf
    %v2603 = vmax.f32 %v2599, %v2602
    %v2604 = vsel %vm480, %v2478, -inf
    %v2605 = vmax.f32 %v2601, %v2604
    %v2606 = vsel %vm480, %v2480, -inf
    %v2607 = vmax.f32 %v2603, %v2606
    %v2608 = vsel %vm480, %v2482, -inf
    %v2609 = vmax.f32 %v2605, %v2608
    %v2610 = vsel %vm480, %v2484, -inf
    %v2611 = vmax.f32 %v2607, %v2610
    %v2612 = vsel %vm480, %v2486, -inf
    %v2613 = vmax.f32 %v2609, %v2612
    %v2614 = vsel %vm480, %v2488, -inf
    %v2615 = vmax.f32 %v2611, %v2614
    %v2616 = vsel %vm480, %v2490, -inf
    %v2617 = vmax.f32 %v2613, %v2616
    %v2618 = vsel %vm480, %v2492, -inf
    %v2619 = vmax.f32 %v2615, %v2618
    %v2620 = vsel %vm480, %v2494, -inf
    %v2621 = vmax.f32 %v2617, %v2620
    %v2622 = vsel %vm480, %v2496, -inf
    %v2623 = vmax.f32 %v2619, %v2622
    %v2624 = vsel %vm480, %v2498, -inf
    %v2625 = vmax.f32 %v2621, %v2624
    %v2626 = vsel %vm480, %v2500, -inf
    %v2627 = vmax.f32 %v2623, %v2626
    %v2628 = vsel %vm480, %v2502, -inf
    %v2629 = vmax.f32 %v2625, %v2628
    %v2630 = vsel %vm480, %v2504, -inf
    %v2631 = vmax.f32 %v2627, %v2630
    %v2632 = vsel %vm480, %v2506, -inf
    %v2633 = vmax.f32 %v2629, %v2632
    %v2634 = vsel %vm480, %v2508, -inf
    %v2635 = vmax.f32 %v2631, %v2634
    %v2636 = vsel %vm480, %v2510, -inf
    %v2637 = vmax.f32 %v2633, %v2636
    %v2638 = vsel %vm480, %v2512, -inf
    %v2639 = vmax.f32 %v2635, %v2638
    %v2640 = vsel %vm480, %v2514, -inf
    %v2641 = vmax.f32 %v2637, %v2640
    %v2642 = vsel %vm480, %v2516, -inf
    %v2643 = vmax.f32 %v2639, %v2642
    %v2644 = vsel %vm480, %v2518, -inf
    %v2645 = vmax.f32 %v2641, %v2644
    %v2646 = vsel %vm480, %v2520, -inf
    %v2647 = vmax.f32 %v2643, %v2646
    %v2648 = vsel %vm480, %v2522, -inf
    %v2649 = vmax.f32 %v2645, %v2648
    %v2650 = vsel %vm480, %v2524, -inf
    %v2651 = vmax.f32 %v2647, %v2650
    %v2652 = vsel %vm480, %v2526, -inf
    %v2653 = vmax.f32 %v2649, %v2652
    %v2654 = vsel %vm480, %v2528, -inf
    %v2655 = vmax.f32 %v2651, %v2654
    %v2656 = vsel %vm480, %v2530, -inf
    %v2657 = vmax.f32 %v2653, %v2656
    %v2658 = vsel %vm480, %v2532, -inf
    %v2659 = vmax.f32 %v2655, %v2658
    %v2660 = vsel %vm480, %v2534, -inf
    %v2661 = vmax.f32 %v2657, %v2660
    %v2662 = vsel %vm480, %v2536, -inf
    %v2663 = vmax.f32 %v2659, %v2662
    %v2664 = vsel %vm480, %v2538, -inf
    %v2665 = vmax.f32 %v2661, %v2664
    %v2666 = vsel %vm480, %v2540, -inf
    %v2667 = vmax.f32 %v2663, %v2666
    %v2668 = vsel %vm480, %v2542, -inf
    %v2669 = vmax.f32 %v2665, %v2668
    %v2670 = vsel %vm480, %v2544, -inf
    %v2671 = vmax.f32 %v2667, %v2670
    %v2672 = vsel %vm480, %v2546, -inf
    %v2673 = vmax.f32 %v2669, %v2672
    %v2674 = vsel %vm480, %v2548, -inf
    %v2675 = vmax.f32 %v2671, %v2674
    %v2676 = vsel %vm480, %v2550, -inf
    %v2677 = vmax.f32 %v2673, %v2676
    %v2678 = vsel %vm480, %v2552, -inf
    %v2679 = vmax.f32 %v2675, %v2678
    %v2680 = vsel %vm480, %v2554, -inf
    %v2681 = vmax.f32 %v2677, %v2680
    %v2682 = vsel %vm480, %v2556, -inf
    %v2683 = vmax.f32 %v2679, %v2682
    %v2684 = vsel %vm480, %v2558, -inf
    %v2685 = vmax.f32 %v2681, %v2684
    %v2686 = vsel %vm480, %v2560, -inf
    %v2687 = vmax.f32 %v2683, %v2686
    %v2688 = vsel %vm480, %v2562, -inf
    %v2689 = vmax.f32 %v2685, %v2688
    %v2690 = vsel %vm480, %v2564, -inf
    %v2691 = vmax.f32 %v2687, %v2690
    %v2692 = vsel %vm480, %v2566, -inf
    %v2693 = vmax.f32 %v2689, %v2692
    %v2694 = vsel %vm480, %v2568, -inf
    %v2695 = vmax.f32 %v2691, %v2694
    %v2696 = vsel %vm480, %v2570, -inf
    %v2697 = vmax.f32 %v2693, %v2696
    %v2698 = vsel %vm480, %v2572, -inf
    %v2699 = vmax.f32 %v2695, %v2698
    %v2700 = vsel %vm480, %v2574, -inf
    %v2701 = vmax.f32 %v2697, %v2700
    %v2702 = vsel %vm480, %v2576, -inf
    %v2703 = vmax.f32 %v2699, %v2702
    %v2704 = vsel %vm480, %v2578, -inf
    %v2705 = vmax.f32 %v2701, %v2704
    %v2706 = vmax.f32 %v2703, %v2705
    %v2707 = vsel %vm480, %v2453, -inf
    %v2708 = vsel %vm480, %v2455, -inf
    %v2709 = vsel %vm480, %v2457, -inf
    %v2710 = vmax.f32 %v2707, %v2709
    %v2711 = vsel %vm480, %v2459, -inf
    %v2712 = vmax.f32 %v2708, %v2711
    %v2713 = vsel %vm480, %v2461, -inf
    %v2714 = vmax.f32 %v2710, %v2713
    %v2715 = vsel %vm480, %v2463, -inf
    %v2716 = vmax.f32 %v2712, %v2715
    %v2717 = vsel %vm480, %v2465, -inf
    %v2718 = vmax.f32 %v2714, %v2717
    %v2719 = vsel %vm480, %v2467, -inf
    %v2720 = vmax.f32 %v2716, %v2719
    %v2721 = vsel %vm480, %v2469, -inf
    %v2722 = vmax.f32 %v2718, %v2721
    %v2723 = vsel %vm480, %v2471, -inf
    %v2724 = vmax.f32 %v2720, %v2723
    %v2725 = vsel %vm480, %v2473, -inf
    %v2726 = vmax.f32 %v2722, %v2725
    %v2727 = vsel %vm480, %v2475, -inf
    %v2728 = vmax.f32 %v2724, %v2727
    %v2729 = vsel %vm480, %v2477, -inf
    %v2730 = vmax.f32 %v2726, %v2729
    %v2731 = vsel %vm480, %v2479, -inf
    %v2732 = vmax.f32 %v2728, %v2731
    %v2733 = vsel %vm480, %v2481, -inf
    %v2734 = vmax.f32 %v2730, %v2733
    %v2735 = vsel %vm480, %v2483, -inf
    %v2736 = vmax.f32 %v2732, %v2735
    %v2737 = vsel %vm480, %v2485, -inf
    %v2738 = vmax.f32 %v2734, %v2737
    %v2739 = vsel %vm480, %v2487, -inf
    %v2740 = vmax.f32 %v2736, %v2739
    %v2741 = vsel %vm480, %v2489, -inf
    %v2742 = vmax.f32 %v2738, %v2741
    %v2743 = vsel %vm480, %v2491, -inf
    %v2744 = vmax.f32 %v2740, %v2743
    %v2745 = vsel %vm480, %v2493, -inf
    %v2746 = vmax.f32 %v2742, %v2745
    %v2747 = vsel %vm480, %v2495, -inf
    %v2748 = vmax.f32 %v2744, %v2747
    %v2749 = vsel %vm480, %v2497, -inf
    %v2750 = vmax.f32 %v2746, %v2749
    %v2751 = vsel %vm480, %v2499, -inf
    %v2752 = vmax.f32 %v2748, %v2751
    %v2753 = vsel %vm480, %v2501, -inf
    %v2754 = vmax.f32 %v2750, %v2753
    %v2755 = vsel %vm480, %v2503, -inf
    %v2756 = vmax.f32 %v2752, %v2755
    %v2757 = vsel %vm480, %v2505, -inf
    %v2758 = vmax.f32 %v2754, %v2757
    %v2759 = vsel %vm480, %v2507, -inf
    %v2760 = vmax.f32 %v2756, %v2759
    %v2761 = vsel %vm480, %v2509, -inf
    %v2762 = vmax.f32 %v2758, %v2761
    %v2763 = vsel %vm480, %v2511, -inf
    %v2764 = vmax.f32 %v2760, %v2763
    %v2765 = vsel %vm480, %v2513, -inf
    %v2766 = vmax.f32 %v2762, %v2765
    %v2767 = vsel %vm480, %v2515, -inf
    %v2768 = vmax.f32 %v2764, %v2767
    %v2769 = vsel %vm480, %v2517, -inf
    %v2770 = vmax.f32 %v2766, %v2769
    %v2771 = vsel %vm480, %v2519, -inf
    %v2772 = vmax.f32 %v2768, %v2771
    %v2773 = vsel %vm480, %v2521, -inf
    %v2774 = vmax.f32 %v2770, %v2773
    %v2775 = vsel %vm480, %v2523, -inf
    %v2776 = vmax.f32 %v2772, %v2775
    %v2777 = vsel %vm480, %v2525, -inf
    %v2778 = vmax.f32 %v2774, %v2777
    %v2779 = vsel %vm480, %v2527, -inf
    %v2780 = vmax.f32 %v2776, %v2779
    %v2781 = vsel %vm480, %v2529, -inf
    %v2782 = vmax.f32 %v2778, %v2781
    %v2783 = vsel %vm480, %v2531, -inf
    %v2784 = vmax.f32 %v2780, %v2783
    %v2785 = vsel %vm480, %v2533, -inf
    %v2786 = vmax.f32 %v2782, %v2785
    %v2787 = vsel %vm480, %v2535, -inf
    %v2788 = vmax.f32 %v2784, %v2787
    %v2789 = vsel %vm480, %v2537, -inf
    %v2790 = vmax.f32 %v2786, %v2789
    %v2791 = vsel %vm480, %v2539, -inf
    %v2792 = vmax.f32 %v2788, %v2791
    %v2793 = vsel %vm480, %v2541, -inf
    %v2794 = vmax.f32 %v2790, %v2793
    %v2795 = vsel %vm480, %v2543, -inf
    %v2796 = vmax.f32 %v2792, %v2795
    %v2797 = vsel %vm480, %v2545, -inf
    %v2798 = vmax.f32 %v2794, %v2797
    %v2799 = vsel %vm480, %v2547, -inf
    %v2800 = vmax.f32 %v2796, %v2799
    %v2801 = vsel %vm480, %v2549, -inf
    %v2802 = vmax.f32 %v2798, %v2801
    %v2803 = vsel %vm480, %v2551, -inf
    %v2804 = vmax.f32 %v2800, %v2803
    %v2805 = vsel %vm480, %v2553, -inf
    %v2806 = vmax.f32 %v2802, %v2805
    %v2807 = vsel %vm480, %v2555, -inf
    %v2808 = vmax.f32 %v2804, %v2807
    %v2809 = vsel %vm480, %v2557, -inf
    %v2810 = vmax.f32 %v2806, %v2809
    %v2811 = vsel %vm480, %v2559, -inf
    %v2812 = vmax.f32 %v2808, %v2811
    %v2813 = vsel %vm480, %v2561, -inf
    %v2814 = vmax.f32 %v2810, %v2813
    %v2815 = vsel %vm480, %v2563, -inf
    %v2816 = vmax.f32 %v2812, %v2815
    %v2817 = vsel %vm480, %v2565, -inf
    %v2818 = vmax.f32 %v2814, %v2817
    %v2819 = vsel %vm480, %v2567, -inf
    %v2820 = vmax.f32 %v2816, %v2819
    %v2821 = vsel %vm480, %v2569, -inf
    %v2822 = vmax.f32 %v2818, %v2821
    %v2823 = vsel %vm480, %v2571, -inf
    %v2824 = vmax.f32 %v2820, %v2823
    %v2825 = vsel %vm480, %v2573, -inf
    %v2826 = vmax.f32 %v2822, %v2825
    %v2827 = vsel %vm480, %v2575, -inf
    %v2828 = vmax.f32 %v2824, %v2827
    %v2829 = vsel %vm480, %v2577, -inf
    %v2830 = vmax.f32 %v2826, %v2829
    %v2831 = vsel %vm480, %v2579, -inf
    %v2832 = vmax.f32 %v2828, %v2831
    %v2833 = vmax.f32 %v2830, %v2832
    %v2834 = vsel %vm2004, %v2135, inf
    %v2835 = vsel %vm2005, %v2135, inf
    %v2836 = vsel %vm2006, %v2139, inf
    %v2837 = vsel %vm2007, %v2139, inf
    %v2838 = vsel %vm2008, %v2143, inf
    %v2839 = vsel %vm2009, %v2143, inf
    %v2840 = vsel %vm2010, %v2147, inf
    %v2841 = vsel %vm2011, %v2147, inf
    %v2842 = vsel %vm2012, %v2151, inf
    %v2843 = vsel %vm2013, %v2151, inf
    %v2844 = vsel %vm2014, %v2155, inf
    %v2845 = vsel %vm2015, %v2155, inf
    %v2846 = vsel %vm2016, %v2159, inf
    %v2847 = vsel %vm2017, %v2159, inf
    %v2848 = vsel %vm2018, %v2163, inf
    %v2849 = vsel %vm2019, %v2163, inf
    %v2850 = vsel %vm2020, %v2167, inf
    %v2851 = vsel %vm2021, %v2167, inf
    %v2852 = vsel %vm2022, %v2171, inf
    %v2853 = vsel %vm2023, %v2171, inf
    %v2854 = vsel %vm2024, %v2175, inf
    %v2855 = vsel %vm2025, %v2175, inf
    %v2856 = vsel %vm2026, %v2179, inf
    %v2857 = vsel %vm2027, %v2179, inf
    %v2858 = vsel %vm2028, %v2183, inf
    %v2859 = vsel %vm2029, %v2183, inf
    %v2860 = vsel %vm2030, %v2187, inf
    %v2861 = vsel %vm2031, %v2187, inf
    %v2862 = vsel %vm2032, %v2191, inf
    %v2863 = vsel %vm2033, %v2191, inf
    %v2864 = vsel %vm2034, %v2195, inf
    %v2865 = vsel %vm2035, %v2195, inf
    %v2866 = vsel %vm2036, %v2199, inf
    %v2867 = vsel %vm2037, %v2199, inf
    %v2868 = vsel %vm2038, %v2203, inf
    %v2869 = vsel %vm2039, %v2203, inf
    %v2870 = vsel %vm2040, %v2207, inf
    %v2871 = vsel %vm2041, %v2207, inf
    %v2872 = vsel %vm2042, %v2211, inf
    %v2873 = vsel %vm2043, %v2211, inf
    %v2874 = vsel %vm2044, %v2215, inf
    %v2875 = vsel %vm2045, %v2215, inf
    %v2876 = vsel %vm2046, %v2219, inf
    %v2877 = vsel %vm2047, %v2219, inf
    %v2878 = vsel %vm2048, %v2223, inf
    %v2879 = vsel %vm2049, %v2223, inf
    %v2880 = vsel %vm2050, %v2227, inf
    %v2881 = vsel %vm2051, %v2227, inf
    %v2882 = vsel %vm2052, %v2231, inf
    %v2883 = vsel %vm2053, %v2231, inf
    %v2884 = vsel %vm2054, %v2235, inf
    %v2885 = vsel %vm2055, %v2235, inf
    %v2886 = vsel %vm2056, %v2239, inf
    %v2887 = vsel %vm2057, %v2239, inf
    %v2888 = vsel %vm2058, %v2243, inf
    %v2889 = vsel %vm2059, %v2243, inf
    %v2890 = vsel %vm2060, %v2247, inf
    %v2891 = vsel %vm2061, %v2247, inf
    %v2892 = vsel %vm2062, %v2251, inf
    %v2893 = vsel %vm2063, %v2251, inf
    %v2894 = vsel %vm2064, %v2255, inf
    %v2895 = vsel %vm2065, %v2255, inf
    %v2896 = vsel %vm2066, %v2259, inf
    %v2897 = vsel %vm2067, %v2259, inf
    %v2898 = vsel %vm2068, %v2263, inf
    %v2899 = vsel %vm2069, %v2263, inf
    %v2900 = vsel %vm2070, %v2267, inf
    %v2901 = vsel %vm2071, %v2267, inf
    %v2902 = vsel %vm2072, %v2271, inf
    %v2903 = vsel %vm2073, %v2271, inf
    %v2904 = vsel %vm2074, %v2275, inf
    %v2905 = vsel %vm2075, %v2275, inf
    %v2906 = vsel %vm2076, %v2279, inf
    %v2907 = vsel %vm2077, %v2279, inf
    %v2908 = vsel %vm2078, %v2283, inf
    %v2909 = vsel %vm2079, %v2283, inf
    %v2910 = vsel %vm2080, %v2287, inf
    %v2911 = vsel %vm2081, %v2287, inf
    %v2912 = vsel %vm2082, %v2291, inf
    %v2913 = vsel %vm2083, %v2291, inf
    %v2914 = vsel %vm2084, %v2295, inf
    %v2915 = vsel %vm2085, %v2295, inf
    %v2916 = vsel %vm2086, %v2299, inf
    %v2917 = vsel %vm2087, %v2299, inf
    %v2918 = vsel %vm2088, %v2303, inf
    %v2919 = vsel %vm2089, %v2303, inf
    %v2920 = vsel %vm2090, %v2307, inf
    %v2921 = vsel %vm2091, %v2307, inf
    %v2922 = vsel %vm2092, %v2311, inf
    %v2923 = vsel %vm2093, %v2311, inf
    %v2924 = vsel %vm2094, %v2315, inf
    %v2925 = vsel %vm2095, %v2315, inf
    %v2926 = vsel %vm2096, %v2319, inf
    %v2927 = vsel %vm2097, %v2319, inf
    %v2928 = vsel %vm2098, %v2323, inf
    %v2929 = vsel %vm2099, %v2323, inf
    %v2930 = vsel %vm2100, %v2327, inf
    %v2931 = vsel %vm2101, %v2327, inf
    %v2932 = vsel %vm2102, %v2331, inf
    %v2933 = vsel %vm2103, %v2331, inf
    %v2934 = vsel %vm2104, %v2335, inf
    %v2935 = vsel %vm2105, %v2335, inf
    %v2936 = vsel %vm2106, %v2339, inf
    %v2937 = vsel %vm2107, %v2339, inf
    %v2938 = vsel %vm2108, %v2343, inf
    %v2939 = vsel %vm2109, %v2343, inf
    %v2940 = vsel %vm2110, %v2347, inf
    %v2941 = vsel %vm2111, %v2347, inf
    %v2942 = vsel %vm2112, %v2351, inf
    %v2943 = vsel %vm2113, %v2351, inf
    %v2944 = vsel %vm2114, %v2355, inf
    %v2945 = vsel %vm2115, %v2355, inf
    %v2946 = vsel %vm2116, %v2359, inf
    %v2947 = vsel %vm2117, %v2359, inf
    %v2948 = vsel %vm2118, %v2363, inf
    %v2949 = vsel %vm2119, %v2363, inf
    %v2950 = vsel %vm2120, %v2367, inf
    %v2951 = vsel %vm2121, %v2367, inf
    %v2952 = vsel %vm2122, %v2371, inf
    %v2953 = vsel %vm2123, %v2371, inf
    %v2954 = vsel %vm2124, %v2375, inf
    %v2955 = vsel %vm2125, %v2375, inf
    %v2956 = vsel %vm2126, %v2379, inf
    %v2957 = vsel %vm2127, %v2379, inf
    %v2958 = vsel %vm2128, %v2383, inf
    %v2959 = vsel %vm2129, %v2383, inf
    %v2960 = vsel %vm2130, %v2387, inf
    %v2961 = vsel %vm2131, %v2387, inf
    %v2962 = vsel %vm480, %v2834, inf
    %v2963 = vsel %vm480, %v2836, inf
    %v2964 = vsel %vm480, %v2838, inf
    %v2965 = vmin.f32 %v2962, %v2964
    %v2966 = vsel %vm480, %v2840, inf
    %v2967 = vmin.f32 %v2963, %v2966
    %v2968 = vsel %vm480, %v2842, inf
    %v2969 = vmin.f32 %v2965, %v2968
    %v2970 = vsel %vm480, %v2844, inf
    %v2971 = vmin.f32 %v2967, %v2970
    %v2972 = vsel %vm480, %v2846, inf
    %v2973 = vmin.f32 %v2969, %v2972
    %v2974 = vsel %vm480, %v2848, inf
    %v2975 = vmin.f32 %v2971, %v2974
    %v2976 = vsel %vm480, %v2850, inf
    %v2977 = vmin.f32 %v2973, %v2976
    %v2978 = vsel %vm480, %v2852, inf
    %v2979 = vmin.f32 %v2975, %v2978
    %v2980 = vsel %vm480, %v2854, inf
    %v2981 = vmin.f32 %v2977, %v2980
    %v2982 = vsel %vm480, %v2856, inf
    %v2983 = vmin.f32 %v2979, %v2982
    %v2984 = vsel %vm480, %v2858, inf
    %v2985 = vmin.f32 %v2981, %v2984
    %v2986 = vsel %vm480, %v2860, inf
    %v2987 = vmin.f32 %v2983, %v2986
    %v2988 = vsel %vm480, %v2862, inf
    %v2989 = vmin.f32 %v2985, %v2988
    %v2990 = vsel %vm480, %v2864, inf
    %v2991 = vmin.f32 %v2987, %v2990
    %v2992 = vsel %vm480, %v2866, inf
    %v2993 = vmin.f32 %v2989, %v2992
    %v2994 = vsel %vm480, %v2868, inf
    %v2995 = vmin.f32 %v2991, %v2994
    %v2996 = vsel %vm480, %v2870, inf
    %v2997 = vmin.f32 %v2993, %v2996
    %v2998 = vsel %vm480, %v2872, inf
    %v2999 = vmin.f32 %v2995, %v2998
    %v3000 = vsel %vm480, %v2874, inf
    %v3001 = vmin.f32 %v2997, %v3000
    %v3002 = vsel %vm480, %v2876, inf
    %v3003 = vmin.f32 %v2999, %v3002
    %v3004 = vsel %vm480, %v2878, inf
    %v3005 = vmin.f32 %v3001, %v3004
    %v3006 = vsel %vm480, %v2880, inf
    %v3007 = vmin.f32 %v3003, %v3006
    %v3008 = vsel %vm480, %v2882, inf
    %v3009 = vmin.f32 %v3005, %v3008
    %v3010 = vsel %vm480, %v2884, inf
    %v3011 = vmin.f32 %v3007, %v3010
    %v3012 = vsel %vm480, %v2886, inf
    %v3013 = vmin.f32 %v3009, %v3012
    %v3014 = vsel %vm480, %v2888, inf
    %v3015 = vmin.f32 %v3011, %v3014
    %v3016 = vsel %vm480, %v2890, inf
    %v3017 = vmin.f32 %v3013, %v3016
    %v3018 = vsel %vm480, %v2892, inf
    %v3019 = vmin.f32 %v3015, %v3018
    %v3020 = vsel %vm480, %v2894, inf
    %v3021 = vmin.f32 %v3017, %v3020
    %v3022 = vsel %vm480, %v2896, inf
    %v3023 = vmin.f32 %v3019, %v3022
    %v3024 = vsel %vm480, %v2898, inf
    %v3025 = vmin.f32 %v3021, %v3024
    %v3026 = vsel %vm480, %v2900, inf
    %v3027 = vmin.f32 %v3023, %v3026
    %v3028 = vsel %vm480, %v2902, inf
    %v3029 = vmin.f32 %v3025, %v3028
    %v3030 = vsel %vm480, %v2904, inf
    %v3031 = vmin.f32 %v3027, %v3030
    %v3032 = vsel %vm480, %v2906, inf
    %v3033 = vmin.f32 %v3029, %v3032
    %v3034 = vsel %vm480, %v2908, inf
    %v3035 = vmin.f32 %v3031, %v3034
    %v3036 = vsel %vm480, %v2910, inf
    %v3037 = vmin.f32 %v3033, %v3036
    %v3038 = vsel %vm480, %v2912, inf
    %v3039 = vmin.f32 %v3035, %v3038
    %v3040 = vsel %vm480, %v2914, inf
    %v3041 = vmin.f32 %v3037, %v3040
    %v3042 = vsel %vm480, %v2916, inf
    %v3043 = vmin.f32 %v3039, %v3042
    %v3044 = vsel %vm480, %v2918, inf
    %v3045 = vmin.f32 %v3041, %v3044
    %v3046 = vsel %vm480, %v2920, inf
    %v3047 = vmin.f32 %v3043, %v3046
    %v3048 = vsel %vm480, %v2922, inf
    %v3049 = vmin.f32 %v3045, %v3048
    %v3050 = vsel %vm480, %v2924, inf
    %v3051 = vmin.f32 %v3047, %v3050
    %v3052 = vsel %vm480, %v2926, inf
    %v3053 = vmin.f32 %v3049, %v3052
    %v3054 = vsel %vm480, %v2928, inf
    %v3055 = vmin.f32 %v3051, %v3054
    %v3056 = vsel %vm480, %v2930, inf
    %v3057 = vmin.f32 %v3053, %v3056
    %v3058 = vsel %vm480, %v2932, inf
    %v3059 = vmin.f32 %v3055, %v3058
    %v3060 = vsel %vm480, %v2934, inf
    %v3061 = vmin.f32 %v3057, %v3060
    %v3062 = vsel %vm480, %v2936, inf
    %v3063 = vmin.f32 %v3059, %v3062
    %v3064 = vsel %vm480, %v2938, inf
    %v3065 = vmin.f32 %v3061, %v3064
    %v3066 = vsel %vm480, %v2940, inf
    %v3067 = vmin.f32 %v3063, %v3066
    %v3068 = vsel %vm480, %v2942, inf
    %v3069 = vmin.f32 %v3065, %v3068
    %v3070 = vsel %vm480, %v2944, inf
    %v3071 = vmin.f32 %v3067, %v3070
    %v3072 = vsel %vm480, %v2946, inf
    %v3073 = vmin.f32 %v3069, %v3072
    %v3074 = vsel %vm480, %v2948, inf
    %v3075 = vmin.f32 %v3071, %v3074
    %v3076 = vsel %vm480, %v2950, inf
    %v3077 = vmin.f32 %v3073, %v3076
    %v3078 = vsel %vm480, %v2952, inf
    %v3079 = vmin.f32 %v3075, %v3078
    %v3080 = vsel %vm480, %v2954, inf
    %v3081 = vmin.f32 %v3077, %v3080
    %v3082 = vsel %vm480, %v2956, inf
    %v3083 = vmin.f32 %v3079, %v3082
    %v3084 = vsel %vm480, %v2958, inf
    %v3085 = vmin.f32 %v3081, %v3084
    %v3086 = vsel %vm480, %v2960, inf
    %v3087 = vmin.f32 %v3083, %v3086
    %v3088 = vmin.f32 %v3085, %v3087
    %v3089 = vsel %vm480, %v2835, inf
    %v3090 = vsel %vm480, %v2837, inf
    %v3091 = vsel %vm480, %v2839, inf
    %v3092 = vmin.f32 %v3089, %v3091
    %v3093 = vsel %vm480, %v2841, inf
    %v3094 = vmin.f32 %v3090, %v3093
    %v3095 = vsel %vm480, %v2843, inf
    %v3096 = vmin.f32 %v3092, %v3095
    %v3097 = vsel %vm480, %v2845, inf
    %v3098 = vmin.f32 %v3094, %v3097
    %v3099 = vsel %vm480, %v2847, inf
    %v3100 = vmin.f32 %v3096, %v3099
    %v3101 = vsel %vm480, %v2849, inf
    %v3102 = vmin.f32 %v3098, %v3101
    %v3103 = vsel %vm480, %v2851, inf
    %v3104 = vmin.f32 %v3100, %v3103
    %v3105 = vsel %vm480, %v2853, inf
    %v3106 = vmin.f32 %v3102, %v3105
    %v3107 = vsel %vm480, %v2855, inf
    %v3108 = vmin.f32 %v3104, %v3107
    %v3109 = vsel %vm480, %v2857, inf
    %v3110 = vmin.f32 %v3106, %v3109
    %v3111 = vsel %vm480, %v2859, inf
    %v3112 = vmin.f32 %v3108, %v3111
    %v3113 = vsel %vm480, %v2861, inf
    %v3114 = vmin.f32 %v3110, %v3113
    %v3115 = vsel %vm480, %v2863, inf
    %v3116 = vmin.f32 %v3112, %v3115
    %v3117 = vsel %vm480, %v2865, inf
    %v3118 = vmin.f32 %v3114, %v3117
    %v3119 = vsel %vm480, %v2867, inf
    %v3120 = vmin.f32 %v3116, %v3119
    %v3121 = vsel %vm480, %v2869, inf
    %v3122 = vmin.f32 %v3118, %v3121
    %v3123 = vsel %vm480, %v2871, inf
    %v3124 = vmin.f32 %v3120, %v3123
    %v3125 = vsel %vm480, %v2873, inf
    %v3126 = vmin.f32 %v3122, %v3125
    %v3127 = vsel %vm480, %v2875, inf
    %v3128 = vmin.f32 %v3124, %v3127
    %v3129 = vsel %vm480, %v2877, inf
    %v3130 = vmin.f32 %v3126, %v3129
    %v3131 = vsel %vm480, %v2879, inf
    %v3132 = vmin.f32 %v3128, %v3131
    %v3133 = vsel %vm480, %v2881, inf
    %v3134 = vmin.f32 %v3130, %v3133
    %v3135 = vsel %vm480, %v2883, inf
    %v3136 = vmin.f32 %v3132, %v3135
    %v3137 = vsel %vm480, %v2885, inf
    %v3138 = vmin.f32 %v3134, %v3137
    %v3139 = vsel %vm480, %v2887, inf
    %v3140 = vmin.f32 %v3136, %v3139
    %v3141 = vsel %vm480, %v2889, inf
    %v3142 = vmin.f32 %v3138, %v3141
    %v3143 = vsel %vm480, %v2891, inf
    %v3144 = vmin.f32 %v3140, %v3143
    %v3145 = vsel %vm480, %v2893, inf
    %v3146 = vmin.f32 %v3142, %v3145
    %v3147 = vsel %vm480, %v2895, inf
    %v3148 = vmin.f32 %v3144, %v3147
    %v3149 = vsel %vm480, %v2897, inf
    %v3150 = vmin.f32 %v3146, %v3149
    %v3151 = vsel %vm480, %v2899, inf
    %v3152 = vmin.f32 %v3148, %v3151
    %v3153 = vsel %vm480, %v2901, inf
    %v3154 = vmin.f32 %v3150, %v3153
    %v3155 = vsel %vm480, %v2903, inf
    %v3156 = vmin.f32 %v3152, %v3155
    %v3157 = vsel %vm480, %v2905, inf
    %v3158 = vmin.f32 %v3154, %v3157
    %v3159 = vsel %vm480, %v2907, inf
    %v3160 = vmin.f32 %v3156, %v3159
    %v3161 = vsel %vm480, %v2909, inf
    %v3162 = vmin.f32 %v3158, %v3161
    %v3163 = vsel %vm480, %v2911, inf
    %v3164 = vmin.f32 %v3160, %v3163
    %v3165 = vsel %vm480, %v2913, inf
    %v3166 = vmin.f32 %v3162, %v3165
    %v3167 = vsel %vm480, %v2915, inf
    %v3168 = vmin.f32 %v3164, %v3167
    %v3169 = vsel %vm480, %v2917, inf
    %v3170 = vmin.f32 %v3166, %v3169
    %v3171 = vsel %vm480, %v2919, inf
    %v3172 = vmin.f32 %v3168, %v3171
    %v3173 = vsel %vm480, %v2921, inf
    %v3174 = vmin.f32 %v3170, %v3173
    %v3175 = vsel %vm480, %v2923, inf
    %v3176 = vmin.f32 %v3172, %v3175
    %v3177 = vsel %vm480, %v2925, inf
    %v3178 = vmin.f32 %v3174, %v3177
    %v3179 = vsel %vm480, %v2927, inf
    %v3180 = vmin.f32 %v3176, %v3179
    %v3181 = vsel %vm480, %v2929, inf
    %v3182 = vmin.f32 %v3178, %v3181
    %v3183 = vsel %vm480, %v2931, inf
    %v3184 = vmin.f32 %v3180, %v3183
    %v3185 = vsel %vm480, %v2933, inf
    %v3186 = vmin.f32 %v3182, %v3185
    %v3187 = vsel %vm480, %v2935, inf
    %v3188 = vmin.f32 %v3184, %v3187
    %v3189 = vsel %vm480, %v2937, inf
    %v3190 = vmin.f32 %v3186, %v3189
    %v3191 = vsel %vm480, %v2939, inf
    %v3192 = vmin.f32 %v3188, %v3191
    %v3193 = vsel %vm480, %v2941, inf
    %v3194 = vmin.f32 %v3190, %v3193
    %v3195 = vsel %vm480, %v2943, inf
    %v3196 = vmin.f32 %v3192, %v3195
    %v3197 = vsel %vm480, %v2945, inf
    %v3198 = vmin.f32 %v3194, %v3197
    %v3199 = vsel %vm480, %v2947, inf
    %v3200 = vmin.f32 %v3196, %v3199
    %v3201 = vsel %vm480, %v2949, inf
    %v3202 = vmin.f32 %v3198, %v3201
    %v3203 = vsel %vm480, %v2951, inf
    %v3204 = vmin.f32 %v3200, %v3203
    %v3205 = vsel %vm480, %v2953, inf
    %v3206 = vmin.f32 %v3202, %v3205
    %v3207 = vsel %vm480, %v2955, inf
    %v3208 = vmin.f32 %v3204, %v3207
    %v3209 = vsel %vm480, %v2957, inf
    %v3210 = vmin.f32 %v3206, %v3209
    %v3211 = vsel %vm480, %v2959, inf
    %v3212 = vmin.f32 %v3208, %v3211
    %v3213 = vsel %vm480, %v2961, inf
    %v3214 = vmin.f32 %v3210, %v3213
    %v3215 = vmin.f32 %v3212, %v3214
    %v3216 = vld [vmem:[#allocation5] sm:$0xff]
    %v3217 = vld [vmem:[#allocation5 + $0x8] sm:$0xff]
    %v3218 = vmax.f32 %v3216, %v2706
    %v3219 = vmax.f32 %v3217, %v2833
    %3220 = vst.msk [vmem:[#allocation5] sm:$0xff] %vm480, %v3218
    %3221 = vst.msk [vmem:[#allocation5 + $0x8] sm:$0xff] %vm480, %v3219
    %v3222 = vld [vmem:[#allocation6] sm:$0xff]
    %v3223 = vld [vmem:[#allocation6 + $0x8] sm:$0xff]
    %v3224 = vmin.f32 %v3222, %v3088
    %v3225 = vmin.f32 %v3223, %v3215
    %3226 = vst.msk [vmem:[#allocation6] sm:$0xff] %vm480, %v3224
    %3227 = vst.msk [vmem:[#allocation6 + $0x8] sm:$0xff] %vm480, %v3225
    // Predicated region
    $region54: #{single_pna_neair_block.1} parent=1 // pred_check
      %p3228 = pneg %p42
    $region55: #{single_pna_neair_block.1} parent=1 // pred_check_branch
      %3230 = sbr.rel (%p3228) target = $region57
    $region56: #{single_pna_neair_block.1} parent=1 // pred_region
      %v3231 = vld [vmem:[#allocation4] sm:$0xff]
      %v3232 = vld [vmem:[#allocation4 + $0x8] sm:$0xff]
      %vm3233 = vcmp.gt.f32.partialorder %v3231, 0.0
      %vm3234 = vcmp.gt.f32.partialorder %v3232, 0.0
      %v3235 = vld [vmem:[#allocation2] sm:$0xff]
      %v3236 = vld [vmem:[#allocation2 + $0x8] sm:$0xff]
      %v3237 = vmax.f32 %v3231, 1.0
      %v3238 = vmax.f32 %v3232, 1.0
      %3240 = vset.pattern.permute.xlu0 0
      %3241 = vperm.xlu0 %3240, %v3237
      %v3242 = vpop.permute.xlu0 %3241
      %3245 = vset.pattern.permute.xlu0 0
      %3246 = vperm.xlu0 %3245, %v3238
      %v3247 = vpop.permute.xlu0 %3246
      %v3249 = vrcp.pop %v3242
      %v3250 = vmul.f32 %v3235, %v3249
      %v3251 = vrcp.pop %v3247
      %v3252 = vmul.f32 %v3236, %v3251
      %v3253 = vsel %vm3233, 1, 0
      %v3254 = vsel %vm3234, 1, 0
      %3255 = vset.pattern.permute.xlu0 0
      %3256 = vperm.xlu0 %3255, %v3253
      %v3257 = vpop.permute.xlu0 %3256
      %3258 = vset.pattern.permute.xlu0 0
      %3259 = vperm.xlu0 %3258, %v3254
      %v3260 = vpop.permute.xlu0 %3259
      %vm3261 = vcmp.eq.s32.totalorder %v3257, 1
      %vm3262 = vcmp.eq.s32.totalorder %v3260, 1
      %v3263 = vsel %vm3261, %v3250, 0.0
      %v3264 = vsel %vm3262, %v3252, 0.0
      %v3265 = vld [vmem:[#allocation5] sm:$0xff]
      %v3266 = vld [vmem:[#allocation5 + $0x8] sm:$0xff]
      %v3267 = vsel %vm3261, %v3265, 0.0
      %v3268 = vsel %vm3262, %v3266, 0.0
      %v3269 = vld [vmem:[#allocation6] sm:$0xff]
      %v3270 = vld [vmem:[#allocation6 + $0x8] sm:$0xff]
      %v3271 = vsel %vm3261, %v3269, 0.0
      %v3272 = vsel %vm3262, %v3270, 0.0
      %v3273 = vld [vmem:[#allocation3] sm:$0xff]
      %v3274 = vld [vmem:[#allocation3 + $0x8] sm:$0xff]
      %v3275 = vmul.f32 %v3235, %v3235
      %v3276 = vmul.f32 %v3236, %v3236
      %v3277 = vsub.f32 %v3273, %v3275
      %v3278 = vsub.f32 %v3274, %v3276
      %v3279 = vmax.f32 %v3277, 1e-08
      %v3280 = vmax.f32 %v3278, 1e-08
      %v3281 = vrsqrt.pop %v3279
      %v3282 = vmul.f32 %v3279, %v3281
      %vm3283 = vcmp.eq.f32.partialorder %v3279, inf
      %v3284 = vsel %vm3283, %v3279, %v3282
      %vm3285 = vcmp.eq.f32.partialorder %v3279, 0.0
      %v3286 = vand.u32 %v3279, 2147483648
      %v3287 = vsel %vm3285, %v3286, %v3284
      %v3288 = vrsqrt.pop %v3280
      %v3289 = vmul.f32 %v3280, %v3288
      %vm3290 = vcmp.eq.f32.partialorder %v3280, inf
      %v3291 = vsel %vm3290, %v3280, %v3289
      %vm3292 = vcmp.eq.f32.partialorder %v3280, 0.0
      %v3293 = vand.u32 %v3280, 2147483648
      %v3294 = vsel %vm3292, %v3293, %v3291
      %3297 = vrot.lane.b32.xlu0 %v3267, 32
      %v3298 = vpop.permute.xlu0 %3297
      %3299 = vrot.lane.b32.xlu0 %v3268, 32
      %v3300 = vpop.permute.xlu0 %3299
      %3305 = vrot.lane.b32.xlu0 %v3271, 64
      %v3306 = vpop.permute.xlu0 %3305
      %3307 = vrot.lane.b32.xlu0 %v3272, 64
      %v3308 = vpop.permute.xlu0 %3307
      %3313 = vrot.lane.b32.xlu0 %v3287, 96
      %v3314 = vpop.permute.xlu0 %3313
      %3315 = vrot.lane.b32.xlu0 %v3294, 96
      %v3316 = vpop.permute.xlu0 %3315
      %v3319 = vsel %vm480, %v3263, %v3298
      %v3320 = vsel %vm480, %v3264, %v3300
      %v3321 = vsel %vm489, %v3319, %v3306
      %v3322 = vsel %vm489, %v3320, %v3308
      %vm3323 = vcmask 785408
      %v3324 = vsel %vm3323, %v3321, %v3314
      %v3325 = vsel %vm3323, %v3322, %v3316
      %v3326 = vld [vmem:[%s7] sm:$0xff]
      %v3327 = vld [vmem:[%s7 + $0x8] sm:$0xff]
      %v3328 = vld [vmem:[%s7 + $0x10] sm:$0xff]
      %v3329 = vld [vmem:[%s7 + $0x18] sm:$0xff]
      %v3330 = vld [vmem:[%s7 + $0x20] sm:$0xff]
      %v3331 = vld [vmem:[%s7 + $0x28] sm:$0xff]
      %v3332 = vld [vmem:[%s7 + $0x30] sm:$0xff]
      %v3333 = vld [vmem:[%s7 + $0x38] sm:$0xff]
      %v3334 = vld [vmem:[%s7 + $0x40] sm:$0xff]
      %v3335 = vld [vmem:[%s7 + $0x48] sm:$0xff]
      %v3336 = vld [vmem:[%s7 + $0x50] sm:$0xff]
      %v3337 = vld [vmem:[%s7 + $0x58] sm:$0xff]
      %v3338 = vld [vmem:[%s7 + $0x60] sm:$0xff]
      %v3339 = vld [vmem:[%s7 + $0x68] sm:$0xff]
      %v3340 = vld [vmem:[%s7 + $0x70] sm:$0xff]
      %v3341 = vld [vmem:[%s7 + $0x78] sm:$0xff]
      %v3342 = vld [vmem:[%s8] sm:$0x1]
      %v3344 = vlaneseq
      %v3345 = vshrl.u32 %v3344, 7
      %v3346 = vsub.s32 0, %v3345
      %v3347 = vrot.slane %v3342, %v3346
      %3349 = vmatprep.subr.mxu0 0.0
      %3350 = vmatpush1.msra.mxu0 %v3326
      %3351 = vmatprep.subr.mxu0 0.0
      %3352 = vmatpush1.msra.mxu0 %v3327
      %3353 = vmatprep.subr.mxu0 0.0
      %3354 = vmatpush1.msra.mxu0 %v3328
      %3355 = vmatprep.subr.mxu0 0.0
      %3356 = vmatpush1.msra.mxu0 %v3329
      %3357 = vmatprep.subr.mxu0 0.0
      %3358 = vmatpush1.msra.mxu0 %v3330
      %3359 = vmatprep.subr.mxu0 0.0
      %3360 = vmatpush1.msra.mxu0 %v3331
      %3361 = vmatprep.subr.mxu0 0.0
      %3362 = vmatpush1.msra.mxu0 %v3332
      %3363 = vmatprep.subr.mxu0 0.0
      %3364 = vmatpush1.msra.mxu0 %v3333
      %3365 = vmatprep.subr.mxu0 0.0
      %3366 = vmatpush1.msra.mxu0 %v3334
      %3367 = vmatprep.subr.mxu0 0.0
      %3368 = vmatpush1.msra.mxu0 %v3335
      %3369 = vmatprep.subr.mxu0 0.0
      %3370 = vmatpush1.msra.mxu0 %v3336
      %3371 = vmatprep.subr.mxu0 0.0
      %3372 = vmatpush1.msra.mxu0 %v3337
      %3373 = vmatprep.subr.mxu0 0.0
      %3374 = vmatpush1.msra.mxu0 %v3338
      %3375 = vmatprep.subr.mxu0 0.0
      %3376 = vmatpush1.msra.mxu0 %v3339
      %3377 = vmatprep.subr.mxu0 0.0
      %3378 = vmatpush1.msra.mxu0 %v3340
      %3379 = vmatprep.subr.mxu0 0.0
      %3380 = vmatpush1.msra.mxu0 %v3341
      %3381 = vmatprep.subr.mxu0 0.0
      %3382 = vmatpush1.msra.mxu0 0.0
      %3383 = vmatprep.subr.mxu0 0.0
      %3384 = vmatpush1.msra.mxu0 0.0
      %3385 = vmatprep.subr.mxu0 0.0
      %3386 = vmatpush1.msra.mxu0 0.0
      %3387 = vmatprep.subr.mxu0 0.0
      %3388 = vmatpush1.msra.mxu0 0.0
      %3389 = vmatprep.subr.mxu0 0.0
      %3390 = vmatpush1.msra.mxu0 0.0
      %3391 = vmatprep.subr.mxu0 0.0
      %3392 = vmatpush1.msra.mxu0 0.0
      %3393 = vmatprep.subr.mxu0 0.0
      %3394 = vmatpush1.msra.mxu0 0.0
      %3395 = vmatprep.subr.mxu0 0.0
      %3396 = vmatpush1.msra.mxu0 0.0
      %3397 = vmatprep.subr.mxu0 0.0
      %3398 = vmatpush1.msra.mxu0 0.0
      %3399 = vmatprep.subr.mxu0 0.0
      %3400 = vmatpush1.msra.mxu0 0.0
      %3401 = vmatprep.subr.mxu0 0.0
      %3402 = vmatpush1.msra.mxu0 0.0
      %3403 = vmatprep.subr.mxu0 0.0
      %3404 = vmatpush1.msra.mxu0 0.0
      %3405 = vmatprep.subr.mxu0 0.0
      %3406 = vmatpush1.msra.mxu0 0.0
      %3407 = vmatprep.subr.mxu0 0.0
      %3408 = vmatpush1.msra.mxu0 0.0
      %3409 = vmatprep.subr.mxu0 0.0
      %3410 = vmatpush1.msra.mxu0 0.0
      %3411 = vmatprep.subr.mxu0 0.0
      %3412 = vmatpush1.msra.mxu0 0.0
      %3413 = vmatprep.mubr.f32.mxu0 0.0
      %3414 = vmatmul.mubr.f32.gmra.mrb[0].mxu0 %v3324
      %v3415 = vpop.f32.mrb[0].mxu0
      %v3416 = vadd.f32 %v3347, %v3415
      %v3417 = vpop.f32.mrb[0].mxu0
      %3418 = vmatprep.mubr.f32.mxu0 0.0
      %3419 = vmatmul.mubr.f32.gmra.mrb[0].mxu0 %v3325
      %v3420 = vpop.f32.mrb[0].mxu0
      %v3421 = vadd.f32 %v3347, %v3420
      %v3422 = vpop.f32.mrb[0].mxu0
      %3423 = vdwg.mxu0
      %v3424 = vld [vmem:[%s5] sm:$0xff]
      %v3425 = vld [vmem:[%s6] sm:$0xff]
      %3427 = vrot.lane.b32.xlu0 %v3424, 32
      %v3428 = vpop.permute.xlu0 %3427
      %3431 = vrot.lane.b32.xlu0 %v3425, 64
      %v3432 = vpop.permute.xlu0 %3431
      %v3434 = vsel %vm480, %v3416, %v3428
      %v3435 = vsel %vm489, %v3434, %v3432
      %v3436 = vld [vmem:[%s9] sm:$0xff]
      %v3437 = vld [vmem:[%s9 + $0x8] sm:$0xff]
      %v3438 = vld [vmem:[%s9 + $0x10] sm:$0xff]
      %v3439 = vld [vmem:[%s9 + $0x18] sm:$0xff]
      %v3440 = vld [vmem:[%s9 + $0x20] sm:$0xff]
      %v3441 = vld [vmem:[%s9 + $0x28] sm:$0xff]
      %v3442 = vld [vmem:[%s9 + $0x30] sm:$0xff]
      %v3443 = vld [vmem:[%s9 + $0x38] sm:$0xff]
      %v3444 = vld [vmem:[%s9 + $0x40] sm:$0xff]
      %v3445 = vld [vmem:[%s9 + $0x48] sm:$0xff]
      %v3446 = vld [vmem:[%s9 + $0x50] sm:$0xff]
      %v3447 = vld [vmem:[%s9 + $0x58] sm:$0xff]
      %v3449 = vsel %vm3323, %v3435, 0
      %3451 = vmatprep.subr.mxu0 0.0
      %3452 = vmatpush1.msra.mxu0 %v3436
      %3453 = vmatprep.subr.mxu0 0.0
      %3454 = vmatpush1.msra.mxu0 %v3437
      %3455 = vmatprep.subr.mxu0 0.0
      %3456 = vmatpush1.msra.mxu0 %v3438
      %3457 = vmatprep.subr.mxu0 0.0
      %3458 = vmatpush1.msra.mxu0 %v3439
      %3459 = vmatprep.subr.mxu0 0.0
      %3460 = vmatpush1.msra.mxu0 %v3440
      %3461 = vmatprep.subr.mxu0 0.0
      %3462 = vmatpush1.msra.mxu0 %v3441
      %3463 = vmatprep.subr.mxu0 0.0
      %3464 = vmatpush1.msra.mxu0 %v3442
      %3465 = vmatprep.subr.mxu0 0.0
      %3466 = vmatpush1.msra.mxu0 %v3443
      %3467 = vmatprep.subr.mxu0 0.0
      %3468 = vmatpush1.msra.mxu0 %v3444
      %3469 = vmatprep.subr.mxu0 0.0
      %3470 = vmatpush1.msra.mxu0 %v3445
      %3471 = vmatprep.subr.mxu0 0.0
      %3472 = vmatpush1.msra.mxu0 %v3446
      %3473 = vmatprep.subr.mxu0 0.0
      %3474 = vmatpush1.msra.mxu0 %v3447
      %3475 = vmatprep.subr.mxu0 0.0
      %3476 = vmatpush1.msra.mxu0 0.0
      %3477 = vmatprep.subr.mxu0 0.0
      %3478 = vmatpush1.msra.mxu0 0.0
      %3479 = vmatprep.subr.mxu0 0.0
      %3480 = vmatpush1.msra.mxu0 0.0
      %3481 = vmatprep.subr.mxu0 0.0
      %3482 = vmatpush1.msra.mxu0 0.0
      %3483 = vmatprep.subr.mxu0 0.0
      %3484 = vmatpush1.msra.mxu0 0.0
      %3485 = vmatprep.subr.mxu0 0.0
      %3486 = vmatpush1.msra.mxu0 0.0
      %3487 = vmatprep.subr.mxu0 0.0
      %3488 = vmatpush1.msra.mxu0 0.0
      %3489 = vmatprep.subr.mxu0 0.0
      %3490 = vmatpush1.msra.mxu0 0.0
      %3491 = vmatprep.subr.mxu0 0.0
      %3492 = vmatpush1.msra.mxu0 0.0
      %3493 = vmatprep.subr.mxu0 0.0
      %3494 = vmatpush1.msra.mxu0 0.0
      %3495 = vmatprep.subr.mxu0 0.0
      %3496 = vmatpush1.msra.mxu0 0.0
      %3497 = vmatprep.subr.mxu0 0.0
      %3498 = vmatpush1.msra.mxu0 0.0
      %3499 = vmatprep.subr.mxu0 0.0
      %3500 = vmatpush1.msra.mxu0 0.0
      %3501 = vmatprep.subr.mxu0 0.0
      %3502 = vmatpush1.msra.mxu0 0.0
      %3503 = vmatprep.subr.mxu0 0.0
      %3504 = vmatpush1.msra.mxu0 0.0
      %3505 = vmatprep.subr.mxu0 0.0
      %3506 = vmatpush1.msra.mxu0 0.0
      %3507 = vmatprep.subr.mxu0 0.0
      %3508 = vmatpush1.msra.mxu0 0.0
      %3509 = vmatprep.subr.mxu0 0.0
      %3510 = vmatpush1.msra.mxu0 0.0
      %3511 = vmatprep.subr.mxu0 0.0
      %3512 = vmatpush1.msra.mxu0 0.0
      %3513 = vmatprep.subr.mxu0 0.0
      %3514 = vmatpush1.msra.mxu0 0.0
      %3515 = vmatprep.mubr.f32.mxu0 0.0
      %3516 = vmatmul.mubr.f32.gmra.mrb[0].mxu0 %v3449
      %v3517 = vpop.f32.mrb[0].mxu0
      %v3518 = vadd.f32 0.0, %v3517
      %v3519 = vpop.f32.mrb[0].mxu0
      %3520 = vdwg.mxu0
      %v3521 = vxor.u32 %v3518, 2147483648
      %v3522 = vmul.f32 %v3521, 1.442695
      %v3523 = vpow.pop %v3522
      %v3524 = vadd.f32 %v3523, 1.0
      %v3525 = vrcp.pop %v3524
      %v3526 = vmul.f32 1.0, %v3525
      %v3527 = vmul.f32 %v3416, %v3526
      %v3528 = vadd.f32 %v3527, %v3424
      %v3529 = vsel %vm480, %v3528, 0.0
      %3530 = vadd.xlane.f32.xlu0 %v3529
      %v3531 = vpop.xlane.xlu0 %3530
      %v3532 = vsel %vm480, %v3421, 0.0
      %3533 = vadd.xlane.f32.xlu0 %v3532
      %v3534 = vpop.xlane.xlu0 %3533
      %v3535 = vrcp.pop 32.0
      %v3536 = vmul.f32 %v3531, %v3535
      %v3537 = vmul.f32 %v3534, %v3535
      %v3538 = vsub.f32 %v3528, %v3536
      %v3539 = vsub.f32 %v3421, %v3537
      %v3540 = vmul.f32 %v3538, %v3538
      %v3541 = vmul.f32 %v3539, %v3539
      %v3542 = vsel %vm480, %v3540, 0.0
      %3543 = vadd.xlane.f32.xlu0 %v3542
      %v3544 = vpop.xlane.xlu0 %3543
      %v3545 = vsel %vm480, %v3541, 0.0
      %3546 = vadd.xlane.f32.xlu0 %v3545
      %v3547 = vpop.xlane.xlu0 %3546
      %v3548 = vmul.f32 %v3544, %v3535
      %v3549 = vmul.f32 %v3547, %v3535
      %v3550 = vadd.f32 %v3548, 1e-05
      %v3551 = vadd.f32 %v3549, 1e-05
      %v3552 = vrsqrt.pop %v3550
      %v3553 = vrsqrt.pop %v3551
      %v3554 = vmul.f32 %v3538, %v3552
      %v3555 = vmul.f32 %v3539, %v3553
      %v3556 = vld [vmem:[%s10] sm:$0x1]
      %v3558 = vlaneseq
      %v3559 = vshrl.u32 %v3558, 7
      %v3560 = vsub.s32 0, %v3559
      %v3561 = vrot.slane %v3556, %v3560
      %v3563 = vmul.f32 %v3554, %v3561
      %v3564 = vmul.f32 %v3555, %v3561
      %v3565 = vld [vmem:[%s11] sm:$0x1]
      %v3567 = vlaneseq
      %v3568 = vshrl.u32 %v3567, 7
      %v3569 = vsub.s32 0, %v3568
      %v3570 = vrot.slane %v3565, %v3569
      %v3572 = vadd.f32 %v3563, %v3570
      %v3573 = vadd.f32 %v3564, %v3570
      %v3574 = vsel %vm480, %v3572, 0.0
      %v3575 = vsel %vm480, %v3573, 0.0
      %3576 = vst [vmem:[#allocation7] sm:$0xff] %v3574
      %3577 = vst [vmem:[#allocation7 + $0x8] sm:$0xff] %v3575
    $region57: #{single_pna_neair_block.1} parent=1 // pred_fallthru
      _
    // Predicated region
    $region58: #{single_pna_neair_block.1} parent=1 // pred_check
      _
    $region59: #{single_pna_neair_block.1} parent=1 // pred_check_branch
      %3579 = sbr.rel (0) target = $region61
    $region60: #{single_pna_neair_block.1} parent=1 // pred_region
      %s3581 = ssub.s32 256, 256
      %3582 = vsyncadd [#allocation8], %s3581
      %s3583 = sshll.u32 [#allocation7], 4
      %s3584 = int_to_ptr.vmem [resolvable:$true] %s3583
      %3589 = dma.vmem_to_hbm [thread:$0]  %s3584, 256, %s12, [#allocation8], 128, 128, 8
    $region61: #{single_pna_neair_block.1} parent=1 // pred_fallthru
      _
    // Predicated region
    $region62: #{single_pna_neair_block.1} parent=1 // pred_check
      _
    $region63: #{single_pna_neair_block.1} parent=1 // pred_check_branch
      %3591 = sbr.rel (0) target = $region65
    $region64: #{single_pna_neair_block.1} parent=1 // pred_region
      %3592 = dma.done [#allocation8], 256
    $region65: #{single_pna_neair_block.1} parent=1 // pred_fallthru
      _
    %3593 = vsyncpa [#allocation8], 1

</llo_original>
